<compile_context>
chip_gen: v7x
topology: tpu7x:2x2x1
jax: 0.10.0
libtpu: 0.0.40
codegen_flags: <defaults>
</compile_context>

<pallas_src>
import math
from functools import partial

import jax
import jax.numpy as jnp
from jax import lax
from jax.experimental import pallas as pl
from jax.experimental.pallas import tpu as pltpu


# ----------------------------------------------------------------------------
# Tile sizing
# ----------------------------------------------------------------------------

def _default_target_pixels():
    """Pixels per grid step.  Larger tiles amortize the ~0.35us per-step pipeline
    overhead; v7x (highest HBM BW, 64 MiB VMEM) gets the largest tier."""
    try:
        vmem = getattr(pltpu.get_tpu_info(), "vmem_capacity_bytes", 128 * 1024 * 1024)
    except Exception:
        vmem = 128 * 1024 * 1024
    return 65536 if vmem <= 64 * 1024 * 1024 else 32768


def _pick_tile_rows(H, W, target_pixels, max_unroll=64):
    """Input rows processed per grid step (row loop is unrolled in-kernel, so cap it)."""
    # TODO(synk): switch the in-kernel row loop to lax.fori_loop for very tall, narrow
    # images so the unroll cap stops limiting tile size.
    r = min(H, max_unroll, max(1, target_pixels // max(W, 1)))
    if r < H:
        r = min(max(8, (r // 8) * 8), H)   # keep the block's sublane dim 8-aligned
    return r


# ----------------------------------------------------------------------------
# Fused path: conv1x1 + bias + ReLU + pixel-shuffle in one HBM pass (s == 2, bf16)
# ----------------------------------------------------------------------------

_LOW_FIRST_CACHE = None


def _bitcast_low_half_is_first():
    """Does lax.bitcast_convert_type(uint32 -> bfloat16) put the low 16 bits at index 0?"""
    global _LOW_FIRST_CACHE
    if _LOW_FIRST_CACHE is None:
        probe = lax.bitcast_convert_type(jnp.array([0x3F800000], jnp.uint32), jnp.bfloat16)
        probe = jax.device_get(probe)           # [[0.0, 1.0]] if low-half-first
        _LOW_FIRST_CACHE = bool(float(probe[0, 0]) == 0.0)
    return _LOW_FIRST_CACHE


def _permute_params_for_shuffle(weight, bias, C, s):
    """Reorder conv-out channels from PyTorch order o = c*s^2 + r1*s + r2 to
    (r1, r2, c)-major so each sub-pixel position is a contiguous C-row slice."""
    C_in = weight.shape[1]
    w = weight.reshape(C, s, s, C_in).transpose(1, 2, 0, 3).reshape(C * s * s, C_in)
    b = bias.reshape(C, s, s).transpose(1, 2, 0).reshape(C * s * s)
    return w, b


def _fused_conv_shuffle_kernel(x_ref, w_ref, b_ref, o_ref, *, C, s, R, low_first):
    # x_ref: (C_in, R, W)  storage dtype (bf16)
    # w_ref: (C*s*s, C_in) rows ordered (r1, r2, c);  b_ref: (C*s*s, 1) f32, same order
    # o_ref: (C, R*s, W)   uint32 — each word packs the s=2 bf16 output columns
    w = w_ref[...]
    b = b_ref[...]
    for h in range(R):                                              # static unroll
        xh = x_ref[:, h, :]                                         # (C_in, W)
        acc = jnp.dot(w, xh, preferred_element_type=jnp.float32)    # (C*s*s, W) f32
        acc = jnp.maximum(acc + b, 0.0)
        # Round to bf16 (output precision), then grab the bf16 bit pattern with a
        # 32-bit bitcast (no 16-bit integer types needed anywhere).
        bits = pltpu.bitcast(acc.astype(jnp.bfloat16).astype(jnp.float32),
                             jnp.uint32) >> 16                       # (C*s*s, W) u32
        for r1 in range(s):
            even = bits[(r1 * s + 0) * C:(r1 * s + 1) * C, :]        # r2=0 -> col w*s
            odd = bits[(r1 * s + 1) * C:(r1 * s + 2) * C, :]         # r2=1 -> col w*s+1
            lo, hi = (even, odd) if low_first else (odd, even)
            o_ref[:, h * s + r1, :] = lo | (hi << 16)


def _conv_relu_shuffle_fused_s2(x, w_perm, b_perm, *, scale, tile_rows=None,
                                target_pixels=None):
    """Fused forward for scale == 2, bf16 storage.  Returns (N, C, H*2, W*2) bf16."""
    N, C, H, W = x.shape
    s = scale
    C_out = C * s * s
    if target_pixels is None:
        target_pixels = _default_target_pixels()
    R = min(tile_rows, H) if tile_rows is not None else _pick_tile_rows(H, W, target_pixels)
    n_tiles = pl.cdiv(H, R)                      # ragged last tile handled by Pallas
    low_first = _bitcast_low_half_is_first()

    kernel = partial(_fused_conv_shuffle_kernel, C=C, s=s, R=R, low_first=low_first)
    packed = pl.pallas_call(
        kernel,
        out_shape=jax.ShapeDtypeStruct((N, C, H * s, W), jnp.uint32),
        grid_spec=pltpu.PrefetchScalarGridSpec(
            num_scalar_prefetch=0,
            grid=(n_tiles, N),                   # large tile axis first (v7x megacore)
            in_specs=[
                pl.BlockSpec((None, C, R, W), lambda t, n: (n, 0, t, 0)),
                pl.BlockSpec((C_out, C), lambda t, n: (0, 0)),       # resident weight
                pl.BlockSpec((C_out, 1), lambda t, n: (0, 0)),       # resident bias
            ],
            out_specs=pl.BlockSpec((None, C, R * s, W), lambda t, n: (n, 0, t, 0)),
        ),
        compiler_params=pltpu.CompilerParams(
            dimension_semantics=("parallel", "parallel")),
    )(x, w_perm, b_perm)

    # uint32 -> two bf16 along a new minor dim, then a free row-major reshape.
    out = lax.bitcast_convert_type(packed, jnp.bfloat16)            # (N, C, H*s, W, 2)
    return out.reshape(N, C, H * s, W * s)


# ----------------------------------------------------------------------------
# Generic fallback: unfused conv1x1 + ReLU kernel, shuffle done by XLA
# ----------------------------------------------------------------------------

def _conv1x1_relu_kernel(x_ref, w_ref, b_ref, o_ref):
    # x_ref: (C_in, tm)  w_ref: (C_out, C_in)  b_ref: (C_out, 1)  o_ref: (C_out, tm)
    acc = jnp.dot(w_ref[...], x_ref[...], preferred_element_type=jnp.float32)
    o_ref[...] = jnp.maximum(acc + b_ref[...], 0.0).astype(o_ref.dtype)


def _conv1x1_relu(x3, w, b2, *, tm_target):
    N, C_in, M = x3.shape
    C_out = w.shape[0]
    tm = M if M <= tm_target else tm_target
    return pl.pallas_call(
        _conv1x1_relu_kernel,
        out_shape=jax.ShapeDtypeStruct((N, C_out, M), x3.dtype),
        grid_spec=pltpu.PrefetchScalarGridSpec(
            num_scalar_prefetch=0,
            grid=(pl.cdiv(M, tm), N),            # tile axis first (v7x megacore)
            in_specs=[
                pl.BlockSpec((None, C_in, tm), lambda t, n: (n, 0, t)),
                pl.BlockSpec((C_out, C_in), lambda t, n: (0, 0)),
                pl.BlockSpec((C_out, 1), lambda t, n: (0, 0)),
            ],
            out_specs=pl.BlockSpec((None, C_out, tm), lambda t, n: (n, 0, t)),
        ),
        compiler_params=pltpu.CompilerParams(
            dimension_semantics=("parallel", "parallel")),
    )(x3, w, b2)


# ----------------------------------------------------------------------------
# Module forward + init
# ----------------------------------------------------------------------------

def icnr_weight(key, n_channels, scale):
    """ICNR init: kaiming-normal (C, C) base kernel replicated scale^2 times along the
    output-channel axis:  W[c*s^2 + r, a] = base[c, a].  Shape (C*s^2, C)."""
    std = math.sqrt(2.0 / n_channels)            # 1x1 kernel -> fan_in = C
    base = jax.random.normal(key, (n_channels, n_channels), jnp.float32) * std
    return jnp.repeat(base, scale ** 2, axis=0)


def pixel_shuffle_module(x, weight, bias, scale, *, storage_dtype=jnp.bfloat16,
                         tile_rows=None, target_pixels=None):
    """Forward of the PyTorch module: pixel_shuffle(relu(conv1x1(x))).

    x: (N, C, H, W) NCHW.  weight: (C*scale^2, C).  bias: (C*scale^2,).
    Returns (N, C, H*scale, W*scale) in storage_dtype (f32 accumulation in-kernel).
    """
    N, C, H, W = x.shape
    s = scale
    C_out = C * s * s
    storage_dtype = storage_dtype or x.dtype
    b_f32 = bias.astype(jnp.float32)

    if s == 2 and storage_dtype == jnp.bfloat16:
        # Fast path: fully fused, single HBM pass.
        w_perm, b_perm = _permute_params_for_shuffle(weight, b_f32, C, s)
        return _conv_relu_shuffle_fused_s2(
            x.astype(storage_dtype), w_perm.astype(storage_dtype),
            b_perm.reshape(C_out, 1), scale=s, tile_rows=tile_rows,
            target_pixels=target_pixels)

    # Generic path: Pallas conv1x1+ReLU, pixel shuffle as an XLA reshape/transpose.
    # TODO(synk): extend the fused packing path to f32 storage / scale != 2.
    x3 = x.reshape(N, C, H * W).astype(storage_dtype)
    tp = target_pixels if target_pixels is not None else _default_target_pixels()
    y3 = _conv1x1_relu(x3, weight.astype(storage_dtype), b_f32.reshape(C_out, 1),
                       tm_target=tp)
    y = y3.reshape(N, C, s, s, H, W)
    return jnp.transpose(y, (0, 1, 4, 2, 5, 3)).reshape(N, C, H * s, W * s)


def _reference(x, weight, bias, scale):
    """Pure-JAX f32 reference of the PyTorch forward."""
    N, C, H, W = x.shape
    s = scale
    out = jnp.einsum("nihw,oi->nohw", x.astype(jnp.float32), weight.astype(jnp.float32))
    out = jnp.maximum(out + bias.astype(jnp.float32)[None, :, None, None], 0.0)
    out = out.reshape(N, C, s, s, H, W)
    return jnp.transpose(out, (0, 1, 4, 2, 5, 3)).reshape(N, C, H * s, W * s)


if __name__ == "__main__":
    n_channels, scale = 4, 2
    N, H, W = 2, 16, 16

    key = jax.random.PRNGKey(0)
    kx, kw, kb = jax.random.split(key, 3)

    x = jax.random.normal(kx, (N, n_channels, H, W), jnp.float32)
    weight = icnr_weight(kw, n_channels, scale)                       # (C*s^2, C)
    bound = 1.0 / math.sqrt(n_channels)                               # PyTorch bias init
    bias = jax.random.uniform(kb, (n_channels * scale ** 2,), jnp.float32,
                              minval=-bound, maxval=bound)

    # 1) Main case: fused bf16 path.
    y = jax.block_until_ready(pixel_shuffle_module(x, weight, bias, scale))
    assert y.shape == (N, n_channels, H * scale, W * scale)
    y_ref = _reference(x.astype(jnp.bfloat16), weight.astype(jnp.bfloat16), bias, scale)
    assert jnp.allclose(y.astype(jnp.float32), y_ref, atol=2e-2, rtol=2e-2)

    # 2) Ragged row-tile case (H not a multiple of the tile) to lock in partial blocks.
    H2 = 24
    x2 = jax.random.normal(kx, (1, n_channels, H2, W), jnp.float32)
    y2 = jax.block_until_ready(pixel_shuffle_module(x2, weight, bias, scale, tile_rows=16))
    y2_ref = _reference(x2.astype(jnp.bfloat16), weight.astype(jnp.bfloat16), bias, scale)
    assert y2.shape == (1, n_channels, H2 * scale, W * scale)
    assert jnp.allclose(y2.astype(jnp.float32), y2_ref, atol=2e-2, rtol=2e-2)

    # 3) Generic (unfused) f32 path, tight tolerance.
    y3 = jax.block_until_ready(
        pixel_shuffle_module(x, weight, bias, scale, storage_dtype=jnp.float32))
    assert jnp.allclose(y3, _reference(x, weight, bias, scale), atol=1e-5, rtol=1e-5)

    print("KERNEL_OK")
</pallas_src>

<mosaic_0001>
module attributes {stable_mosaic.version = 11 : i64} {
  func.func @_fused_conv_shuffle_kernel(%arg0: i32, %arg1: i32, %arg2: memref<1x4x16x16xbf16, #tpu.memory_space<vmem>>, %arg3: memref<16x4xbf16, #tpu.memory_space<vmem>>, %arg4: memref<16x1xf32, #tpu.memory_space<vmem>>, %arg5: memref<1x4x32x16xi32, #tpu.memory_space<vmem>>) attributes {dimension_semantics = [#tpu.dimension_semantics<parallel>, #tpu.dimension_semantics<parallel>], iteration_bounds = array<i64: 1, 2>, scalar_prefetch = 0 : i64, scratch_operands = 0 : i64, tpu.core_type = #tpu.core_type<tc>, window_params = [{transform_indices = @transform_0, window_bounds = array<i64: 1, 4, 16, 16>}, {pipeline_mode = #tpu.pipeline_mode<synchronous>, transform_indices = @transform_1, window_bounds = array<i64: 16, 4>}, {pipeline_mode = #tpu.pipeline_mode<synchronous>, transform_indices = @transform_2, window_bounds = array<i64: 16, 1>}, {transform_indices = @transform_3, window_bounds = array<i64: 1, 4, 32, 16>}]} {
    %c0 = arith.constant 0 : index
    %c0_0 = arith.constant 0 : index
    %0 = vector.load %arg3[%c0, %c0_0] : memref<16x4xbf16, #tpu.memory_space<vmem>>, vector<16x4xbf16>
    %c0_1 = arith.constant 0 : index
    %c0_2 = arith.constant 0 : index
    %1 = vector.load %arg4[%c0_1, %c0_2] : memref<16x1xf32, #tpu.memory_space<vmem>>, vector<16x1xf32>
    %c0_3 = arith.constant 0 : index
    %c0_4 = arith.constant 0 : index
    %c0_5 = arith.constant 0 : index
    %c0_6 = arith.constant 0 : index
    %2 = vector.load %arg2[%c0_3, %c0_4, %c0_5, %c0_6] : memref<1x4x16x16xbf16, #tpu.memory_space<vmem>>, vector<1x4x1x16xbf16>
    %3 = vector.shape_cast %2 : vector<1x4x1x16xbf16> to vector<4x16xbf16>
    %cst = arith.constant dense<0.000000e+00> : vector<16x16xf32>
    %4 = tpu.matmul %0, %3, %cst {dimension_numbers = #tpu.dot_dimension_numbers<[1], [0], [0], [1], [0, 0, 1, 1], [], []>} : vector<16x4xbf16>, vector<4x16xbf16>, vector<16x16xf32> -> vector<16x16xf32>
    %5 = vector.broadcast %1 : vector<16x1xf32> to vector<16x16xf32>
    %6 = arith.addf %4, %5 : vector<16x16xf32>
    %cst_7 = arith.constant 0.000000e+00 : f32
    %7 = vector.broadcast %cst_7 : f32 to vector<16x16xf32>
    %8 = arith.maximumf %6, %7 : vector<16x16xf32>
    %9 = arith.truncf %8 : vector<16x16xf32> to vector<16x16xbf16>
    %10 = arith.extf %9 : vector<16x16xbf16> to vector<16x16xf32>
    %11 = tpu.bitcast %10 : vector<16x16xf32> -> vector<16x16xi32>
    %c16_i32 = arith.constant 16 : i32
    %12 = vector.broadcast %c16_i32 : i32 to vector<16x16xi32>
    %13 = arith.shrui %11, %12 : vector<16x16xi32>
    %14 = vector.extract_strided_slice %13 {offsets = [0, 0], sizes = [4, 16], strides = [1, 1]} : vector<16x16xi32> to vector<4x16xi32>
    %15 = vector.extract_strided_slice %13 {offsets = [4, 0], sizes = [4, 16], strides = [1, 1]} : vector<16x16xi32> to vector<4x16xi32>
    %c16_i32_8 = arith.constant 16 : i32
    %16 = vector.broadcast %c16_i32_8 : i32 to vector<4x16xi32>
    %17 = arith.shli %15, %16 : vector<4x16xi32>
    %18 = arith.ori %14, %17 : vector<4x16xi32>
    %c0_9 = arith.constant 0 : index
    %c0_10 = arith.constant 0 : index
    %c0_11 = arith.constant 0 : index
    %c0_12 = arith.constant 0 : index
    %19 = vector.load %arg5[%c0_9, %c0_10, %c0_11, %c0_12] : memref<1x4x32x16xi32, #tpu.memory_space<vmem>>, vector<1x4x1x16xi32>
    %20 = vector.shape_cast %19 : vector<1x4x1x16xi32> to vector<4x16xi32>
    %21 = vector.shape_cast %18 : vector<4x16xi32> to vector<1x4x1x16xi32>
    tpu.vector_store %arg5[%c0_9, %c0_10, %c0_11, %c0_12], %21 {strides = array<i32>} : memref<1x4x32x16xi32, #tpu.memory_space<vmem>>, vector<1x4x1x16xi32>,
    %22 = vector.extract_strided_slice %13 {offsets = [8, 0], sizes = [4, 16], strides = [1, 1]} : vector<16x16xi32> to vector<4x16xi32>
    %23 = vector.extract_strided_slice %13 {offsets = [12, 0], sizes = [4, 16], strides = [1, 1]} : vector<16x16xi32> to vector<4x16xi32>
    %c16_i32_13 = arith.constant 16 : i32
    %24 = vector.broadcast %c16_i32_13 : i32 to vector<4x16xi32>
    %25 = arith.shli %23, %24 : vector<4x16xi32>
    %26 = arith.ori %22, %25 : vector<4x16xi32>
    %c0_14 = arith.constant 0 : index
    %c0_15 = arith.constant 0 : index
    %c1 = arith.constant 1 : index
    %c0_16 = arith.constant 0 : index
    %27 = vector.load %arg5[%c0_14, %c0_15, %c1, %c0_16] : memref<1x4x32x16xi32, #tpu.memory_space<vmem>>, vector<1x4x1x16xi32>
    %28 = vector.shape_cast %27 : vector<1x4x1x16xi32> to vector<4x16xi32>
    %29 = vector.shape_cast %26 : vector<4x16xi32> to vector<1x4x1x16xi32>
    tpu.vector_store %arg5[%c0_14, %c0_15, %c1, %c0_16], %29 {strides = array<i32>} : memref<1x4x32x16xi32, #tpu.memory_space<vmem>>, vector<1x4x1x16xi32>,
    %c0_17 = arith.constant 0 : index
    %c0_18 = arith.constant 0 : index
    %c1_19 = arith.constant 1 : index
    %c0_20 = arith.constant 0 : index
    %30 = vector.load %arg2[%c0_17, %c0_18, %c1_19, %c0_20] : memref<1x4x16x16xbf16, #tpu.memory_space<vmem>>, vector<1x4x1x16xbf16>
    %31 = vector.shape_cast %30 : vector<1x4x1x16xbf16> to vector<4x16xbf16>
    %cst_21 = arith.constant dense<0.000000e+00> : vector<16x16xf32>
    %32 = tpu.matmul %0, %31, %cst_21 {dimension_numbers = #tpu.dot_dimension_numbers<[1], [0], [0], [1], [0, 0, 1, 1], [], []>} : vector<16x4xbf16>, vector<4x16xbf16>, vector<16x16xf32> -> vector<16x16xf32>
    %33 = vector.broadcast %1 : vector<16x1xf32> to vector<16x16xf32>
    %34 = arith.addf %32, %33 : vector<16x16xf32>
    %cst_22 = arith.constant 0.000000e+00 : f32
    %35 = vector.broadcast %cst_22 : f32 to vector<16x16xf32>
    %36 = arith.maximumf %34, %35 : vector<16x16xf32>
    %37 = arith.truncf %36 : vector<16x16xf32> to vector<16x16xbf16>
    %38 = arith.extf %37 : vector<16x16xbf16> to vector<16x16xf32>
    %39 = tpu.bitcast %38 : vector<16x16xf32> -> vector<16x16xi32>
    %c16_i32_23 = arith.constant 16 : i32
    %40 = vector.broadcast %c16_i32_23 : i32 to vector<16x16xi32>
    %41 = arith.shrui %39, %40 : vector<16x16xi32>
    %42 = vector.extract_strided_slice %41 {offsets = [0, 0], sizes = [4, 16], strides = [1, 1]} : vector<16x16xi32> to vector<4x16xi32>
    %43 = vector.extract_strided_slice %41 {offsets = [4, 0], sizes = [4, 16], strides = [1, 1]} : vector<16x16xi32> to vector<4x16xi32>
    %c16_i32_24 = arith.constant 16 : i32
    %44 = vector.broadcast %c16_i32_24 : i32 to vector<4x16xi32>
    %45 = arith.shli %43, %44 : vector<4x16xi32>
    %46 = arith.ori %42, %45 : vector<4x16xi32>
    %c0_25 = arith.constant 0 : index
    %c0_26 = arith.constant 0 : index
    %c2 = arith.constant 2 : index
    %c0_27 = arith.constant 0 : index
    %47 = vector.load %arg5[%c0_25, %c0_26, %c2, %c0_27] : memref<1x4x32x16xi32, #tpu.memory_space<vmem>>, vector<1x4x1x16xi32>
    %48 = vector.shape_cast %47 : vector<1x4x1x16xi32> to vector<4x16xi32>
    %49 = vector.shape_cast %46 : vector<4x16xi32> to vector<1x4x1x16xi32>
    tpu.vector_store %arg5[%c0_25, %c0_26, %c2, %c0_27], %49 {strides = array<i32>} : memref<1x4x32x16xi32, #tpu.memory_space<vmem>>, vector<1x4x1x16xi32>,
    %50 = vector.extract_strided_slice %41 {offsets = [8, 0], sizes = [4, 16], strides = [1, 1]} : vector<16x16xi32> to vector<4x16xi32>
    %51 = vector.extract_strided_slice %41 {offsets = [12, 0], sizes = [4, 16], strides = [1, 1]} : vector<16x16xi32> to vector<4x16xi32>
    %c16_i32_28 = arith.constant 16 : i32
    %52 = vector.broadcast %c16_i32_28 : i32 to vector<4x16xi32>
    %53 = arith.shli %51, %52 : vector<4x16xi32>
    %54 = arith.ori %50, %53 : vector<4x16xi32>
    %c0_29 = arith.constant 0 : index
    %c0_30 = arith.constant 0 : index
    %c3 = arith.constant 3 : index
    %c0_31 = arith.constant 0 : index
    %55 = vector.load %arg5[%c0_29, %c0_30, %c3, %c0_31] : memref<1x4x32x16xi32, #tpu.memory_space<vmem>>, vector<1x4x1x16xi32>
    %56 = vector.shape_cast %55 : vector<1x4x1x16xi32> to vector<4x16xi32>
    %57 = vector.shape_cast %54 : vector<4x16xi32> to vector<1x4x1x16xi32>
    tpu.vector_store %arg5[%c0_29, %c0_30, %c3, %c0_31], %57 {strides = array<i32>} : memref<1x4x32x16xi32, #tpu.memory_space<vmem>>, vector<1x4x1x16xi32>,
    %c0_32 = arith.constant 0 : index
    %c0_33 = arith.constant 0 : index
    %c2_34 = arith.constant 2 : index
    %c0_35 = arith.constant 0 : index
    %58 = vector.load %arg2[%c0_32, %c0_33, %c2_34, %c0_35] : memref<1x4x16x16xbf16, #tpu.memory_space<vmem>>, vector<1x4x1x16xbf16>
    %59 = vector.shape_cast %58 : vector<1x4x1x16xbf16> to vector<4x16xbf16>
    %cst_36 = arith.constant dense<0.000000e+00> : vector<16x16xf32>
    %60 = tpu.matmul %0, %59, %cst_36 {dimension_numbers = #tpu.dot_dimension_numbers<[1], [0], [0], [1], [0, 0, 1, 1], [], []>} : vector<16x4xbf16>, vector<4x16xbf16>, vector<16x16xf32> -> vector<16x16xf32>
    %61 = vector.broadcast %1 : vector<16x1xf32> to vector<16x16xf32>
    %62 = arith.addf %60, %61 : vector<16x16xf32>
    %cst_37 = arith.constant 0.000000e+00 : f32
    %63 = vector.broadcast %cst_37 : f32 to vector<16x16xf32>
    %64 = arith.maximumf %62, %63 : vector<16x16xf32>
    %65 = arith.truncf %64 : vector<16x16xf32> to vector<16x16xbf16>
    %66 = arith.extf %65 : vector<16x16xbf16> to vector<16x16xf32>
    %67 = tpu.bitcast %66 : vector<16x16xf32> -> vector<16x16xi32>
    %c16_i32_38 = arith.constant 16 : i32
    %68 = vector.broadcast %c16_i32_38 : i32 to vector<16x16xi32>
    %69 = arith.shrui %67, %68 : vector<16x16xi32>
    %70 = vector.extract_strided_slice %69 {offsets = [0, 0], sizes = [4, 16], strides = [1, 1]} : vector<16x16xi32> to vector<4x16xi32>
    %71 = vector.extract_strided_slice %69 {offsets = [4, 0], sizes = [4, 16], strides = [1, 1]} : vector<16x16xi32> to vector<4x16xi32>
    %c16_i32_39 = arith.constant 16 : i32
    %72 = vector.broadcast %c16_i32_39 : i32 to vector<4x16xi32>
    %73 = arith.shli %71, %72 : vector<4x16xi32>
    %74 = arith.ori %70, %73 : vector<4x16xi32>
    %c0_40 = arith.constant 0 : index
    %c0_41 = arith.constant 0 : index
    %c4 = arith.constant 4 : index
    %c0_42 = arith.constant 0 : index
    %75 = vector.load %arg5[%c0_40, %c0_41, %c4, %c0_42] : memref<1x4x32x16xi32, #tpu.memory_space<vmem>>, vector<1x4x1x16xi32>
    %76 = vector.shape_cast %75 : vector<1x4x1x16xi32> to vector<4x16xi32>
    %77 = vector.shape_cast %74 : vector<4x16xi32> to vector<1x4x1x16xi32>
    tpu.vector_store %arg5[%c0_40, %c0_41, %c4, %c0_42], %77 {strides = array<i32>} : memref<1x4x32x16xi32, #tpu.memory_space<vmem>>, vector<1x4x1x16xi32>,
    %78 = vector.extract_strided_slice %69 {offsets = [8, 0], sizes = [4, 16], strides = [1, 1]} : vector<16x16xi32> to vector<4x16xi32>
    %79 = vector.extract_strided_slice %69 {offsets = [12, 0], sizes = [4, 16], strides = [1, 1]} : vector<16x16xi32> to vector<4x16xi32>
    %c16_i32_43 = arith.constant 16 : i32
    %80 = vector.broadcast %c16_i32_43 : i32 to vector<4x16xi32>
    %81 = arith.shli %79, %80 : vector<4x16xi32>
    %82 = arith.ori %78, %81 : vector<4x16xi32>
    %c0_44 = arith.constant 0 : index
    %c0_45 = arith.constant 0 : index
    %c5 = arith.constant 5 : index
    %c0_46 = arith.constant 0 : index
    %83 = vector.load %arg5[%c0_44, %c0_45, %c5, %c0_46] : memref<1x4x32x16xi32, #tpu.memory_space<vmem>>, vector<1x4x1x16xi32>
    %84 = vector.shape_cast %83 : vector<1x4x1x16xi32> to vector<4x16xi32>
    %85 = vector.shape_cast %82 : vector<4x16xi32> to vector<1x4x1x16xi32>
    tpu.vector_store %arg5[%c0_44, %c0_45, %c5, %c0_46], %85 {strides = array<i32>} : memref<1x4x32x16xi32, #tpu.memory_space<vmem>>, vector<1x4x1x16xi32>,
    %c0_47 = arith.constant 0 : index
    %c0_48 = arith.constant 0 : index
    %c3_49 = arith.constant 3 : index
    %c0_50 = arith.constant 0 : index
    %86 = vector.load %arg2[%c0_47, %c0_48, %c3_49, %c0_50] : memref<1x4x16x16xbf16, #tpu.memory_space<vmem>>, vector<1x4x1x16xbf16>
    %87 = vector.shape_cast %86 : vector<1x4x1x16xbf16> to vector<4x16xbf16>
    %cst_51 = arith.constant dense<0.000000e+00> : vector<16x16xf32>
    %88 = tpu.matmul %0, %87, %cst_51 {dimension_numbers = #tpu.dot_dimension_numbers<[1], [0], [0], [1], [0, 0, 1, 1], [], []>} : vector<16x4xbf16>, vector<4x16xbf16>, vector<16x16xf32> -> vector<16x16xf32>
    %89 = vector.broadcast %1 : vector<16x1xf32> to vector<16x16xf32>
    %90 = arith.addf %88, %89 : vector<16x16xf32>
    %cst_52 = arith.constant 0.000000e+00 : f32
    %91 = vector.broadcast %cst_52 : f32 to vector<16x16xf32>
    %92 = arith.maximumf %90, %91 : vector<16x16xf32>
    %93 = arith.truncf %92 : vector<16x16xf32> to vector<16x16xbf16>
    %94 = arith.extf %93 : vector<16x16xbf16> to vector<16x16xf32>
    %95 = tpu.bitcast %94 : vector<16x16xf32> -> vector<16x16xi32>
    %c16_i32_53 = arith.constant 16 : i32
    %96 = vector.broadcast %c16_i32_53 : i32 to vector<16x16xi32>
    %97 = arith.shrui %95, %96 : vector<16x16xi32>
    %98 = vector.extract_strided_slice %97 {offsets = [0, 0], sizes = [4, 16], strides = [1, 1]} : vector<16x16xi32> to vector<4x16xi32>
    %99 = vector.extract_strided_slice %97 {offsets = [4, 0], sizes = [4, 16], strides = [1, 1]} : vector<16x16xi32> to vector<4x16xi32>
    %c16_i32_54 = arith.constant 16 : i32
    %100 = vector.broadcast %c16_i32_54 : i32 to vector<4x16xi32>
    %101 = arith.shli %99, %100 : vector<4x16xi32>
    %102 = arith.ori %98, %101 : vector<4x16xi32>
    %c0_55 = arith.constant 0 : index
    %c0_56 = arith.constant 0 : index
    %c6 = arith.constant 6 : index
    %c0_57 = arith.constant 0 : index
    %103 = vector.load %arg5[%c0_55, %c0_56, %c6, %c0_57] : memref<1x4x32x16xi32, #tpu.memory_space<vmem>>, vector<1x4x1x16xi32>
    %104 = vector.shape_cast %103 : vector<1x4x1x16xi32> to vector<4x16xi32>
    %105 = vector.shape_cast %102 : vector<4x16xi32> to vector<1x4x1x16xi32>
    tpu.vector_store %arg5[%c0_55, %c0_56, %c6, %c0_57], %105 {strides = array<i32>} : memref<1x4x32x16xi32, #tpu.memory_space<vmem>>, vector<1x4x1x16xi32>,
    %106 = vector.extract_strided_slice %97 {offsets = [8, 0], sizes = [4, 16], strides = [1, 1]} : vector<16x16xi32> to vector<4x16xi32>
    %107 = vector.extract_strided_slice %97 {offsets = [12, 0], sizes = [4, 16], strides = [1, 1]} : vector<16x16xi32> to vector<4x16xi32>
    %c16_i32_58 = arith.constant 16 : i32
    %108 = vector.broadcast %c16_i32_58 : i32 to vector<4x16xi32>
    %109 = arith.shli %107, %108 : vector<4x16xi32>
    %110 = arith.ori %106, %109 : vector<4x16xi32>
    %c0_59 = arith.constant 0 : index
    %c0_60 = arith.constant 0 : index
    %c7 = arith.constant 7 : index
    %c0_61 = arith.constant 0 : index
    %111 = vector.load %arg5[%c0_59, %c0_60, %c7, %c0_61] : memref<1x4x32x16xi32, #tpu.memory_space<vmem>>, vector<1x4x1x16xi32>
    %112 = vector.shape_cast %111 : vector<1x4x1x16xi32> to vector<4x16xi32>
    %113 = vector.shape_cast %110 : vector<4x16xi32> to vector<1x4x1x16xi32>
    tpu.vector_store %arg5[%c0_59, %c0_60, %c7, %c0_61], %113 {strides = array<i32>} : memref<1x4x32x16xi32, #tpu.memory_space<vmem>>, vector<1x4x1x16xi32>,
    %c0_62 = arith.constant 0 : index
    %c0_63 = arith.constant 0 : index
    %c4_64 = arith.constant 4 : index
    %c0_65 = arith.constant 0 : index
    %114 = vector.load %arg2[%c0_62, %c0_63, %c4_64, %c0_65] : memref<1x4x16x16xbf16, #tpu.memory_space<vmem>>, vector<1x4x1x16xbf16>
    %115 = vector.shape_cast %114 : vector<1x4x1x16xbf16> to vector<4x16xbf16>
    %cst_66 = arith.constant dense<0.000000e+00> : vector<16x16xf32>
    %116 = tpu.matmul %0, %115, %cst_66 {dimension_numbers = #tpu.dot_dimension_numbers<[1], [0], [0], [1], [0, 0, 1, 1], [], []>} : vector<16x4xbf16>, vector<4x16xbf16>, vector<16x16xf32> -> vector<16x16xf32>
    %117 = vector.broadcast %1 : vector<16x1xf32> to vector<16x16xf32>
    %118 = arith.addf %116, %117 : vector<16x16xf32>
    %cst_67 = arith.constant 0.000000e+00 : f32
    %119 = vector.broadcast %cst_67 : f32 to vector<16x16xf32>
    %120 = arith.maximumf %118, %119 : vector<16x16xf32>
    %121 = arith.truncf %120 : vector<16x16xf32> to vector<16x16xbf16>
    %122 = arith.extf %121 : vector<16x16xbf16> to vector<16x16xf32>
    %123 = tpu.bitcast %122 : vector<16x16xf32> -> vector<16x16xi32>
    %c16_i32_68 = arith.constant 16 : i32
    %124 = vector.broadcast %c16_i32_68 : i32 to vector<16x16xi32>
    %125 = arith.shrui %123, %124 : vector<16x16xi32>
    %126 = vector.extract_strided_slice %125 {offsets = [0, 0], sizes = [4, 16], strides = [1, 1]} : vector<16x16xi32> to vector<4x16xi32>
    %127 = vector.extract_strided_slice %125 {offsets = [4, 0], sizes = [4, 16], strides = [1, 1]} : vector<16x16xi32> to vector<4x16xi32>
    %c16_i32_69 = arith.constant 16 : i32
    %128 = vector.broadcast %c16_i32_69 : i32 to vector<4x16xi32>
    %129 = arith.shli %127, %128 : vector<4x16xi32>
    %130 = arith.ori %126, %129 : vector<4x16xi32>
    %c0_70 = arith.constant 0 : index
    %c0_71 = arith.constant 0 : index
    %c8 = arith.constant 8 : index
    %c0_72 = arith.constant 0 : index
    %131 = vector.load %arg5[%c0_70, %c0_71, %c8, %c0_72] : memref<1x4x32x16xi32, #tpu.memory_space<vmem>>, vector<1x4x1x16xi32>
    %132 = vector.shape_cast %131 : vector<1x4x1x16xi32> to vector<4x16xi32>
    %133 = vector.shape_cast %130 : vector<4x16xi32> to vector<1x4x1x16xi32>
    tpu.vector_store %arg5[%c0_70, %c0_71, %c8, %c0_72], %133 {strides = array<i32>} : memref<1x4x32x16xi32, #tpu.memory_space<vmem>>, vector<1x4x1x16xi32>,
    %134 = vector.extract_strided_slice %125 {offsets = [8, 0], sizes = [4, 16], strides = [1, 1]} : vector<16x16xi32> to vector<4x16xi32>
    %135 = vector.extract_strided_slice %125 {offsets = [12, 0], sizes = [4, 16], strides = [1, 1]} : vector<16x16xi32> to vector<4x16xi32>
    %c16_i32_73 = arith.constant 16 : i32
    %136 = vector.broadcast %c16_i32_73 : i32 to vector<4x16xi32>
    %137 = arith.shli %135, %136 : vector<4x16xi32>
    %138 = arith.ori %134, %137 : vector<4x16xi32>
    %c0_74 = arith.constant 0 : index
    %c0_75 = arith.constant 0 : index
    %c9 = arith.constant 9 : index
    %c0_76 = arith.constant 0 : index
    %139 = vector.load %arg5[%c0_74, %c0_75, %c9, %c0_76] : memref<1x4x32x16xi32, #tpu.memory_space<vmem>>, vector<1x4x1x16xi32>
    %140 = vector.shape_cast %139 : vector<1x4x1x16xi32> to vector<4x16xi32>
    %141 = vector.shape_cast %138 : vector<4x16xi32> to vector<1x4x1x16xi32>
    tpu.vector_store %arg5[%c0_74, %c0_75, %c9, %c0_76], %141 {strides = array<i32>} : memref<1x4x32x16xi32, #tpu.memory_space<vmem>>, vector<1x4x1x16xi32>,
    %c0_77 = arith.constant 0 : index
    %c0_78 = arith.constant 0 : index
    %c5_79 = arith.constant 5 : index
    %c0_80 = arith.constant 0 : index
    %142 = vector.load %arg2[%c0_77, %c0_78, %c5_79, %c0_80] : memref<1x4x16x16xbf16, #tpu.memory_space<vmem>>, vector<1x4x1x16xbf16>
    %143 = vector.shape_cast %142 : vector<1x4x1x16xbf16> to vector<4x16xbf16>
    %cst_81 = arith.constant dense<0.000000e+00> : vector<16x16xf32>
    %144 = tpu.matmul %0, %143, %cst_81 {dimension_numbers = #tpu.dot_dimension_numbers<[1], [0], [0], [1], [0, 0, 1, 1], [], []>} : vector<16x4xbf16>, vector<4x16xbf16>, vector<16x16xf32> -> vector<16x16xf32>
    %145 = vector.broadcast %1 : vector<16x1xf32> to vector<16x16xf32>
    %146 = arith.addf %144, %145 : vector<16x16xf32>
    %cst_82 = arith.constant 0.000000e+00 : f32
    %147 = vector.broadcast %cst_82 : f32 to vector<16x16xf32>
    %148 = arith.maximumf %146, %147 : vector<16x16xf32>
    %149 = arith.truncf %148 : vector<16x16xf32> to vector<16x16xbf16>
    %150 = arith.extf %149 : vector<16x16xbf16> to vector<16x16xf32>
    %151 = tpu.bitcast %150 : vector<16x16xf32> -> vector<16x16xi32>
    %c16_i32_83 = arith.constant 16 : i32
    %152 = vector.broadcast %c16_i32_83 : i32 to vector<16x16xi32>
    %153 = arith.shrui %151, %152 : vector<16x16xi32>
    %154 = vector.extract_strided_slice %153 {offsets = [0, 0], sizes = [4, 16], strides = [1, 1]} : vector<16x16xi32> to vector<4x16xi32>
    %155 = vector.extract_strided_slice %153 {offsets = [4, 0], sizes = [4, 16], strides = [1, 1]} : vector<16x16xi32> to vector<4x16xi32>
    %c16_i32_84 = arith.constant 16 : i32
    %156 = vector.broadcast %c16_i32_84 : i32 to vector<4x16xi32>
    %157 = arith.shli %155, %156 : vector<4x16xi32>
    %158 = arith.ori %154, %157 : vector<4x16xi32>
    %c0_85 = arith.constant 0 : index
    %c0_86 = arith.constant 0 : index
    %c10 = arith.constant 10 : index
    %c0_87 = arith.constant 0 : index
    %159 = vector.load %arg5[%c0_85, %c0_86, %c10, %c0_87] : memref<1x4x32x16xi32, #tpu.memory_space<vmem>>, vector<1x4x1x16xi32>
    %160 = vector.shape_cast %159 : vector<1x4x1x16xi32> to vector<4x16xi32>
    %161 = vector.shape_cast %158 : vector<4x16xi32> to vector<1x4x1x16xi32>
    tpu.vector_store %arg5[%c0_85, %c0_86, %c10, %c0_87], %161 {strides = array<i32>} : memref<1x4x32x16xi32, #tpu.memory_space<vmem>>, vector<1x4x1x16xi32>,
    %162 = vector.extract_strided_slice %153 {offsets = [8, 0], sizes = [4, 16], strides = [1, 1]} : vector<16x16xi32> to vector<4x16xi32>
    %163 = vector.extract_strided_slice %153 {offsets = [12, 0], sizes = [4, 16], strides = [1, 1]} : vector<16x16xi32> to vector<4x16xi32>
    %c16_i32_88 = arith.constant 16 : i32
    %164 = vector.broadcast %c16_i32_88 : i32 to vector<4x16xi32>
    %165 = arith.shli %163, %164 : vector<4x16xi32>
    %166 = arith.ori %162, %165 : vector<4x16xi32>
    %c0_89 = arith.constant 0 : index
    %c0_90 = arith.constant 0 : index
    %c11 = arith.constant 11 : index
    %c0_91 = arith.constant 0 : index
    %167 = vector.load %arg5[%c0_89, %c0_90, %c11, %c0_91] : memref<1x4x32x16xi32, #tpu.memory_space<vmem>>, vector<1x4x1x16xi32>
    %168 = vector.shape_cast %167 : vector<1x4x1x16xi32> to vector<4x16xi32>
    %169 = vector.shape_cast %166 : vector<4x16xi32> to vector<1x4x1x16xi32>
    tpu.vector_store %arg5[%c0_89, %c0_90, %c11, %c0_91], %169 {strides = array<i32>} : memref<1x4x32x16xi32, #tpu.memory_space<vmem>>, vector<1x4x1x16xi32>,
    %c0_92 = arith.constant 0 : index
    %c0_93 = arith.constant 0 : index
    %c6_94 = arith.constant 6 : index
    %c0_95 = arith.constant 0 : index
    %170 = vector.load %arg2[%c0_92, %c0_93, %c6_94, %c0_95] : memref<1x4x16x16xbf16, #tpu.memory_space<vmem>>, vector<1x4x1x16xbf16>
    %171 = vector.shape_cast %170 : vector<1x4x1x16xbf16> to vector<4x16xbf16>
    %cst_96 = arith.constant dense<0.000000e+00> : vector<16x16xf32>
    %172 = tpu.matmul %0, %171, %cst_96 {dimension_numbers = #tpu.dot_dimension_numbers<[1], [0], [0], [1], [0, 0, 1, 1], [], []>} : vector<16x4xbf16>, vector<4x16xbf16>, vector<16x16xf32> -> vector<16x16xf32>
    %173 = vector.broadcast %1 : vector<16x1xf32> to vector<16x16xf32>
    %174 = arith.addf %172, %173 : vector<16x16xf32>
    %cst_97 = arith.constant 0.000000e+00 : f32
    %175 = vector.broadcast %cst_97 : f32 to vector<16x16xf32>
    %176 = arith.maximumf %174, %175 : vector<16x16xf32>
    %177 = arith.truncf %176 : vector<16x16xf32> to vector<16x16xbf16>
    %178 = arith.extf %177 : vector<16x16xbf16> to vector<16x16xf32>
    %179 = tpu.bitcast %178 : vector<16x16xf32> -> vector<16x16xi32>
    %c16_i32_98 = arith.constant 16 : i32
    %180 = vector.broadcast %c16_i32_98 : i32 to vector<16x16xi32>
    %181 = arith.shrui %179, %180 : vector<16x16xi32>
    %182 = vector.extract_strided_slice %181 {offsets = [0, 0], sizes = [4, 16], strides = [1, 1]} : vector<16x16xi32> to vector<4x16xi32>
    %183 = vector.extract_strided_slice %181 {offsets = [4, 0], sizes = [4, 16], strides = [1, 1]} : vector<16x16xi32> to vector<4x16xi32>
    %c16_i32_99 = arith.constant 16 : i32
    %184 = vector.broadcast %c16_i32_99 : i32 to vector<4x16xi32>
    %185 = arith.shli %183, %184 : vector<4x16xi32>
    %186 = arith.ori %182, %185 : vector<4x16xi32>
    %c0_100 = arith.constant 0 : index
    %c0_101 = arith.constant 0 : index
    %c12 = arith.constant 12 : index
    %c0_102 = arith.constant 0 : index
    %187 = vector.load %arg5[%c0_100, %c0_101, %c12, %c0_102] : memref<1x4x32x16xi32, #tpu.memory_space<vmem>>, vector<1x4x1x16xi32>
    %188 = vector.shape_cast %187 : vector<1x4x1x16xi32> to vector<4x16xi32>
    %189 = vector.shape_cast %186 : vector<4x16xi32> to vector<1x4x1x16xi32>
    tpu.vector_store %arg5[%c0_100, %c0_101, %c12, %c0_102], %189 {strides = array<i32>} : memref<1x4x32x16xi32, #tpu.memory_space<vmem>>, vector<1x4x1x16xi32>,
    %190 = vector.extract_strided_slice %181 {offsets = [8, 0], sizes = [4, 16], strides = [1, 1]} : vector<16x16xi32> to vector<4x16xi32>
    %191 = vector.extract_strided_slice %181 {offsets = [12, 0], sizes = [4, 16], strides = [1, 1]} : vector<16x16xi32> to vector<4x16xi32>
    %c16_i32_103 = arith.constant 16 : i32
    %192 = vector.broadcast %c16_i32_103 : i32 to vector<4x16xi32>
    %193 = arith.shli %191, %192 : vector<4x16xi32>
    %194 = arith.ori %190, %193 : vector<4x16xi32>
    %c0_104 = arith.constant 0 : index
    %c0_105 = arith.constant 0 : index
    %c13 = arith.constant 13 : index
    %c0_106 = arith.constant 0 : index
    %195 = vector.load %arg5[%c0_104, %c0_105, %c13, %c0_106] : memref<1x4x32x16xi32, #tpu.memory_space<vmem>>, vector<1x4x1x16xi32>
    %196 = vector.shape_cast %195 : vector<1x4x1x16xi32> to vector<4x16xi32>
    %197 = vector.shape_cast %194 : vector<4x16xi32> to vector<1x4x1x16xi32>
    tpu.vector_store %arg5[%c0_104, %c0_105, %c13, %c0_106], %197 {strides = array<i32>} : memref<1x4x32x16xi32, #tpu.memory_space<vmem>>, vector<1x4x1x16xi32>,
    %c0_107 = arith.constant 0 : index
    %c0_108 = arith.constant 0 : index
    %c7_109 = arith.constant 7 : index
    %c0_110 = arith.constant 0 : index
    %198 = vector.load %arg2[%c0_107, %c0_108, %c7_109, %c0_110] : memref<1x4x16x16xbf16, #tpu.memory_space<vmem>>, vector<1x4x1x16xbf16>
    %199 = vector.shape_cast %198 : vector<1x4x1x16xbf16> to vector<4x16xbf16>
    %cst_111 = arith.constant dense<0.000000e+00> : vector<16x16xf32>
    %200 = tpu.matmul %0, %199, %cst_111 {dimension_numbers = #tpu.dot_dimension_numbers<[1], [0], [0], [1], [0, 0, 1, 1], [], []>} : vector<16x4xbf16>, vector<4x16xbf16>, vector<16x16xf32> -> vector<16x16xf32>
    %201 = vector.broadcast %1 : vector<16x1xf32> to vector<16x16xf32>
    %202 = arith.addf %200, %201 : vector<16x16xf32>
    %cst_112 = arith.constant 0.000000e+00 : f32
    %203 = vector.broadcast %cst_112 : f32 to vector<16x16xf32>
    %204 = arith.maximumf %202, %203 : vector<16x16xf32>
    %205 = arith.truncf %204 : vector<16x16xf32> to vector<16x16xbf16>
    %206 = arith.extf %205 : vector<16x16xbf16> to vector<16x16xf32>
    %207 = tpu.bitcast %206 : vector<16x16xf32> -> vector<16x16xi32>
    %c16_i32_113 = arith.constant 16 : i32
    %208 = vector.broadcast %c16_i32_113 : i32 to vector<16x16xi32>
    %209 = arith.shrui %207, %208 : vector<16x16xi32>
    %210 = vector.extract_strided_slice %209 {offsets = [0, 0], sizes = [4, 16], strides = [1, 1]} : vector<16x16xi32> to vector<4x16xi32>
    %211 = vector.extract_strided_slice %209 {offsets = [4, 0], sizes = [4, 16], strides = [1, 1]} : vector<16x16xi32> to vector<4x16xi32>
    %c16_i32_114 = arith.constant 16 : i32
    %212 = vector.broadcast %c16_i32_114 : i32 to vector<4x16xi32>
    %213 = arith.shli %211, %212 : vector<4x16xi32>
    %214 = arith.ori %210, %213 : vector<4x16xi32>
    %c0_115 = arith.constant 0 : index
    %c0_116 = arith.constant 0 : index
    %c14 = arith.constant 14 : index
    %c0_117 = arith.constant 0 : index
    %215 = vector.load %arg5[%c0_115, %c0_116, %c14, %c0_117] : memref<1x4x32x16xi32, #tpu.memory_space<vmem>>, vector<1x4x1x16xi32>
    %216 = vector.shape_cast %215 : vector<1x4x1x16xi32> to vector<4x16xi32>
    %217 = vector.shape_cast %214 : vector<4x16xi32> to vector<1x4x1x16xi32>
    tpu.vector_store %arg5[%c0_115, %c0_116, %c14, %c0_117], %217 {strides = array<i32>} : memref<1x4x32x16xi32, #tpu.memory_space<vmem>>, vector<1x4x1x16xi32>,
    %218 = vector.extract_strided_slice %209 {offsets = [8, 0], sizes = [4, 16], strides = [1, 1]} : vector<16x16xi32> to vector<4x16xi32>
    %219 = vector.extract_strided_slice %209 {offsets = [12, 0], sizes = [4, 16], strides = [1, 1]} : vector<16x16xi32> to vector<4x16xi32>
    %c16_i32_118 = arith.constant 16 : i32
    %220 = vector.broadcast %c16_i32_118 : i32 to vector<4x16xi32>
    %221 = arith.shli %219, %220 : vector<4x16xi32>
    %222 = arith.ori %218, %221 : vector<4x16xi32>
    %c0_119 = arith.constant 0 : index
    %c0_120 = arith.constant 0 : index
    %c15 = arith.constant 15 : index
    %c0_121 = arith.constant 0 : index
    %223 = vector.load %arg5[%c0_119, %c0_120, %c15, %c0_121] : memref<1x4x32x16xi32, #tpu.memory_space<vmem>>, vector<1x4x1x16xi32>
    %224 = vector.shape_cast %223 : vector<1x4x1x16xi32> to vector<4x16xi32>
    %225 = vector.shape_cast %222 : vector<4x16xi32> to vector<1x4x1x16xi32>
    tpu.vector_store %arg5[%c0_119, %c0_120, %c15, %c0_121], %225 {strides = array<i32>} : memref<1x4x32x16xi32, #tpu.memory_space<vmem>>, vector<1x4x1x16xi32>,
    %c0_122 = arith.constant 0 : index
    %c0_123 = arith.constant 0 : index
    %c8_124 = arith.constant 8 : index
    %c0_125 = arith.constant 0 : index
    %226 = vector.load %arg2[%c0_122, %c0_123, %c8_124, %c0_125] : memref<1x4x16x16xbf16, #tpu.memory_space<vmem>>, vector<1x4x1x16xbf16>
    %227 = vector.shape_cast %226 : vector<1x4x1x16xbf16> to vector<4x16xbf16>
    %cst_126 = arith.constant dense<0.000000e+00> : vector<16x16xf32>
    %228 = tpu.matmul %0, %227, %cst_126 {dimension_numbers = #tpu.dot_dimension_numbers<[1], [0], [0], [1], [0, 0, 1, 1], [], []>} : vector<16x4xbf16>, vector<4x16xbf16>, vector<16x16xf32> -> vector<16x16xf32>
    %229 = vector.broadcast %1 : vector<16x1xf32> to vector<16x16xf32>
    %230 = arith.addf %228, %229 : vector<16x16xf32>
    %cst_127 = arith.constant 0.000000e+00 : f32
    %231 = vector.broadcast %cst_127 : f32 to vector<16x16xf32>
    %232 = arith.maximumf %230, %231 : vector<16x16xf32>
    %233 = arith.truncf %232 : vector<16x16xf32> to vector<16x16xbf16>
    %234 = arith.extf %233 : vector<16x16xbf16> to vector<16x16xf32>
    %235 = tpu.bitcast %234 : vector<16x16xf32> -> vector<16x16xi32>
    %c16_i32_128 = arith.constant 16 : i32
    %236 = vector.broadcast %c16_i32_128 : i32 to vector<16x16xi32>
    %237 = arith.shrui %235, %236 : vector<16x16xi32>
    %238 = vector.extract_strided_slice %237 {offsets = [0, 0], sizes = [4, 16], strides = [1, 1]} : vector<16x16xi32> to vector<4x16xi32>
    %239 = vector.extract_strided_slice %237 {offsets = [4, 0], sizes = [4, 16], strides = [1, 1]} : vector<16x16xi32> to vector<4x16xi32>
    %c16_i32_129 = arith.constant 16 : i32
    %240 = vector.broadcast %c16_i32_129 : i32 to vector<4x16xi32>
    %241 = arith.shli %239, %240 : vector<4x16xi32>
    %242 = arith.ori %238, %241 : vector<4x16xi32>
    %c0_130 = arith.constant 0 : index
    %c0_131 = arith.constant 0 : index
    %c16 = arith.constant 16 : index
    %c0_132 = arith.constant 0 : index
    %243 = vector.load %arg5[%c0_130, %c0_131, %c16, %c0_132] : memref<1x4x32x16xi32, #tpu.memory_space<vmem>>, vector<1x4x1x16xi32>
    %244 = vector.shape_cast %243 : vector<1x4x1x16xi32> to vector<4x16xi32>
    %245 = vector.shape_cast %242 : vector<4x16xi32> to vector<1x4x1x16xi32>
    tpu.vector_store %arg5[%c0_130, %c0_131, %c16, %c0_132], %245 {strides = array<i32>} : memref<1x4x32x16xi32, #tpu.memory_space<vmem>>, vector<1x4x1x16xi32>,
    %246 = vector.extract_strided_slice %237 {offsets = [8, 0], sizes = [4, 16], strides = [1, 1]} : vector<16x16xi32> to vector<4x16xi32>
    %247 = vector.extract_strided_slice %237 {offsets = [12, 0], sizes = [4, 16], strides = [1, 1]} : vector<16x16xi32> to vector<4x16xi32>
    %c16_i32_133 = arith.constant 16 : i32
    %248 = vector.broadcast %c16_i32_133 : i32 to vector<4x16xi32>
    %249 = arith.shli %247, %248 : vector<4x16xi32>
    %250 = arith.ori %246, %249 : vector<4x16xi32>
    %c0_134 = arith.constant 0 : index
    %c0_135 = arith.constant 0 : index
    %c17 = arith.constant 17 : index
    %c0_136 = arith.constant 0 : index
    %251 = vector.load %arg5[%c0_134, %c0_135, %c17, %c0_136] : memref<1x4x32x16xi32, #tpu.memory_space<vmem>>, vector<1x4x1x16xi32>
    %252 = vector.shape_cast %251 : vector<1x4x1x16xi32> to vector<4x16xi32>
    %253 = vector.shape_cast %250 : vector<4x16xi32> to vector<1x4x1x16xi32>
    tpu.vector_store %arg5[%c0_134, %c0_135, %c17, %c0_136], %253 {strides = array<i32>} : memref<1x4x32x16xi32, #tpu.memory_space<vmem>>, vector<1x4x1x16xi32>,
    %c0_137 = arith.constant 0 : index
    %c0_138 = arith.constant 0 : index
    %c9_139 = arith.constant 9 : index
    %c0_140 = arith.constant 0 : index
    %254 = vector.load %arg2[%c0_137, %c0_138, %c9_139, %c0_140] : memref<1x4x16x16xbf16, #tpu.memory_space<vmem>>, vector<1x4x1x16xbf16>
    %255 = vector.shape_cast %254 : vector<1x4x1x16xbf16> to vector<4x16xbf16>
    %cst_141 = arith.constant dense<0.000000e+00> : vector<16x16xf32>
    %256 = tpu.matmul %0, %255, %cst_141 {dimension_numbers = #tpu.dot_dimension_numbers<[1], [0], [0], [1], [0, 0, 1, 1], [], []>} : vector<16x4xbf16>, vector<4x16xbf16>, vector<16x16xf32> -> vector<16x16xf32>
    %257 = vector.broadcast %1 : vector<16x1xf32> to vector<16x16xf32>
    %258 = arith.addf %256, %257 : vector<16x16xf32>
    %cst_142 = arith.constant 0.000000e+00 : f32
    %259 = vector.broadcast %cst_142 : f32 to vector<16x16xf32>
    %260 = arith.maximumf %258, %259 : vector<16x16xf32>
    %261 = arith.truncf %260 : vector<16x16xf32> to vector<16x16xbf16>
    %262 = arith.extf %261 : vector<16x16xbf16> to vector<16x16xf32>
    %263 = tpu.bitcast %262 : vector<16x16xf32> -> vector<16x16xi32>
    %c16_i32_143 = arith.constant 16 : i32
    %264 = vector.broadcast %c16_i32_143 : i32 to vector<16x16xi32>
    %265 = arith.shrui %263, %264 : vector<16x16xi32>
    %266 = vector.extract_strided_slice %265 {offsets = [0, 0], sizes = [4, 16], strides = [1, 1]} : vector<16x16xi32> to vector<4x16xi32>
    %267 = vector.extract_strided_slice %265 {offsets = [4, 0], sizes = [4, 16], strides = [1, 1]} : vector<16x16xi32> to vector<4x16xi32>
    %c16_i32_144 = arith.constant 16 : i32
    %268 = vector.broadcast %c16_i32_144 : i32 to vector<4x16xi32>
    %269 = arith.shli %267, %268 : vector<4x16xi32>
    %270 = arith.ori %266, %269 : vector<4x16xi32>
    %c0_145 = arith.constant 0 : index
    %c0_146 = arith.constant 0 : index
    %c18 = arith.constant 18 : index
    %c0_147 = arith.constant 0 : index
    %271 = vector.load %arg5[%c0_145, %c0_146, %c18, %c0_147] : memref<1x4x32x16xi32, #tpu.memory_space<vmem>>, vector<1x4x1x16xi32>
    %272 = vector.shape_cast %271 : vector<1x4x1x16xi32> to vector<4x16xi32>
    %273 = vector.shape_cast %270 : vector<4x16xi32> to vector<1x4x1x16xi32>
    tpu.vector_store %arg5[%c0_145, %c0_146, %c18, %c0_147], %273 {strides = array<i32>} : memref<1x4x32x16xi32, #tpu.memory_space<vmem>>, vector<1x4x1x16xi32>,
    %274 = vector.extract_strided_slice %265 {offsets = [8, 0], sizes = [4, 16], strides = [1, 1]} : vector<16x16xi32> to vector<4x16xi32>
    %275 = vector.extract_strided_slice %265 {offsets = [12, 0], sizes = [4, 16], strides = [1, 1]} : vector<16x16xi32> to vector<4x16xi32>
    %c16_i32_148 = arith.constant 16 : i32
    %276 = vector.broadcast %c16_i32_148 : i32 to vector<4x16xi32>
    %277 = arith.shli %275, %276 : vector<4x16xi32>
    %278 = arith.ori %274, %277 : vector<4x16xi32>
    %c0_149 = arith.constant 0 : index
    %c0_150 = arith.constant 0 : index
    %c19 = arith.constant 19 : index
    %c0_151 = arith.constant 0 : index
    %279 = vector.load %arg5[%c0_149, %c0_150, %c19, %c0_151] : memref<1x4x32x16xi32, #tpu.memory_space<vmem>>, vector<1x4x1x16xi32>
    %280 = vector.shape_cast %279 : vector<1x4x1x16xi32> to vector<4x16xi32>
    %281 = vector.shape_cast %278 : vector<4x16xi32> to vector<1x4x1x16xi32>
    tpu.vector_store %arg5[%c0_149, %c0_150, %c19, %c0_151], %281 {strides = array<i32>} : memref<1x4x32x16xi32, #tpu.memory_space<vmem>>, vector<1x4x1x16xi32>,
    %c0_152 = arith.constant 0 : index
    %c0_153 = arith.constant 0 : index
    %c10_154 = arith.constant 10 : index
    %c0_155 = arith.constant 0 : index
    %282 = vector.load %arg2[%c0_152, %c0_153, %c10_154, %c0_155] : memref<1x4x16x16xbf16, #tpu.memory_space<vmem>>, vector<1x4x1x16xbf16>
    %283 = vector.shape_cast %282 : vector<1x4x1x16xbf16> to vector<4x16xbf16>
    %cst_156 = arith.constant dense<0.000000e+00> : vector<16x16xf32>
    %284 = tpu.matmul %0, %283, %cst_156 {dimension_numbers = #tpu.dot_dimension_numbers<[1], [0], [0], [1], [0, 0, 1, 1], [], []>} : vector<16x4xbf16>, vector<4x16xbf16>, vector<16x16xf32> -> vector<16x16xf32>
    %285 = vector.broadcast %1 : vector<16x1xf32> to vector<16x16xf32>
    %286 = arith.addf %284, %285 : vector<16x16xf32>
    %cst_157 = arith.constant 0.000000e+00 : f32
    %287 = vector.broadcast %cst_157 : f32 to vector<16x16xf32>
    %288 = arith.maximumf %286, %287 : vector<16x16xf32>
    %289 = arith.truncf %288 : vector<16x16xf32> to vector<16x16xbf16>
    %290 = arith.extf %289 : vector<16x16xbf16> to vector<16x16xf32>
    %291 = tpu.bitcast %290 : vector<16x16xf32> -> vector<16x16xi32>
    %c16_i32_158 = arith.constant 16 : i32
    %292 = vector.broadcast %c16_i32_158 : i32 to vector<16x16xi32>
    %293 = arith.shrui %291, %292 : vector<16x16xi32>
    %294 = vector.extract_strided_slice %293 {offsets = [0, 0], sizes = [4, 16], strides = [1, 1]} : vector<16x16xi32> to vector<4x16xi32>
    %295 = vector.extract_strided_slice %293 {offsets = [4, 0], sizes = [4, 16], strides = [1, 1]} : vector<16x16xi32> to vector<4x16xi32>
    %c16_i32_159 = arith.constant 16 : i32
    %296 = vector.broadcast %c16_i32_159 : i32 to vector<4x16xi32>
    %297 = arith.shli %295, %296 : vector<4x16xi32>
    %298 = arith.ori %294, %297 : vector<4x16xi32>
    %c0_160 = arith.constant 0 : index
    %c0_161 = arith.constant 0 : index
    %c20 = arith.constant 20 : index
    %c0_162 = arith.constant 0 : index
    %299 = vector.load %arg5[%c0_160, %c0_161, %c20, %c0_162] : memref<1x4x32x16xi32, #tpu.memory_space<vmem>>, vector<1x4x1x16xi32>
    %300 = vector.shape_cast %299 : vector<1x4x1x16xi32> to vector<4x16xi32>
    %301 = vector.shape_cast %298 : vector<4x16xi32> to vector<1x4x1x16xi32>
    tpu.vector_store %arg5[%c0_160, %c0_161, %c20, %c0_162], %301 {strides = array<i32>} : memref<1x4x32x16xi32, #tpu.memory_space<vmem>>, vector<1x4x1x16xi32>,
    %302 = vector.extract_strided_slice %293 {offsets = [8, 0], sizes = [4, 16], strides = [1, 1]} : vector<16x16xi32> to vector<4x16xi32>
    %303 = vector.extract_strided_slice %293 {offsets = [12, 0], sizes = [4, 16], strides = [1, 1]} : vector<16x16xi32> to vector<4x16xi32>
    %c16_i32_163 = arith.constant 16 : i32
    %304 = vector.broadcast %c16_i32_163 : i32 to vector<4x16xi32>
    %305 = arith.shli %303, %304 : vector<4x16xi32>
    %306 = arith.ori %302, %305 : vector<4x16xi32>
    %c0_164 = arith.constant 0 : index
    %c0_165 = arith.constant 0 : index
    %c21 = arith.constant 21 : index
    %c0_166 = arith.constant 0 : index
    %307 = vector.load %arg5[%c0_164, %c0_165, %c21, %c0_166] : memref<1x4x32x16xi32, #tpu.memory_space<vmem>>, vector<1x4x1x16xi32>
    %308 = vector.shape_cast %307 : vector<1x4x1x16xi32> to vector<4x16xi32>
    %309 = vector.shape_cast %306 : vector<4x16xi32> to vector<1x4x1x16xi32>
    tpu.vector_store %arg5[%c0_164, %c0_165, %c21, %c0_166], %309 {strides = array<i32>} : memref<1x4x32x16xi32, #tpu.memory_space<vmem>>, vector<1x4x1x16xi32>,
    %c0_167 = arith.constant 0 : index
    %c0_168 = arith.constant 0 : index
    %c11_169 = arith.constant 11 : index
    %c0_170 = arith.constant 0 : index
    %310 = vector.load %arg2[%c0_167, %c0_168, %c11_169, %c0_170] : memref<1x4x16x16xbf16, #tpu.memory_space<vmem>>, vector<1x4x1x16xbf16>
    %311 = vector.shape_cast %310 : vector<1x4x1x16xbf16> to vector<4x16xbf16>
    %cst_171 = arith.constant dense<0.000000e+00> : vector<16x16xf32>
    %312 = tpu.matmul %0, %311, %cst_171 {dimension_numbers = #tpu.dot_dimension_numbers<[1], [0], [0], [1], [0, 0, 1, 1], [], []>} : vector<16x4xbf16>, vector<4x16xbf16>, vector<16x16xf32> -> vector<16x16xf32>
    %313 = vector.broadcast %1 : vector<16x1xf32> to vector<16x16xf32>
    %314 = arith.addf %312, %313 : vector<16x16xf32>
    %cst_172 = arith.constant 0.000000e+00 : f32
    %315 = vector.broadcast %cst_172 : f32 to vector<16x16xf32>
    %316 = arith.maximumf %314, %315 : vector<16x16xf32>
    %317 = arith.truncf %316 : vector<16x16xf32> to vector<16x16xbf16>
    %318 = arith.extf %317 : vector<16x16xbf16> to vector<16x16xf32>
    %319 = tpu.bitcast %318 : vector<16x16xf32> -> vector<16x16xi32>
    %c16_i32_173 = arith.constant 16 : i32
    %320 = vector.broadcast %c16_i32_173 : i32 to vector<16x16xi32>
    %321 = arith.shrui %319, %320 : vector<16x16xi32>
    %322 = vector.extract_strided_slice %321 {offsets = [0, 0], sizes = [4, 16], strides = [1, 1]} : vector<16x16xi32> to vector<4x16xi32>
    %323 = vector.extract_strided_slice %321 {offsets = [4, 0], sizes = [4, 16], strides = [1, 1]} : vector<16x16xi32> to vector<4x16xi32>
    %c16_i32_174 = arith.constant 16 : i32
    %324 = vector.broadcast %c16_i32_174 : i32 to vector<4x16xi32>
    %325 = arith.shli %323, %324 : vector<4x16xi32>
    %326 = arith.ori %322, %325 : vector<4x16xi32>
    %c0_175 = arith.constant 0 : index
    %c0_176 = arith.constant 0 : index
    %c22 = arith.constant 22 : index
    %c0_177 = arith.constant 0 : index
    %327 = vector.load %arg5[%c0_175, %c0_176, %c22, %c0_177] : memref<1x4x32x16xi32, #tpu.memory_space<vmem>>, vector<1x4x1x16xi32>
    %328 = vector.shape_cast %327 : vector<1x4x1x16xi32> to vector<4x16xi32>
    %329 = vector.shape_cast %326 : vector<4x16xi32> to vector<1x4x1x16xi32>
    tpu.vector_store %arg5[%c0_175, %c0_176, %c22, %c0_177], %329 {strides = array<i32>} : memref<1x4x32x16xi32, #tpu.memory_space<vmem>>, vector<1x4x1x16xi32>,
    %330 = vector.extract_strided_slice %321 {offsets = [8, 0], sizes = [4, 16], strides = [1, 1]} : vector<16x16xi32> to vector<4x16xi32>
    %331 = vector.extract_strided_slice %321 {offsets = [12, 0], sizes = [4, 16], strides = [1, 1]} : vector<16x16xi32> to vector<4x16xi32>
    %c16_i32_178 = arith.constant 16 : i32
    %332 = vector.broadcast %c16_i32_178 : i32 to vector<4x16xi32>
    %333 = arith.shli %331, %332 : vector<4x16xi32>
    %334 = arith.ori %330, %333 : vector<4x16xi32>
    %c0_179 = arith.constant 0 : index
    %c0_180 = arith.constant 0 : index
    %c23 = arith.constant 23 : index
    %c0_181 = arith.constant 0 : index
    %335 = vector.load %arg5[%c0_179, %c0_180, %c23, %c0_181] : memref<1x4x32x16xi32, #tpu.memory_space<vmem>>, vector<1x4x1x16xi32>
    %336 = vector.shape_cast %335 : vector<1x4x1x16xi32> to vector<4x16xi32>
    %337 = vector.shape_cast %334 : vector<4x16xi32> to vector<1x4x1x16xi32>
    tpu.vector_store %arg5[%c0_179, %c0_180, %c23, %c0_181], %337 {strides = array<i32>} : memref<1x4x32x16xi32, #tpu.memory_space<vmem>>, vector<1x4x1x16xi32>,
    %c0_182 = arith.constant 0 : index
    %c0_183 = arith.constant 0 : index
    %c12_184 = arith.constant 12 : index
    %c0_185 = arith.constant 0 : index
    %338 = vector.load %arg2[%c0_182, %c0_183, %c12_184, %c0_185] : memref<1x4x16x16xbf16, #tpu.memory_space<vmem>>, vector<1x4x1x16xbf16>
    %339 = vector.shape_cast %338 : vector<1x4x1x16xbf16> to vector<4x16xbf16>
    %cst_186 = arith.constant dense<0.000000e+00> : vector<16x16xf32>
    %340 = tpu.matmul %0, %339, %cst_186 {dimension_numbers = #tpu.dot_dimension_numbers<[1], [0], [0], [1], [0, 0, 1, 1], [], []>} : vector<16x4xbf16>, vector<4x16xbf16>, vector<16x16xf32> -> vector<16x16xf32>
    %341 = vector.broadcast %1 : vector<16x1xf32> to vector<16x16xf32>
    %342 = arith.addf %340, %341 : vector<16x16xf32>
    %cst_187 = arith.constant 0.000000e+00 : f32
    %343 = vector.broadcast %cst_187 : f32 to vector<16x16xf32>
    %344 = arith.maximumf %342, %343 : vector<16x16xf32>
    %345 = arith.truncf %344 : vector<16x16xf32> to vector<16x16xbf16>
    %346 = arith.extf %345 : vector<16x16xbf16> to vector<16x16xf32>
    %347 = tpu.bitcast %346 : vector<16x16xf32> -> vector<16x16xi32>
    %c16_i32_188 = arith.constant 16 : i32
    %348 = vector.broadcast %c16_i32_188 : i32 to vector<16x16xi32>
    %349 = arith.shrui %347, %348 : vector<16x16xi32>
    %350 = vector.extract_strided_slice %349 {offsets = [0, 0], sizes = [4, 16], strides = [1, 1]} : vector<16x16xi32> to vector<4x16xi32>
    %351 = vector.extract_strided_slice %349 {offsets = [4, 0], sizes = [4, 16], strides = [1, 1]} : vector<16x16xi32> to vector<4x16xi32>
    %c16_i32_189 = arith.constant 16 : i32
    %352 = vector.broadcast %c16_i32_189 : i32 to vector<4x16xi32>
    %353 = arith.shli %351, %352 : vector<4x16xi32>
    %354 = arith.ori %350, %353 : vector<4x16xi32>
    %c0_190 = arith.constant 0 : index
    %c0_191 = arith.constant 0 : index
    %c24 = arith.constant 24 : index
    %c0_192 = arith.constant 0 : index
    %355 = vector.load %arg5[%c0_190, %c0_191, %c24, %c0_192] : memref<1x4x32x16xi32, #tpu.memory_space<vmem>>, vector<1x4x1x16xi32>
    %356 = vector.shape_cast %355 : vector<1x4x1x16xi32> to vector<4x16xi32>
    %357 = vector.shape_cast %354 : vector<4x16xi32> to vector<1x4x1x16xi32>
    tpu.vector_store %arg5[%c0_190, %c0_191, %c24, %c0_192], %357 {strides = array<i32>} : memref<1x4x32x16xi32, #tpu.memory_space<vmem>>, vector<1x4x1x16xi32>,
    %358 = vector.extract_strided_slice %349 {offsets = [8, 0], sizes = [4, 16], strides = [1, 1]} : vector<16x16xi32> to vector<4x16xi32>
    %359 = vector.extract_strided_slice %349 {offsets = [12, 0], sizes = [4, 16], strides = [1, 1]} : vector<16x16xi32> to vector<4x16xi32>
    %c16_i32_193 = arith.constant 16 : i32
    %360 = vector.broadcast %c16_i32_193 : i32 to vector<4x16xi32>
    %361 = arith.shli %359, %360 : vector<4x16xi32>
    %362 = arith.ori %358, %361 : vector<4x16xi32>
    %c0_194 = arith.constant 0 : index
    %c0_195 = arith.constant 0 : index
    %c25 = arith.constant 25 : index
    %c0_196 = arith.constant 0 : index
    %363 = vector.load %arg5[%c0_194, %c0_195, %c25, %c0_196] : memref<1x4x32x16xi32, #tpu.memory_space<vmem>>, vector<1x4x1x16xi32>
    %364 = vector.shape_cast %363 : vector<1x4x1x16xi32> to vector<4x16xi32>
    %365 = vector.shape_cast %362 : vector<4x16xi32> to vector<1x4x1x16xi32>
    tpu.vector_store %arg5[%c0_194, %c0_195, %c25, %c0_196], %365 {strides = array<i32>} : memref<1x4x32x16xi32, #tpu.memory_space<vmem>>, vector<1x4x1x16xi32>,
    %c0_197 = arith.constant 0 : index
    %c0_198 = arith.constant 0 : index
    %c13_199 = arith.constant 13 : index
    %c0_200 = arith.constant 0 : index
    %366 = vector.load %arg2[%c0_197, %c0_198, %c13_199, %c0_200] : memref<1x4x16x16xbf16, #tpu.memory_space<vmem>>, vector<1x4x1x16xbf16>
    %367 = vector.shape_cast %366 : vector<1x4x1x16xbf16> to vector<4x16xbf16>
    %cst_201 = arith.constant dense<0.000000e+00> : vector<16x16xf32>
    %368 = tpu.matmul %0, %367, %cst_201 {dimension_numbers = #tpu.dot_dimension_numbers<[1], [0], [0], [1], [0, 0, 1, 1], [], []>} : vector<16x4xbf16>, vector<4x16xbf16>, vector<16x16xf32> -> vector<16x16xf32>
    %369 = vector.broadcast %1 : vector<16x1xf32> to vector<16x16xf32>
    %370 = arith.addf %368, %369 : vector<16x16xf32>
    %cst_202 = arith.constant 0.000000e+00 : f32
    %371 = vector.broadcast %cst_202 : f32 to vector<16x16xf32>
    %372 = arith.maximumf %370, %371 : vector<16x16xf32>
    %373 = arith.truncf %372 : vector<16x16xf32> to vector<16x16xbf16>
    %374 = arith.extf %373 : vector<16x16xbf16> to vector<16x16xf32>
    %375 = tpu.bitcast %374 : vector<16x16xf32> -> vector<16x16xi32>
    %c16_i32_203 = arith.constant 16 : i32
    %376 = vector.broadcast %c16_i32_203 : i32 to vector<16x16xi32>
    %377 = arith.shrui %375, %376 : vector<16x16xi32>
    %378 = vector.extract_strided_slice %377 {offsets = [0, 0], sizes = [4, 16], strides = [1, 1]} : vector<16x16xi32> to vector<4x16xi32>
    %379 = vector.extract_strided_slice %377 {offsets = [4, 0], sizes = [4, 16], strides = [1, 1]} : vector<16x16xi32> to vector<4x16xi32>
    %c16_i32_204 = arith.constant 16 : i32
    %380 = vector.broadcast %c16_i32_204 : i32 to vector<4x16xi32>
    %381 = arith.shli %379, %380 : vector<4x16xi32>
    %382 = arith.ori %378, %381 : vector<4x16xi32>
    %c0_205 = arith.constant 0 : index
    %c0_206 = arith.constant 0 : index
    %c26 = arith.constant 26 : index
    %c0_207 = arith.constant 0 : index
    %383 = vector.load %arg5[%c0_205, %c0_206, %c26, %c0_207] : memref<1x4x32x16xi32, #tpu.memory_space<vmem>>, vector<1x4x1x16xi32>
    %384 = vector.shape_cast %383 : vector<1x4x1x16xi32> to vector<4x16xi32>
    %385 = vector.shape_cast %382 : vector<4x16xi32> to vector<1x4x1x16xi32>
    tpu.vector_store %arg5[%c0_205, %c0_206, %c26, %c0_207], %385 {strides = array<i32>} : memref<1x4x32x16xi32, #tpu.memory_space<vmem>>, vector<1x4x1x16xi32>,
    %386 = vector.extract_strided_slice %377 {offsets = [8, 0], sizes = [4, 16], strides = [1, 1]} : vector<16x16xi32> to vector<4x16xi32>
    %387 = vector.extract_strided_slice %377 {offsets = [12, 0], sizes = [4, 16], strides = [1, 1]} : vector<16x16xi32> to vector<4x16xi32>
    %c16_i32_208 = arith.constant 16 : i32
    %388 = vector.broadcast %c16_i32_208 : i32 to vector<4x16xi32>
    %389 = arith.shli %387, %388 : vector<4x16xi32>
    %390 = arith.ori %386, %389 : vector<4x16xi32>
    %c0_209 = arith.constant 0 : index
    %c0_210 = arith.constant 0 : index
    %c27 = arith.constant 27 : index
    %c0_211 = arith.constant 0 : index
    %391 = vector.load %arg5[%c0_209, %c0_210, %c27, %c0_211] : memref<1x4x32x16xi32, #tpu.memory_space<vmem>>, vector<1x4x1x16xi32>
    %392 = vector.shape_cast %391 : vector<1x4x1x16xi32> to vector<4x16xi32>
    %393 = vector.shape_cast %390 : vector<4x16xi32> to vector<1x4x1x16xi32>
    tpu.vector_store %arg5[%c0_209, %c0_210, %c27, %c0_211], %393 {strides = array<i32>} : memref<1x4x32x16xi32, #tpu.memory_space<vmem>>, vector<1x4x1x16xi32>,
    %c0_212 = arith.constant 0 : index
    %c0_213 = arith.constant 0 : index
    %c14_214 = arith.constant 14 : index
    %c0_215 = arith.constant 0 : index
    %394 = vector.load %arg2[%c0_212, %c0_213, %c14_214, %c0_215] : memref<1x4x16x16xbf16, #tpu.memory_space<vmem>>, vector<1x4x1x16xbf16>
    %395 = vector.shape_cast %394 : vector<1x4x1x16xbf16> to vector<4x16xbf16>
    %cst_216 = arith.constant dense<0.000000e+00> : vector<16x16xf32>
    %396 = tpu.matmul %0, %395, %cst_216 {dimension_numbers = #tpu.dot_dimension_numbers<[1], [0], [0], [1], [0, 0, 1, 1], [], []>} : vector<16x4xbf16>, vector<4x16xbf16>, vector<16x16xf32> -> vector<16x16xf32>
    %397 = vector.broadcast %1 : vector<16x1xf32> to vector<16x16xf32>
    %398 = arith.addf %396, %397 : vector<16x16xf32>
    %cst_217 = arith.constant 0.000000e+00 : f32
    %399 = vector.broadcast %cst_217 : f32 to vector<16x16xf32>
    %400 = arith.maximumf %398, %399 : vector<16x16xf32>
    %401 = arith.truncf %400 : vector<16x16xf32> to vector<16x16xbf16>
    %402 = arith.extf %401 : vector<16x16xbf16> to vector<16x16xf32>
    %403 = tpu.bitcast %402 : vector<16x16xf32> -> vector<16x16xi32>
    %c16_i32_218 = arith.constant 16 : i32
    %404 = vector.broadcast %c16_i32_218 : i32 to vector<16x16xi32>
    %405 = arith.shrui %403, %404 : vector<16x16xi32>
    %406 = vector.extract_strided_slice %405 {offsets = [0, 0], sizes = [4, 16], strides = [1, 1]} : vector<16x16xi32> to vector<4x16xi32>
    %407 = vector.extract_strided_slice %405 {offsets = [4, 0], sizes = [4, 16], strides = [1, 1]} : vector<16x16xi32> to vector<4x16xi32>
    %c16_i32_219 = arith.constant 16 : i32
    %408 = vector.broadcast %c16_i32_219 : i32 to vector<4x16xi32>
    %409 = arith.shli %407, %408 : vector<4x16xi32>
    %410 = arith.ori %406, %409 : vector<4x16xi32>
    %c0_220 = arith.constant 0 : index
    %c0_221 = arith.constant 0 : index
    %c28 = arith.constant 28 : index
    %c0_222 = arith.constant 0 : index
    %411 = vector.load %arg5[%c0_220, %c0_221, %c28, %c0_222] : memref<1x4x32x16xi32, #tpu.memory_space<vmem>>, vector<1x4x1x16xi32>
    %412 = vector.shape_cast %411 : vector<1x4x1x16xi32> to vector<4x16xi32>
    %413 = vector.shape_cast %410 : vector<4x16xi32> to vector<1x4x1x16xi32>
    tpu.vector_store %arg5[%c0_220, %c0_221, %c28, %c0_222], %413 {strides = array<i32>} : memref<1x4x32x16xi32, #tpu.memory_space<vmem>>, vector<1x4x1x16xi32>,
    %414 = vector.extract_strided_slice %405 {offsets = [8, 0], sizes = [4, 16], strides = [1, 1]} : vector<16x16xi32> to vector<4x16xi32>
    %415 = vector.extract_strided_slice %405 {offsets = [12, 0], sizes = [4, 16], strides = [1, 1]} : vector<16x16xi32> to vector<4x16xi32>
    %c16_i32_223 = arith.constant 16 : i32
    %416 = vector.broadcast %c16_i32_223 : i32 to vector<4x16xi32>
    %417 = arith.shli %415, %416 : vector<4x16xi32>
    %418 = arith.ori %414, %417 : vector<4x16xi32>
    %c0_224 = arith.constant 0 : index
    %c0_225 = arith.constant 0 : index
    %c29 = arith.constant 29 : index
    %c0_226 = arith.constant 0 : index
    %419 = vector.load %arg5[%c0_224, %c0_225, %c29, %c0_226] : memref<1x4x32x16xi32, #tpu.memory_space<vmem>>, vector<1x4x1x16xi32>
    %420 = vector.shape_cast %419 : vector<1x4x1x16xi32> to vector<4x16xi32>
    %421 = vector.shape_cast %418 : vector<4x16xi32> to vector<1x4x1x16xi32>
    tpu.vector_store %arg5[%c0_224, %c0_225, %c29, %c0_226], %421 {strides = array<i32>} : memref<1x4x32x16xi32, #tpu.memory_space<vmem>>, vector<1x4x1x16xi32>,
    %c0_227 = arith.constant 0 : index
    %c0_228 = arith.constant 0 : index
    %c15_229 = arith.constant 15 : index
    %c0_230 = arith.constant 0 : index
    %422 = vector.load %arg2[%c0_227, %c0_228, %c15_229, %c0_230] : memref<1x4x16x16xbf16, #tpu.memory_space<vmem>>, vector<1x4x1x16xbf16>
    %423 = vector.shape_cast %422 : vector<1x4x1x16xbf16> to vector<4x16xbf16>
    %cst_231 = arith.constant dense<0.000000e+00> : vector<16x16xf32>
    %424 = tpu.matmul %0, %423, %cst_231 {dimension_numbers = #tpu.dot_dimension_numbers<[1], [0], [0], [1], [0, 0, 1, 1], [], []>} : vector<16x4xbf16>, vector<4x16xbf16>, vector<16x16xf32> -> vector<16x16xf32>
    %425 = vector.broadcast %1 : vector<16x1xf32> to vector<16x16xf32>
    %426 = arith.addf %424, %425 : vector<16x16xf32>
    %cst_232 = arith.constant 0.000000e+00 : f32
    %427 = vector.broadcast %cst_232 : f32 to vector<16x16xf32>
    %428 = arith.maximumf %426, %427 : vector<16x16xf32>
    %429 = arith.truncf %428 : vector<16x16xf32> to vector<16x16xbf16>
    %430 = arith.extf %429 : vector<16x16xbf16> to vector<16x16xf32>
    %431 = tpu.bitcast %430 : vector<16x16xf32> -> vector<16x16xi32>
    %c16_i32_233 = arith.constant 16 : i32
    %432 = vector.broadcast %c16_i32_233 : i32 to vector<16x16xi32>
    %433 = arith.shrui %431, %432 : vector<16x16xi32>
    %434 = vector.extract_strided_slice %433 {offsets = [0, 0], sizes = [4, 16], strides = [1, 1]} : vector<16x16xi32> to vector<4x16xi32>
    %435 = vector.extract_strided_slice %433 {offsets = [4, 0], sizes = [4, 16], strides = [1, 1]} : vector<16x16xi32> to vector<4x16xi32>
    %c16_i32_234 = arith.constant 16 : i32
    %436 = vector.broadcast %c16_i32_234 : i32 to vector<4x16xi32>
    %437 = arith.shli %435, %436 : vector<4x16xi32>
    %438 = arith.ori %434, %437 : vector<4x16xi32>
    %c0_235 = arith.constant 0 : index
    %c0_236 = arith.constant 0 : index
    %c30 = arith.constant 30 : index
    %c0_237 = arith.constant 0 : index
    %439 = vector.load %arg5[%c0_235, %c0_236, %c30, %c0_237] : memref<1x4x32x16xi32, #tpu.memory_space<vmem>>, vector<1x4x1x16xi32>
    %440 = vector.shape_cast %439 : vector<1x4x1x16xi32> to vector<4x16xi32>
    %441 = vector.shape_cast %438 : vector<4x16xi32> to vector<1x4x1x16xi32>
    tpu.vector_store %arg5[%c0_235, %c0_236, %c30, %c0_237], %441 {strides = array<i32>} : memref<1x4x32x16xi32, #tpu.memory_space<vmem>>, vector<1x4x1x16xi32>,
    %442 = vector.extract_strided_slice %433 {offsets = [8, 0], sizes = [4, 16], strides = [1, 1]} : vector<16x16xi32> to vector<4x16xi32>
    %443 = vector.extract_strided_slice %433 {offsets = [12, 0], sizes = [4, 16], strides = [1, 1]} : vector<16x16xi32> to vector<4x16xi32>
    %c16_i32_238 = arith.constant 16 : i32
    %444 = vector.broadcast %c16_i32_238 : i32 to vector<4x16xi32>
    %445 = arith.shli %443, %444 : vector<4x16xi32>
    %446 = arith.ori %442, %445 : vector<4x16xi32>
    %c0_239 = arith.constant 0 : index
    %c0_240 = arith.constant 0 : index
    %c31 = arith.constant 31 : index
    %c0_241 = arith.constant 0 : index
    %447 = vector.load %arg5[%c0_239, %c0_240, %c31, %c0_241] : memref<1x4x32x16xi32, #tpu.memory_space<vmem>>, vector<1x4x1x16xi32>
    %448 = vector.shape_cast %447 : vector<1x4x1x16xi32> to vector<4x16xi32>
    %449 = vector.shape_cast %446 : vector<4x16xi32> to vector<1x4x1x16xi32>
    tpu.vector_store %arg5[%c0_239, %c0_240, %c31, %c0_241], %449 {strides = array<i32>} : memref<1x4x32x16xi32, #tpu.memory_space<vmem>>, vector<1x4x1x16xi32>,
    return
  }
  func.func @transform_0(%arg0: i32, %arg1: i32) -> (i32, i32, i32, i32) {
    %c0_i32 = arith.constant 0 : i32
    %c0_i32_0 = arith.constant 0 : i32
    %c0_i32_1 = arith.constant 0 : i32
    return %arg1, %c0_i32, %arg0, %c0_i32_0 : i32, i32, i32, i32
  }
  func.func @transform_1(%arg0: i32, %arg1: i32) -> (i32, i32) {
    %c0_i32 = arith.constant 0 : i32
    %c0_i32_0 = arith.constant 0 : i32
    %c0_i32_1 = arith.constant 0 : i32
    return %c0_i32, %c0_i32_0 : i32, i32
  }
  func.func @transform_2(%arg0: i32, %arg1: i32) -> (i32, i32) {
    %c0_i32 = arith.constant 0 : i32
    %c0_i32_0 = arith.constant 0 : i32
    %c0_i32_1 = arith.constant 0 : i32
    return %c0_i32, %c0_i32_0 : i32, i32
  }
  func.func @transform_3(%arg0: i32, %arg1: i32) -> (i32, i32, i32, i32) {
    %c0_i32 = arith.constant 0 : i32
    %c0_i32_0 = arith.constant 0 : i32
    %c0_i32_1 = arith.constant 0 : i32
    return %arg1, %c0_i32, %arg0, %c0_i32_0 : i32, i32, i32, i32
  }
}

</mosaic_0001>

<llo_original>
// kernel: tpu_custom_call.1
$region0: #{tpu_custom_call.1}
  #allocation0 [shape = 'u32[]', space=smem, size = 0x4, offset = 0x4, fixed_abs, tag = 'smem constant byte address 0x4 - core index']
  #allocation1 [shape = 'u32[144,128]{1,0:T(1,128)}', space=vmem, size = 0x12000, scoped, tag = 'internal scratch']
  %s0 = inlined_call_operand.hbm [shape: bf16[2,4,16,16], index: 0, kind: input, shape index: {}]
  %s1 = inlined_call_operand.vmem [shape: bf16[16,4], index: 1, kind: input, shape index: {}]
  %s2 = inlined_call_operand.vmem [shape: f32[16,1], index: 2, kind: input, shape index: {}]
  %s3 = inlined_call_operand.vmem [shape: u32[2,4,32,16], index: 3, kind: output, shape index: {}]
  %s4 = sld [smem:[#allocation0]]
  $region49: #{tpu_custom_call.1} parent=0
    _
  %s6 = ssub.s32 1, %s4
  %s7 = scalar_select 0, %s6, %s4
  $region1: #{tpu_custom_call.1} parent=0
    #allocation2 [shape = 'u8[32768]{0}', space=vmem, size = 0x8000, scoped, tag = 'input window, operand 0']
    #allocation3 [shape = 's32[2]{0}', space=sflag, size = 0x8, scoped, tag = 'scoped memory for tpu_custom_call.1']
    %8 = vsyncpa [#allocation3], 0
    %s9 = scalar_lea.sflag [#allocation3], 1
    %10 = vsyncpa %s9, 0
    loop: start=0, step=1, limit=4
    $region2: #{tpu_custom_call.1} parent=1 // loop_pre_header
      _
    $region3: #{tpu_custom_call.1} parent=1 // loop_header
      %s12 = sphi 0, %s16
      %p13 = scmp.ge.s32.totalorder %s12, 4
      %s19 = sphi 0, %s31
      %s20 = sphi 0, %s27
      %s21 = sphi 0, %s19
      %s22 = sphi 0, %s20
      %s23 = sphi 0, %s21
      %s24 = sphi 0, %s22
      %s36 = sphi 0, %s38
      %s39 = sphi 0, %s36
      %s40 = sphi 0, %s39
      %s56 = sphi 0, %s40
      %s60 = sphi 0, %s60
      %s62 = sphi 0, %s60
      %s63 = sphi 0, %s62
      %s77 = sphi 0, %s63
      %s81 = sphi 0, %s81
      %s83 = sphi 0, %s81
      %s84 = sphi 0, %s83
      %s98 = sphi 0, %s84
      %s106 = sphi 0, %s108
      %s109 = sphi 0, %s106
      %s110 = sphi 0, %s109
      %s126 = sphi 0, %s110
    $region4: #{tpu_custom_call.1} parent=1 // loop_header_branch
      %15 = sbr.rel (%p13) target = $region8
    $region5: #{tpu_custom_call.1} parent=1 // loop_body
      %s17 = ssub.s32 %s12, 1
      %s18 = ssub.s32 %s12, 2
      %s25 = sadd.s32 1, %s20
      %p26 = scmp.ge.s32.totalorder %s25, 2
      %s27 = scalar_select %p26, 0, %s25
      %s28 = sadd.s32 1, %s19
      %s29 = scalar_select %p26, %s28, %s19
      %p30 = scmp.ge.s32.totalorder %s29, 1
      %s31 = scalar_select %p30, 0, %s29
      %s32 = ssub.s32 %s20, %s27
      %s33 = ssub.s32 %s19, %s31
      %s34 = sor.u32 %s32, %s33
      %p35 = scmp.eq.s32.totalorder %s34, 0
      %s37 = sadd.s32 %s36, 1
      %s38 = scalar_select %p35, %s36, %s37
      %p41 = pneg %p35
      %p42 = scmp.eq.s32.totalorder %s12, 1
      %p43 = por %p41, %p42
      %p44 = scmp.ne.s32.totalorder %s36, %s39
      %p45 = scmp.eq.s32.totalorder %s12, 0
      %p46 = por %p44, %p45
      %p47 = scmp.ne.s32.totalorder %s36, %s39
      %p48 = scmp.eq.s32.totalorder %s17, 1
      %p49 = por %p47, %p48
      %p50 = scmp.ne.s32.totalorder %s39, %s40
      %p51 = scmp.eq.s32.totalorder %s17, 0
      %p52 = por %p50, %p51
      %p53 = scmp.ne.s32.totalorder %s39, %s40
      %p54 = scmp.eq.s32.totalorder %s18, 1
      %p55 = por %p53, %p54
      %p57 = scmp.ne.s32.totalorder %s40, %s56
      %p58 = scmp.eq.s32.totalorder %s18, 0
      %p59 = por %p57, %p58
      %s61 = sadd.s32 %s60, 1
      %p64 = scmp.eq.s32.totalorder %s12, 1
      %p65 = scmp.ne.s32.totalorder %s60, %s62
      %p66 = scmp.eq.s32.totalorder %s12, 0
      %p67 = por %p65, %p66
      %p68 = scmp.ne.s32.totalorder %s60, %s62
      %p69 = scmp.eq.s32.totalorder %s17, 1
      %p70 = por %p68, %p69
      %p71 = scmp.ne.s32.totalorder %s62, %s63
      %p72 = scmp.eq.s32.totalorder %s17, 0
      %p73 = por %p71, %p72
      %p74 = scmp.ne.s32.totalorder %s62, %s63
      %p75 = scmp.eq.s32.totalorder %s18, 1
      %p76 = por %p74, %p75
      %p78 = scmp.ne.s32.totalorder %s63, %s77
      %p79 = scmp.eq.s32.totalorder %s18, 0
      %p80 = por %p78, %p79
      %s82 = sadd.s32 %s81, 1
      %p85 = scmp.eq.s32.totalorder %s12, 1
      %p86 = scmp.ne.s32.totalorder %s81, %s83
      %p87 = scmp.eq.s32.totalorder %s12, 0
      %p88 = por %p86, %p87
      %p89 = scmp.ne.s32.totalorder %s81, %s83
      %p90 = scmp.eq.s32.totalorder %s17, 1
      %p91 = por %p89, %p90
      %p92 = scmp.ne.s32.totalorder %s83, %s84
      %p93 = scmp.eq.s32.totalorder %s17, 0
      %p94 = por %p92, %p93
      %p95 = scmp.ne.s32.totalorder %s83, %s84
      %p96 = scmp.eq.s32.totalorder %s18, 1
      %p97 = por %p95, %p96
      %p99 = scmp.ne.s32.totalorder %s84, %s98
      %p100 = scmp.eq.s32.totalorder %s18, 0
      %p101 = por %p99, %p100
      %s102 = ssub.s32 %s20, %s27
      %s103 = ssub.s32 %s19, %s31
      %s104 = sor.u32 %s102, %s103
      %p105 = scmp.eq.s32.totalorder %s104, 0
      %s107 = sadd.s32 %s106, 1
      %s108 = scalar_select %p105, %s106, %s107
      %p111 = pneg %p105
      %p112 = scmp.eq.s32.totalorder %s12, 1
      %p113 = por %p111, %p112
      %p114 = scmp.ne.s32.totalorder %s106, %s109
      %p115 = scmp.eq.s32.totalorder %s12, 0
      %p116 = por %p114, %p115
      %p117 = scmp.ne.s32.totalorder %s106, %s109
      %p118 = scmp.eq.s32.totalorder %s17, 1
      %p119 = por %p117, %p118
      %p120 = scmp.ne.s32.totalorder %s109, %s110
      %p121 = scmp.eq.s32.totalorder %s17, 0
      %p122 = por %p120, %p121
      %p123 = scmp.ne.s32.totalorder %s109, %s110
      %p124 = scmp.eq.s32.totalorder %s18, 1
      %p125 = por %p123, %p124
      %p127 = scmp.ne.s32.totalorder %s110, %s126
      %p128 = scmp.eq.s32.totalorder %s18, 0
      %p129 = por %p127, %p128
      %p130 = scmp.le.s32.totalorder 1, %s12
      %p131 = scmp.lt.s32.totalorder %s12, 3
      %p132 = pnand %p130, %p131
      %p133 = pneg %p132
      // Predicated region
      $region9: #{tpu_custom_call.1} parent=5 // pred_check
        _
      $region10: #{tpu_custom_call.1} parent=5 // pred_check_branch
        %135 = sbr.rel (%p132) target = $region12
      $region11: #{tpu_custom_call.1} parent=5 // pred_region
        %s136 = ssub.s32 %s12, 1
        // Predicated region
        $region13: #{tpu_custom_call.1} parent=11 // pred_check
          %p137 = pneg %p73
        $region14: #{tpu_custom_call.1} parent=11 // pred_check_branch
          %139 = sbr.rel (%p137) target = $region16
        $region15: #{tpu_custom_call.1} parent=11 // pred_region
          _
        $region16: #{tpu_custom_call.1} parent=11 // pred_fallthru
          _
        // Predicated region
        $region17: #{tpu_custom_call.1} parent=11 // pred_check
          %p140 = pneg %p94
        $region18: #{tpu_custom_call.1} parent=11 // pred_check_branch
          %142 = sbr.rel (%p140) target = $region20
        $region19: #{tpu_custom_call.1} parent=11 // pred_region
          _
        $region20: #{tpu_custom_call.1} parent=11 // pred_fallthru
          _
      $region12: #{tpu_custom_call.1} parent=5 // pred_fallthru
        _
      %p143 = scmp.lt.s32.totalorder %s12, 2
      // Predicated region
      $region21: #{tpu_custom_call.1} parent=5 // pred_check
        %p144 = pneg %p143
      $region22: #{tpu_custom_call.1} parent=5 // pred_check_branch
        %146 = sbr.rel (%p144) target = $region24
      $region23: #{tpu_custom_call.1} parent=5 // pred_region
        // Predicated region
        $region25: #{tpu_custom_call.1} parent=23 // pred_check
          %p147 = pneg %p46
        $region26: #{tpu_custom_call.1} parent=23 // pred_check_branch
          %149 = sbr.rel (%p147) target = $region28
        $region27: #{tpu_custom_call.1} parent=23 // pred_region
          %s150 = sand.u32 %s36, 1
          %s151 = scalar_lea.sflag [#allocation3], %s150
          %s152 = sand.u32 %s36, 1
          %s153 = smul.addr %s152, 32
          %s154 = scalar_lea.vmem [#allocation2], %s153
          %s155 = smul.u32 2, %s19
          %s157 = ssub.s32 512, 512
          %158 = vsyncadd %s151, %s157
          %s159 = smul.addr %s20, 8
          %s160 = sadd.s32 %s155, %s159
          %s161 = smul.addr %s160, 64
          %s162 = scalar_lea.hbm %s0, %s161
          %s163 = sshll.u32 %s154, 4
          %s164 = int_to_ptr.vmem [resolvable:$true] %s163
          %169 = dma.hbm_to_vmem [thread:$0]  %s162, 512, %s164, %s151, 64, 64, 4
        $region28: #{tpu_custom_call.1} parent=23 // pred_fallthru
          _
      $region24: #{tpu_custom_call.1} parent=5 // pred_fallthru
        _
      %p170 = scmp.le.s32.totalorder 1, %s12
      %p171 = scmp.lt.s32.totalorder %s12, 3
      %p172 = pnand %p170, %p171
      %p173 = pneg %p172
      // Predicated region
      $region29: #{tpu_custom_call.1} parent=5 // pred_check
        _
      $region30: #{tpu_custom_call.1} parent=5 // pred_check_branch
        %175 = sbr.rel (%p172) target = $region32
      $region31: #{tpu_custom_call.1} parent=5 // pred_region
        %s176 = ssub.s32 %s12, 1
        %s177 = sand.u32 %s39, 1
        %s178 = scalar_lea.sflag [#allocation3], %s177
        %s179 = sand.u32 %s39, 1
        %s180 = smul.addr %s179, 32
        %s181 = scalar_lea.vmem [#allocation2], %s180
        // Predicated region
        $region33: #{tpu_custom_call.1} parent=31 // pred_check
          %p182 = pneg %p52
        $region34: #{tpu_custom_call.1} parent=31 // pred_check_branch
          %184 = sbr.rel (%p182) target = $region36
        $region35: #{tpu_custom_call.1} parent=31 // pred_region
          %185 = dma.done %s178, 512
        $region36: #{tpu_custom_call.1} parent=31 // pred_fallthru
          _
        %s186 = sand.u32 %s39, 1
        %s187 = scalar_lea.sflag [#allocation3], %s186
        %s188 = sand.u32 %s39, 1
        %s189 = smul.addr %s188, 32
        %s190 = scalar_lea.vmem [#allocation2], %s189
        %p191 = pneg %p52
        %p192 = pneg %p49
        %p193 = pneg %p73
        %p194 = pneg %p70
        %p195 = pneg %p94
        %p196 = pneg %p91
        %p197 = pneg %p122
        %p198 = pneg %p119
        %s199 = smul.u32 4, %s21
        %p200 = scmp.lt.s32.totalorder %s22, 1
        %s201 = scalar_select %p200, %s22, 1
        %p202 = scmp.lt.s32.totalorder %s199, 3
        %s203 = scalar_select %p202, %s199, 3
        %s204 = smul.addr %s201, 16
        %s205 = sadd.s32 %s203, %s204
        %s206 = smul.addr %s205, 8
        %s207 = scalar_lea.vmem %s3, %s206
        %s208 = smul.u32 2, %s21
        %s209 = smul.u32 4, %s21
        %p210 = scmp.lt.s32.totalorder %s22, 1
        %s211 = scalar_select %p210, %s22, 1
        %p212 = scmp.lt.s32.totalorder %s209, 3
        %s213 = scalar_select %p212, %s209, 3
        %s214 = smul.addr %s211, 16
        %s215 = sadd.s32 %s213, %s214
        %s216 = smul.addr %s215, 8
        %s217 = scalar_lea.vmem %s3, %s216
        %s218 = smul.u32 4, %s21
        %v220 = vld [vmem:[%s1] sm:$0xf]
        %v221 = vld [vmem:[%s1 + $0x4] sm:$0xf]
        %v222 = vld [vmem:[%s2] sm:$0xff]
        %v223 = vld [vmem:[%s2 + $0x8] sm:$0xff]
        %v224 = vld [vmem:[%s181] sm:$0x1]
        %v225 = vld [vmem:[%s181 + $0x8] sm:$0x1]
        %v226 = vld [vmem:[%s181 + $0x10] sm:$0x1]
        %v227 = vld [vmem:[%s181 + $0x18] sm:$0x1]
        %229 = vset.pattern.permute.xlu0 0
        %230 = vperm.xlu0 %229, %v222
        %v231 = vpop.permute.xlu0 %230
        %234 = vset.pattern.permute.xlu0 0
        %235 = vperm.xlu0 %234, %v223
        %v236 = vpop.permute.xlu0 %235
        %v240 = vunpack.c.l.b16 %v220
        %v241 = vunpack.c.l.b16 %v221
        %v242 = vpack.c.b16 %v241, %v240
        %v247 = vunpack.c.l.b16 %v224
        %v248 = vunpack.c.l.b16 %v225
        %v249 = vunpack.c.l.b16 %v226
        %v250 = vunpack.c.l.b16 %v227
        %v251 = vpack.c.b16 %v247, %v247
        %v252 = vpack.c.b16 %v248, %v248
        %v253 = vpack.c.b16 %v249, %v249
        %v254 = vpack.c.b16 %v250, %v250
        %v255 = vunpack.c.l.b16 %v251
        %v256 = vunpack.c.l.b16 %v252
        %v257 = vunpack.c.l.b16 %v253
        %v258 = vunpack.c.l.b16 %v254
        %v259 = vrot.slane %v256, 7
        %vm260 = vcmask 1041409
        %v261 = vsel %vm260, %v259, %v255
        %v262 = vrot.slane %v257, 6
        %vm263 = vcmask 1042434
        %v264 = vsel %vm263, %v262, %v261
        %v265 = vrot.slane %v258, 5
        %vm266 = vcmask 1043459
        %v267 = vsel %vm266, %v265, %v264
        %v268 = vpack.c.b16 %v267, %v267
        %vm269 = vcmask 31744
        %v271 = vsel %vm269, %v242, 0
        %vm273 = vcmask 1041408
        %v275 = vsel %vm273, %v268, 0
        %277 = vmatprep.subr.bf16.mxu0 0
        %278 = vmatpush1.bf16.msra.mxu0 %v275
        %279 = vmatprep.subr.bf16.mxu0 0
        %280 = vmatpush1.bf16.msra.mxu0 0
        %281 = vmatprep.subr.bf16.mxu0 0
        %282 = vmatpush1.bf16.msra.mxu0 0
        %283 = vmatprep.subr.bf16.mxu0 0
        %284 = vmatpush1.bf16.msra.mxu0 0
        %285 = vmatprep.subr.bf16.mxu0 0
        %286 = vmatpush1.bf16.msra.mxu0 0
        %287 = vmatprep.subr.bf16.mxu0 0
        %288 = vmatpush1.bf16.msra.mxu0 0
        %289 = vmatprep.subr.bf16.mxu0 0
        %290 = vmatpush1.bf16.msra.mxu0 0
        %291 = vmatprep.subr.bf16.mxu0 0
        %292 = vmatpush1.bf16.msra.mxu0 0
        %293 = vmatprep.subr.bf16.mxu0 0
        %294 = vmatpush1.bf16.msra.mxu0 0
        %295 = vmatprep.subr.bf16.mxu0 0
        %296 = vmatpush1.bf16.msra.mxu0 0
        %297 = vmatprep.subr.bf16.mxu0 0
        %298 = vmatpush1.bf16.msra.mxu0 0
        %299 = vmatprep.subr.bf16.mxu0 0
        %300 = vmatpush1.bf16.msra.mxu0 0
        %301 = vmatprep.subr.bf16.mxu0 0
        %302 = vmatpush1.bf16.msra.mxu0 0
        %303 = vmatprep.subr.bf16.mxu0 0
        %304 = vmatpush1.bf16.msra.mxu0 0
        %305 = vmatprep.subr.bf16.mxu0 0
        %306 = vmatpush1.bf16.msra.mxu0 0
        %307 = vmatprep.subr.bf16.mxu0 0
        %308 = vmatpush1.bf16.msra.mxu0 0
        %309 = vmatprep.mubr.bf16.mxu0 0
        %310 = vmatmul.mubr.bf16.gmra.mrb[0].mxu0 %v271
        %v311 = vpop.f32.mrb[0].mxu0
        %v312 = vadd.f32 %v231, %v311
        %v313 = vpop.f32.mrb[0].mxu0
        %v314 = vpop.f32.mrb[0].mxu0
        %v315 = vadd.f32 %v236, %v314
        %v316 = vpop.f32.mrb[0].mxu0
        %317 = vdwg.mxu0
        %v318 = vmax.f32 %v312, 0.0
        %v319 = vmax.f32 %v315, 0.0
        %v320 = vpack.c.bf16 %v319, %v318
        %v321 = vunpack.c.l.bf16 %v320
        %v322 = vunpack.c.h.bf16 %v320
        %v325 = vshrl.u32 %v321, 16
        %v326 = vshrl.u32 %v322, 16
        %v327 = vshll.u32 %v325, 16
        %v328 = vrot.slane %v327, 4
        %v329 = vor.u32 %v325, %v328
        %v331 = vunpack.c.l.s4 1966171168
        %v332 = vunpack.c.0.s8 %v331
        %v333 = vlaneseq
        %v334 = vshrl.u32 %v333, 7
        %v335 = vsub.s32 %v332, %v334
        %v336 = vrot.slane %v329, %v335
        %v337 = vcombine.high %v336, %v336
        %v339 = vunpack.c.l.s4 1966171168
        %v340 = vunpack.c.0.s8 %v339
        %v341 = vlaneseq
        %v342 = vshrl.u32 %v341, 7
        %v343 = vsub.s32 %v340, %v342
        %v344 = vrot.slane %v336, %v343
        %v346 = vunpack.c.l.s4 1966171168
        %v347 = vunpack.c.0.s8 %v346
        %v348 = vlaneseq
        %v349 = vshrl.u32 %v348, 7
        %v350 = vsub.s32 %v347, %v349
        %v351 = vrot.slane %v337, %v350
        %v352 = vcombine.high %v344, %v344
        %v353 = vcombine.high %v351, %v351
        %vm354 = vcmask 122880
        %355 = vst.msk [vmem:[%s217] sm:$0x1] %vm354, %v344
        %356 = vst.msk [vmem:[%s217 + $0x20] sm:$0x1] %vm354, %v351
        %357 = vst.msk [vmem:[%s217 + $0x40] sm:$0x1] %vm354, %v352
        %358 = vst.msk [vmem:[%s217 + $0x60] sm:$0x1] %vm354, %v353
        %v359 = vshll.u32 %v326, 16
        %v360 = vrot.slane %v359, 4
        %v361 = vor.u32 %v326, %v360
        %v363 = vunpack.c.l.s4 1966171168
        %v364 = vunpack.c.0.s8 %v363
        %v365 = vlaneseq
        %v366 = vshrl.u32 %v365, 7
        %v367 = vsub.s32 %v364, %v366
        %v368 = vrot.slane %v361, %v367
        %v369 = vcombine.high %v368, %v368
        %v371 = vunpack.c.l.s4 1966171168
        %v372 = vunpack.c.0.s8 %v371
        %v373 = vlaneseq
        %v374 = vshrl.u32 %v373, 7
        %v375 = vsub.s32 %v372, %v374
        %v376 = vrot.slane %v368, %v375
        %v378 = vunpack.c.l.s4 1966171168
        %v379 = vunpack.c.0.s8 %v378
        %v380 = vlaneseq
        %v381 = vshrl.u32 %v380, 7
        %v382 = vsub.s32 %v379, %v381
        %v383 = vrot.slane %v369, %v382
        %v384 = vcombine.high %v376, %v376
        %v385 = vcombine.high %v383, %v383
        %386 = vst.msk [vmem:[%s217 + $0x1] sm:$0x1] %vm354, %v376
        %387 = vst.msk [vmem:[%s217 + $0x21] sm:$0x1] %vm354, %v383
        %388 = vst.msk [vmem:[%s217 + $0x41] sm:$0x1] %vm354, %v384
        %389 = vst.msk [vmem:[%s217 + $0x61] sm:$0x1] %vm354, %v385
        %v390 = vld [vmem:[%s181] sm:$0x1]
        %v391 = vld [vmem:[%s181 + $0x8] sm:$0x1]
        %v392 = vld [vmem:[%s181 + $0x10] sm:$0x1]
        %v393 = vld [vmem:[%s181 + $0x18] sm:$0x1]
        %v398 = vunpack.c.l.b16 %v390
        %v399 = vunpack.c.l.b16 %v391
        %v400 = vunpack.c.l.b16 %v392
        %v401 = vunpack.c.l.b16 %v393
        %v402 = vpack.c.b16 %v398, %v398
        %v403 = vpack.c.b16 %v399, %v399
        %v404 = vpack.c.b16 %v400, %v400
        %v405 = vpack.c.b16 %v401, %v401
        %v406 = vunpack.c.l.b16 %v402
        %v407 = vunpack.c.l.b16 %v403
        %v408 = vunpack.c.l.b16 %v404
        %v409 = vunpack.c.l.b16 %v405
        %v410 = vrot.slane %v406, 1
        %v411 = vsel %vm260, %v407, %v410
        %v412 = vrot.slane %v408, 7
        %v413 = vsel %vm263, %v412, %v411
        %v414 = vrot.slane %v409, 6
        %v415 = vsel %vm266, %v414, %v413
        %v416 = vpack.c.b16 %v415, %v415
        %v418 = vsel %vm273, %v416, 0
        %420 = vmatprep.subr.bf16.mxu0 0
        %421 = vmatpush1.bf16.msra.mxu0 %v418
        %422 = vmatprep.subr.bf16.mxu0 0
        %423 = vmatpush1.bf16.msra.mxu0 0
        %424 = vmatprep.subr.bf16.mxu0 0
        %425 = vmatpush1.bf16.msra.mxu0 0
        %426 = vmatprep.subr.bf16.mxu0 0
        %427 = vmatpush1.bf16.msra.mxu0 0
        %428 = vmatprep.subr.bf16.mxu0 0
        %429 = vmatpush1.bf16.msra.mxu0 0
        %430 = vmatprep.subr.bf16.mxu0 0
        %431 = vmatpush1.bf16.msra.mxu0 0
        %432 = vmatprep.subr.bf16.mxu0 0
        %433 = vmatpush1.bf16.msra.mxu0 0
        %434 = vmatprep.subr.bf16.mxu0 0
        %435 = vmatpush1.bf16.msra.mxu0 0
        %436 = vmatprep.subr.bf16.mxu0 0
        %437 = vmatpush1.bf16.msra.mxu0 0
        %438 = vmatprep.subr.bf16.mxu0 0
        %439 = vmatpush1.bf16.msra.mxu0 0
        %440 = vmatprep.subr.bf16.mxu0 0
        %441 = vmatpush1.bf16.msra.mxu0 0
        %442 = vmatprep.subr.bf16.mxu0 0
        %443 = vmatpush1.bf16.msra.mxu0 0
        %444 = vmatprep.subr.bf16.mxu0 0
        %445 = vmatpush1.bf16.msra.mxu0 0
        %446 = vmatprep.subr.bf16.mxu0 0
        %447 = vmatpush1.bf16.msra.mxu0 0
        %448 = vmatprep.subr.bf16.mxu0 0
        %449 = vmatpush1.bf16.msra.mxu0 0
        %450 = vmatprep.subr.bf16.mxu0 0
        %451 = vmatpush1.bf16.msra.mxu0 0
        %452 = vmatprep.mubr.bf16.mxu0 0
        %453 = vmatmul.mubr.bf16.gmra.mrb[0].mxu0 %v271
        %v454 = vpop.f32.mrb[0].mxu0
        %v455 = vadd.f32 %v231, %v454
        %v456 = vpop.f32.mrb[0].mxu0
        %v457 = vpop.f32.mrb[0].mxu0
        %v458 = vadd.f32 %v236, %v457
        %v459 = vpop.f32.mrb[0].mxu0
        %460 = vdwg.mxu0
        %v461 = vmax.f32 %v455, 0.0
        %v462 = vmax.f32 %v458, 0.0
        %v463 = vpack.c.bf16 %v462, %v461
        %v464 = vunpack.c.l.bf16 %v463
        %v465 = vunpack.c.h.bf16 %v463
        %v468 = vshrl.u32 %v464, 16
        %v469 = vshrl.u32 %v465, 16
        %v470 = vshll.u32 %v468, 16
        %v471 = vrot.slane %v470, 4
        %v472 = vor.u32 %v468, %v471
        %v474 = vunpack.c.l.s4 1966171168
        %v475 = vunpack.c.0.s8 %v474
        %v476 = vlaneseq
        %v477 = vshrl.u32 %v476, 7
        %v478 = vsub.s32 %v475, %v477
        %v479 = vrot.slane %v472, %v478
        %v480 = vcombine.high %v479, %v479
        %v482 = vunpack.c.l.s4 1966171168
        %v483 = vunpack.c.0.s8 %v482
        %v484 = vlaneseq
        %v485 = vshrl.u32 %v484, 7
        %v486 = vsub.s32 %v483, %v485
        %v487 = vrot.slane %v479, %v486
        %v489 = vunpack.c.l.s4 1966171168
        %v490 = vunpack.c.0.s8 %v489
        %v491 = vlaneseq
        %v492 = vshrl.u32 %v491, 7
        %v493 = vsub.s32 %v490, %v492
        %v494 = vrot.slane %v480, %v493
        %v495 = vcombine.high %v487, %v487
        %v496 = vcombine.high %v494, %v494
        %497 = vst.msk [vmem:[%s217 + $0x2] sm:$0x1] %vm354, %v487
        %498 = vst.msk [vmem:[%s217 + $0x22] sm:$0x1] %vm354, %v494
        %499 = vst.msk [vmem:[%s217 + $0x42] sm:$0x1] %vm354, %v495
        %500 = vst.msk [vmem:[%s217 + $0x62] sm:$0x1] %vm354, %v496
        %v501 = vshll.u32 %v469, 16
        %v502 = vrot.slane %v501, 4
        %v503 = vor.u32 %v469, %v502
        %v505 = vunpack.c.l.s4 1966171168
        %v506 = vunpack.c.0.s8 %v505
        %v507 = vlaneseq
        %v508 = vshrl.u32 %v507, 7
        %v509 = vsub.s32 %v506, %v508
        %v510 = vrot.slane %v503, %v509
        %v511 = vcombine.high %v510, %v510
        %v513 = vunpack.c.l.s4 1966171168
        %v514 = vunpack.c.0.s8 %v513
        %v515 = vlaneseq
        %v516 = vshrl.u32 %v515, 7
        %v517 = vsub.s32 %v514, %v516
        %v518 = vrot.slane %v510, %v517
        %v520 = vunpack.c.l.s4 1966171168
        %v521 = vunpack.c.0.s8 %v520
        %v522 = vlaneseq
        %v523 = vshrl.u32 %v522, 7
        %v524 = vsub.s32 %v521, %v523
        %v525 = vrot.slane %v511, %v524
        %v526 = vcombine.high %v518, %v518
        %v527 = vcombine.high %v525, %v525
        %528 = vst.msk [vmem:[%s217 + $0x3] sm:$0x1] %vm354, %v518
        %529 = vst.msk [vmem:[%s217 + $0x23] sm:$0x1] %vm354, %v525
        %530 = vst.msk [vmem:[%s217 + $0x43] sm:$0x1] %vm354, %v526
        %531 = vst.msk [vmem:[%s217 + $0x63] sm:$0x1] %vm354, %v527
        %v532 = vld [vmem:[%s181] sm:$0x2]
        %v533 = vld [vmem:[%s181 + $0x8] sm:$0x2]
        %v534 = vld [vmem:[%s181 + $0x10] sm:$0x2]
        %v535 = vld [vmem:[%s181 + $0x18] sm:$0x2]
        %v540 = vunpack.c.l.b16 %v532
        %v541 = vunpack.c.l.b16 %v533
        %v542 = vunpack.c.l.b16 %v534
        %v543 = vunpack.c.l.b16 %v535
        %v544 = vpack.c.b16 %v540, %v540
        %v545 = vpack.c.b16 %v541, %v541
        %v546 = vpack.c.b16 %v542, %v542
        %v547 = vpack.c.b16 %v543, %v543
        %v548 = vunpack.c.l.b16 %v544
        %v549 = vunpack.c.l.b16 %v545
        %v550 = vunpack.c.l.b16 %v546
        %v551 = vunpack.c.l.b16 %v547
        %v552 = vrot.slane %v548, 2
        %v553 = vrot.slane %v549, 1
        %v554 = vsel %vm260, %v553, %v552
        %v555 = vsel %vm263, %v550, %v554
        %v556 = vrot.slane %v551, 7
        %v557 = vsel %vm266, %v556, %v555
        %v558 = vpack.c.b16 %v557, %v557
        %v560 = vsel %vm273, %v558, 0
        %562 = vmatprep.subr.bf16.mxu0 0
        %563 = vmatpush1.bf16.msra.mxu0 %v560
        %564 = vmatprep.subr.bf16.mxu0 0
        %565 = vmatpush1.bf16.msra.mxu0 0
        %566 = vmatprep.subr.bf16.mxu0 0
        %567 = vmatpush1.bf16.msra.mxu0 0
        %568 = vmatprep.subr.bf16.mxu0 0
        %569 = vmatpush1.bf16.msra.mxu0 0
        %570 = vmatprep.subr.bf16.mxu0 0
        %571 = vmatpush1.bf16.msra.mxu0 0
        %572 = vmatprep.subr.bf16.mxu0 0
        %573 = vmatpush1.bf16.msra.mxu0 0
        %574 = vmatprep.subr.bf16.mxu0 0
        %575 = vmatpush1.bf16.msra.mxu0 0
        %576 = vmatprep.subr.bf16.mxu0 0
        %577 = vmatpush1.bf16.msra.mxu0 0
        %578 = vmatprep.subr.bf16.mxu0 0
        %579 = vmatpush1.bf16.msra.mxu0 0
        %580 = vmatprep.subr.bf16.mxu0 0
        %581 = vmatpush1.bf16.msra.mxu0 0
        %582 = vmatprep.subr.bf16.mxu0 0
        %583 = vmatpush1.bf16.msra.mxu0 0
        %584 = vmatprep.subr.bf16.mxu0 0
        %585 = vmatpush1.bf16.msra.mxu0 0
        %586 = vmatprep.subr.bf16.mxu0 0
        %587 = vmatpush1.bf16.msra.mxu0 0
        %588 = vmatprep.subr.bf16.mxu0 0
        %589 = vmatpush1.bf16.msra.mxu0 0
        %590 = vmatprep.subr.bf16.mxu0 0
        %591 = vmatpush1.bf16.msra.mxu0 0
        %592 = vmatprep.subr.bf16.mxu0 0
        %593 = vmatpush1.bf16.msra.mxu0 0
        %594 = vmatprep.mubr.bf16.mxu0 0
        %595 = vmatmul.mubr.bf16.gmra.mrb[0].mxu0 %v271
        %v596 = vpop.f32.mrb[0].mxu0
        %v597 = vadd.f32 %v231, %v596
        %v598 = vpop.f32.mrb[0].mxu0
        %v599 = vpop.f32.mrb[0].mxu0
        %v600 = vadd.f32 %v236, %v599
        %v601 = vpop.f32.mrb[0].mxu0
        %602 = vdwg.mxu0
        %v603 = vmax.f32 %v597, 0.0
        %v604 = vmax.f32 %v600, 0.0
        %v605 = vpack.c.bf16 %v604, %v603
        %v606 = vunpack.c.l.bf16 %v605
        %v607 = vunpack.c.h.bf16 %v605
        %v610 = vshrl.u32 %v606, 16
        %v611 = vshrl.u32 %v607, 16
        %v612 = vshll.u32 %v610, 16
        %v613 = vrot.slane %v612, 4
        %v614 = vor.u32 %v610, %v613
        %v616 = vunpack.c.l.s4 1966171168
        %v617 = vunpack.c.0.s8 %v616
        %v618 = vlaneseq
        %v619 = vshrl.u32 %v618, 7
        %v620 = vsub.s32 %v617, %v619
        %v621 = vrot.slane %v614, %v620
        %v622 = vcombine.high %v621, %v621
        %v624 = vunpack.c.l.s4 1966171168
        %v625 = vunpack.c.0.s8 %v624
        %v626 = vlaneseq
        %v627 = vshrl.u32 %v626, 7
        %v628 = vsub.s32 %v625, %v627
        %v629 = vrot.slane %v621, %v628
        %v631 = vunpack.c.l.s4 1966171168
        %v632 = vunpack.c.0.s8 %v631
        %v633 = vlaneseq
        %v634 = vshrl.u32 %v633, 7
        %v635 = vsub.s32 %v632, %v634
        %v636 = vrot.slane %v622, %v635
        %v637 = vcombine.high %v629, %v629
        %v638 = vcombine.high %v636, %v636
        %639 = vst.msk [vmem:[%s217 + $0x4] sm:$0x1] %vm354, %v629
        %640 = vst.msk [vmem:[%s217 + $0x24] sm:$0x1] %vm354, %v636
        %641 = vst.msk [vmem:[%s217 + $0x44] sm:$0x1] %vm354, %v637
        %642 = vst.msk [vmem:[%s217 + $0x64] sm:$0x1] %vm354, %v638
        %v643 = vshll.u32 %v611, 16
        %v644 = vrot.slane %v643, 4
        %v645 = vor.u32 %v611, %v644
        %v647 = vunpack.c.l.s4 1966171168
        %v648 = vunpack.c.0.s8 %v647
        %v649 = vlaneseq
        %v650 = vshrl.u32 %v649, 7
        %v651 = vsub.s32 %v648, %v650
        %v652 = vrot.slane %v645, %v651
        %v653 = vcombine.high %v652, %v652
        %v655 = vunpack.c.l.s4 1966171168
        %v656 = vunpack.c.0.s8 %v655
        %v657 = vlaneseq
        %v658 = vshrl.u32 %v657, 7
        %v659 = vsub.s32 %v656, %v658
        %v660 = vrot.slane %v652, %v659
        %v662 = vunpack.c.l.s4 1966171168
        %v663 = vunpack.c.0.s8 %v662
        %v664 = vlaneseq
        %v665 = vshrl.u32 %v664, 7
        %v666 = vsub.s32 %v663, %v665
        %v667 = vrot.slane %v653, %v666
        %v668 = vcombine.high %v660, %v660
        %v669 = vcombine.high %v667, %v667
        %670 = vst.msk [vmem:[%s217 + $0x5] sm:$0x1] %vm354, %v660
        %671 = vst.msk [vmem:[%s217 + $0x25] sm:$0x1] %vm354, %v667
        %672 = vst.msk [vmem:[%s217 + $0x45] sm:$0x1] %vm354, %v668
        %673 = vst.msk [vmem:[%s217 + $0x65] sm:$0x1] %vm354, %v669
        %v674 = vld [vmem:[%s181] sm:$0x2]
        %v675 = vld [vmem:[%s181 + $0x8] sm:$0x2]
        %v676 = vld [vmem:[%s181 + $0x10] sm:$0x2]
        %v677 = vld [vmem:[%s181 + $0x18] sm:$0x2]
        %v682 = vunpack.c.l.b16 %v674
        %v683 = vunpack.c.l.b16 %v675
        %v684 = vunpack.c.l.b16 %v676
        %v685 = vunpack.c.l.b16 %v677
        %v686 = vpack.c.b16 %v682, %v682
        %v687 = vpack.c.b16 %v683, %v683
        %v688 = vpack.c.b16 %v684, %v684
        %v689 = vpack.c.b16 %v685, %v685
        %v690 = vunpack.c.l.b16 %v686
        %v691 = vunpack.c.l.b16 %v687
        %v692 = vunpack.c.l.b16 %v688
        %v693 = vunpack.c.l.b16 %v689
        %v694 = vrot.slane %v690, 3
        %v695 = vrot.slane %v691, 2
        %v696 = vsel %vm260, %v695, %v694
        %v697 = vrot.slane %v692, 1
        %v698 = vsel %vm263, %v697, %v696
        %v699 = vsel %vm266, %v693, %v698
        %v700 = vpack.c.b16 %v699, %v699
        %v702 = vsel %vm273, %v700, 0
        %704 = vmatprep.subr.bf16.mxu0 0
        %705 = vmatpush1.bf16.msra.mxu0 %v702
        %706 = vmatprep.subr.bf16.mxu0 0
        %707 = vmatpush1.bf16.msra.mxu0 0
        %708 = vmatprep.subr.bf16.mxu0 0
        %709 = vmatpush1.bf16.msra.mxu0 0
        %710 = vmatprep.subr.bf16.mxu0 0
        %711 = vmatpush1.bf16.msra.mxu0 0
        %712 = vmatprep.subr.bf16.mxu0 0
        %713 = vmatpush1.bf16.msra.mxu0 0
        %714 = vmatprep.subr.bf16.mxu0 0
        %715 = vmatpush1.bf16.msra.mxu0 0
        %716 = vmatprep.subr.bf16.mxu0 0
        %717 = vmatpush1.bf16.msra.mxu0 0
        %718 = vmatprep.subr.bf16.mxu0 0
        %719 = vmatpush1.bf16.msra.mxu0 0
        %720 = vmatprep.subr.bf16.mxu0 0
        %721 = vmatpush1.bf16.msra.mxu0 0
        %722 = vmatprep.subr.bf16.mxu0 0
        %723 = vmatpush1.bf16.msra.mxu0 0
        %724 = vmatprep.subr.bf16.mxu0 0
        %725 = vmatpush1.bf16.msra.mxu0 0
        %726 = vmatprep.subr.bf16.mxu0 0
        %727 = vmatpush1.bf16.msra.mxu0 0
        %728 = vmatprep.subr.bf16.mxu0 0
        %729 = vmatpush1.bf16.msra.mxu0 0
        %730 = vmatprep.subr.bf16.mxu0 0
        %731 = vmatpush1.bf16.msra.mxu0 0
        %732 = vmatprep.subr.bf16.mxu0 0
        %733 = vmatpush1.bf16.msra.mxu0 0
        %734 = vmatprep.subr.bf16.mxu0 0
        %735 = vmatpush1.bf16.msra.mxu0 0
        %736 = vmatprep.mubr.bf16.mxu0 0
        %737 = vmatmul.mubr.bf16.gmra.mrb[0].mxu0 %v271
        %v738 = vpop.f32.mrb[0].mxu0
        %v739 = vadd.f32 %v231, %v738
        %v740 = vpop.f32.mrb[0].mxu0
        %v741 = vpop.f32.mrb[0].mxu0
        %v742 = vadd.f32 %v236, %v741
        %v743 = vpop.f32.mrb[0].mxu0
        %744 = vdwg.mxu0
        %v745 = vmax.f32 %v739, 0.0
        %v746 = vmax.f32 %v742, 0.0
        %v747 = vpack.c.bf16 %v746, %v745
        %v748 = vunpack.c.l.bf16 %v747
        %v749 = vunpack.c.h.bf16 %v747
        %v752 = vshrl.u32 %v748, 16
        %v753 = vshrl.u32 %v749, 16
        %v754 = vshll.u32 %v752, 16
        %v755 = vrot.slane %v754, 4
        %v756 = vor.u32 %v752, %v755
        %v758 = vunpack.c.l.s4 1966171168
        %v759 = vunpack.c.0.s8 %v758
        %v760 = vlaneseq
        %v761 = vshrl.u32 %v760, 7
        %v762 = vsub.s32 %v759, %v761
        %v763 = vrot.slane %v756, %v762
        %v764 = vcombine.high %v763, %v763
        %v766 = vunpack.c.l.s4 1966171168
        %v767 = vunpack.c.0.s8 %v766
        %v768 = vlaneseq
        %v769 = vshrl.u32 %v768, 7
        %v770 = vsub.s32 %v767, %v769
        %v771 = vrot.slane %v763, %v770
        %v773 = vunpack.c.l.s4 1966171168
        %v774 = vunpack.c.0.s8 %v773
        %v775 = vlaneseq
        %v776 = vshrl.u32 %v775, 7
        %v777 = vsub.s32 %v774, %v776
        %v778 = vrot.slane %v764, %v777
        %v779 = vcombine.high %v771, %v771
        %v780 = vcombine.high %v778, %v778
        %781 = vst.msk [vmem:[%s217 + $0x6] sm:$0x1] %vm354, %v771
        %782 = vst.msk [vmem:[%s217 + $0x26] sm:$0x1] %vm354, %v778
        %783 = vst.msk [vmem:[%s217 + $0x46] sm:$0x1] %vm354, %v779
        %784 = vst.msk [vmem:[%s217 + $0x66] sm:$0x1] %vm354, %v780
        %v785 = vshll.u32 %v753, 16
        %v786 = vrot.slane %v785, 4
        %v787 = vor.u32 %v753, %v786
        %v789 = vunpack.c.l.s4 1966171168
        %v790 = vunpack.c.0.s8 %v789
        %v791 = vlaneseq
        %v792 = vshrl.u32 %v791, 7
        %v793 = vsub.s32 %v790, %v792
        %v794 = vrot.slane %v787, %v793
        %v795 = vcombine.high %v794, %v794
        %v797 = vunpack.c.l.s4 1966171168
        %v798 = vunpack.c.0.s8 %v797
        %v799 = vlaneseq
        %v800 = vshrl.u32 %v799, 7
        %v801 = vsub.s32 %v798, %v800
        %v802 = vrot.slane %v794, %v801
        %v804 = vunpack.c.l.s4 1966171168
        %v805 = vunpack.c.0.s8 %v804
        %v806 = vlaneseq
        %v807 = vshrl.u32 %v806, 7
        %v808 = vsub.s32 %v805, %v807
        %v809 = vrot.slane %v795, %v808
        %v810 = vcombine.high %v802, %v802
        %v811 = vcombine.high %v809, %v809
        %812 = vst.msk [vmem:[%s217 + $0x7] sm:$0x1] %vm354, %v802
        %813 = vst.msk [vmem:[%s217 + $0x27] sm:$0x1] %vm354, %v809
        %814 = vst.msk [vmem:[%s217 + $0x47] sm:$0x1] %vm354, %v810
        %815 = vst.msk [vmem:[%s217 + $0x67] sm:$0x1] %vm354, %v811
        %v816 = vld [vmem:[%s181] sm:$0x4]
        %v817 = vld [vmem:[%s181 + $0x8] sm:$0x4]
        %v818 = vld [vmem:[%s181 + $0x10] sm:$0x4]
        %v819 = vld [vmem:[%s181 + $0x18] sm:$0x4]
        %v824 = vunpack.c.l.b16 %v816
        %v825 = vunpack.c.l.b16 %v817
        %v826 = vunpack.c.l.b16 %v818
        %v827 = vunpack.c.l.b16 %v819
        %v828 = vpack.c.b16 %v824, %v824
        %v829 = vpack.c.b16 %v825, %v825
        %v830 = vpack.c.b16 %v826, %v826
        %v831 = vpack.c.b16 %v827, %v827
        %v832 = vunpack.c.l.b16 %v828
        %v833 = vunpack.c.l.b16 %v829
        %v834 = vunpack.c.l.b16 %v830
        %v835 = vunpack.c.l.b16 %v831
        %v836 = vrot.slane %v832, 4
        %v837 = vrot.slane %v833, 3
        %v838 = vsel %vm260, %v837, %v836
        %v839 = vrot.slane %v834, 2
        %v840 = vsel %vm263, %v839, %v838
        %v841 = vrot.slane %v835, 1
        %v842 = vsel %vm266, %v841, %v840
        %v843 = vpack.c.b16 %v842, %v842
        %v845 = vsel %vm273, %v843, 0
        %847 = vmatprep.subr.bf16.mxu0 0
        %848 = vmatpush1.bf16.msra.mxu0 %v845
        %849 = vmatprep.subr.bf16.mxu0 0
        %850 = vmatpush1.bf16.msra.mxu0 0
        %851 = vmatprep.subr.bf16.mxu0 0
        %852 = vmatpush1.bf16.msra.mxu0 0
        %853 = vmatprep.subr.bf16.mxu0 0
        %854 = vmatpush1.bf16.msra.mxu0 0
        %855 = vmatprep.subr.bf16.mxu0 0
        %856 = vmatpush1.bf16.msra.mxu0 0
        %857 = vmatprep.subr.bf16.mxu0 0
        %858 = vmatpush1.bf16.msra.mxu0 0
        %859 = vmatprep.subr.bf16.mxu0 0
        %860 = vmatpush1.bf16.msra.mxu0 0
        %861 = vmatprep.subr.bf16.mxu0 0
        %862 = vmatpush1.bf16.msra.mxu0 0
        %863 = vmatprep.subr.bf16.mxu0 0
        %864 = vmatpush1.bf16.msra.mxu0 0
        %865 = vmatprep.subr.bf16.mxu0 0
        %866 = vmatpush1.bf16.msra.mxu0 0
        %867 = vmatprep.subr.bf16.mxu0 0
        %868 = vmatpush1.bf16.msra.mxu0 0
        %869 = vmatprep.subr.bf16.mxu0 0
        %870 = vmatpush1.bf16.msra.mxu0 0
        %871 = vmatprep.subr.bf16.mxu0 0
        %872 = vmatpush1.bf16.msra.mxu0 0
        %873 = vmatprep.subr.bf16.mxu0 0
        %874 = vmatpush1.bf16.msra.mxu0 0
        %875 = vmatprep.subr.bf16.mxu0 0
        %876 = vmatpush1.bf16.msra.mxu0 0
        %877 = vmatprep.subr.bf16.mxu0 0
        %878 = vmatpush1.bf16.msra.mxu0 0
        %879 = vmatprep.mubr.bf16.mxu0 0
        %880 = vmatmul.mubr.bf16.gmra.mrb[0].mxu0 %v271
        %v881 = vpop.f32.mrb[0].mxu0
        %v882 = vadd.f32 %v231, %v881
        %v883 = vpop.f32.mrb[0].mxu0
        %v884 = vpop.f32.mrb[0].mxu0
        %v885 = vadd.f32 %v236, %v884
        %v886 = vpop.f32.mrb[0].mxu0
        %887 = vdwg.mxu0
        %v888 = vmax.f32 %v882, 0.0
        %v889 = vmax.f32 %v885, 0.0
        %v890 = vpack.c.bf16 %v889, %v888
        %v891 = vunpack.c.l.bf16 %v890
        %v892 = vunpack.c.h.bf16 %v890
        %v895 = vshrl.u32 %v891, 16
        %v896 = vshrl.u32 %v892, 16
        %v897 = vshll.u32 %v895, 16
        %v898 = vrot.slane %v897, 4
        %v899 = vor.u32 %v895, %v898
        %v901 = vunpack.c.l.s4 1966171168
        %v902 = vunpack.c.0.s8 %v901
        %v903 = vlaneseq
        %v904 = vshrl.u32 %v903, 7
        %v905 = vsub.s32 %v902, %v904
        %v906 = vrot.slane %v899, %v905
        %v907 = vcombine.high %v906, %v906
        %v909 = vunpack.c.l.s4 1966171168
        %v910 = vunpack.c.0.s8 %v909
        %v911 = vlaneseq
        %v912 = vshrl.u32 %v911, 7
        %v913 = vsub.s32 %v910, %v912
        %v914 = vrot.slane %v906, %v913
        %v916 = vunpack.c.l.s4 1966171168
        %v917 = vunpack.c.0.s8 %v916
        %v918 = vlaneseq
        %v919 = vshrl.u32 %v918, 7
        %v920 = vsub.s32 %v917, %v919
        %v921 = vrot.slane %v907, %v920
        %v922 = vcombine.high %v914, %v914
        %v923 = vcombine.high %v921, %v921
        %924 = vst.msk [vmem:[%s217 + $0x8] sm:$0x1] %vm354, %v914
        %925 = vst.msk [vmem:[%s217 + $0x28] sm:$0x1] %vm354, %v921
        %926 = vst.msk [vmem:[%s217 + $0x48] sm:$0x1] %vm354, %v922
        %927 = vst.msk [vmem:[%s217 + $0x68] sm:$0x1] %vm354, %v923
        %v928 = vshll.u32 %v896, 16
        %v929 = vrot.slane %v928, 4
        %v930 = vor.u32 %v896, %v929
        %v932 = vunpack.c.l.s4 1966171168
        %v933 = vunpack.c.0.s8 %v932
        %v934 = vlaneseq
        %v935 = vshrl.u32 %v934, 7
        %v936 = vsub.s32 %v933, %v935
        %v937 = vrot.slane %v930, %v936
        %v938 = vcombine.high %v937, %v937
        %v940 = vunpack.c.l.s4 1966171168
        %v941 = vunpack.c.0.s8 %v940
        %v942 = vlaneseq
        %v943 = vshrl.u32 %v942, 7
        %v944 = vsub.s32 %v941, %v943
        %v945 = vrot.slane %v937, %v944
        %v947 = vunpack.c.l.s4 1966171168
        %v948 = vunpack.c.0.s8 %v947
        %v949 = vlaneseq
        %v950 = vshrl.u32 %v949, 7
        %v951 = vsub.s32 %v948, %v950
        %v952 = vrot.slane %v938, %v951
        %v953 = vcombine.high %v945, %v945
        %v954 = vcombine.high %v952, %v952
        %955 = vst.msk [vmem:[%s217 + $0x9] sm:$0x1] %vm354, %v945
        %956 = vst.msk [vmem:[%s217 + $0x29] sm:$0x1] %vm354, %v952
        %957 = vst.msk [vmem:[%s217 + $0x49] sm:$0x1] %vm354, %v953
        %958 = vst.msk [vmem:[%s217 + $0x69] sm:$0x1] %vm354, %v954
        %v959 = vld [vmem:[%s181] sm:$0x4]
        %v960 = vld [vmem:[%s181 + $0x8] sm:$0x4]
        %v961 = vld [vmem:[%s181 + $0x10] sm:$0x4]
        %v962 = vld [vmem:[%s181 + $0x18] sm:$0x4]
        %v967 = vunpack.c.l.b16 %v959
        %v968 = vunpack.c.l.b16 %v960
        %v969 = vunpack.c.l.b16 %v961
        %v970 = vunpack.c.l.b16 %v962
        %v971 = vpack.c.b16 %v967, %v967
        %v972 = vpack.c.b16 %v968, %v968
        %v973 = vpack.c.b16 %v969, %v969
        %v974 = vpack.c.b16 %v970, %v970
        %v975 = vunpack.c.l.b16 %v971
        %v976 = vunpack.c.l.b16 %v972
        %v977 = vunpack.c.l.b16 %v973
        %v978 = vunpack.c.l.b16 %v974
        %v979 = vrot.slane %v975, 5
        %v980 = vrot.slane %v976, 4
        %v981 = vsel %vm260, %v980, %v979
        %v982 = vrot.slane %v977, 3
        %v983 = vsel %vm263, %v982, %v981
        %v984 = vrot.slane %v978, 2
        %v985 = vsel %vm266, %v984, %v983
        %v986 = vpack.c.b16 %v985, %v985
        %v988 = vsel %vm273, %v986, 0
        %990 = vmatprep.subr.bf16.mxu0 0
        %991 = vmatpush1.bf16.msra.mxu0 %v988
        %992 = vmatprep.subr.bf16.mxu0 0
        %993 = vmatpush1.bf16.msra.mxu0 0
        %994 = vmatprep.subr.bf16.mxu0 0
        %995 = vmatpush1.bf16.msra.mxu0 0
        %996 = vmatprep.subr.bf16.mxu0 0
        %997 = vmatpush1.bf16.msra.mxu0 0
        %998 = vmatprep.subr.bf16.mxu0 0
        %999 = vmatpush1.bf16.msra.mxu0 0
        %1000 = vmatprep.subr.bf16.mxu0 0
        %1001 = vmatpush1.bf16.msra.mxu0 0
        %1002 = vmatprep.subr.bf16.mxu0 0
        %1003 = vmatpush1.bf16.msra.mxu0 0
        %1004 = vmatprep.subr.bf16.mxu0 0
        %1005 = vmatpush1.bf16.msra.mxu0 0
        %1006 = vmatprep.subr.bf16.mxu0 0
        %1007 = vmatpush1.bf16.msra.mxu0 0
        %1008 = vmatprep.subr.bf16.mxu0 0
        %1009 = vmatpush1.bf16.msra.mxu0 0
        %1010 = vmatprep.subr.bf16.mxu0 0
        %1011 = vmatpush1.bf16.msra.mxu0 0
        %1012 = vmatprep.subr.bf16.mxu0 0
        %1013 = vmatpush1.bf16.msra.mxu0 0
        %1014 = vmatprep.subr.bf16.mxu0 0
        %1015 = vmatpush1.bf16.msra.mxu0 0
        %1016 = vmatprep.subr.bf16.mxu0 0
        %1017 = vmatpush1.bf16.msra.mxu0 0
        %1018 = vmatprep.subr.bf16.mxu0 0
        %1019 = vmatpush1.bf16.msra.mxu0 0
        %1020 = vmatprep.subr.bf16.mxu0 0
        %1021 = vmatpush1.bf16.msra.mxu0 0
        %1022 = vmatprep.mubr.bf16.mxu0 0
        %1023 = vmatmul.mubr.bf16.gmra.mrb[0].mxu0 %v271
        %v1024 = vpop.f32.mrb[0].mxu0
        %v1025 = vadd.f32 %v231, %v1024
        %v1026 = vpop.f32.mrb[0].mxu0
        %v1027 = vpop.f32.mrb[0].mxu0
        %v1028 = vadd.f32 %v236, %v1027
        %v1029 = vpop.f32.mrb[0].mxu0
        %1030 = vdwg.mxu0
        %v1031 = vmax.f32 %v1025, 0.0
        %v1032 = vmax.f32 %v1028, 0.0
        %v1033 = vpack.c.bf16 %v1032, %v1031
        %v1034 = vunpack.c.l.bf16 %v1033
        %v1035 = vunpack.c.h.bf16 %v1033
        %v1038 = vshrl.u32 %v1034, 16
        %v1039 = vshrl.u32 %v1035, 16
        %v1040 = vshll.u32 %v1038, 16
        %v1041 = vrot.slane %v1040, 4
        %v1042 = vor.u32 %v1038, %v1041
        %v1044 = vunpack.c.l.s4 1966171168
        %v1045 = vunpack.c.0.s8 %v1044
        %v1046 = vlaneseq
        %v1047 = vshrl.u32 %v1046, 7
        %v1048 = vsub.s32 %v1045, %v1047
        %v1049 = vrot.slane %v1042, %v1048
        %v1050 = vcombine.high %v1049, %v1049
        %v1052 = vunpack.c.l.s4 1966171168
        %v1053 = vunpack.c.0.s8 %v1052
        %v1054 = vlaneseq
        %v1055 = vshrl.u32 %v1054, 7
        %v1056 = vsub.s32 %v1053, %v1055
        %v1057 = vrot.slane %v1049, %v1056
        %v1059 = vunpack.c.l.s4 1966171168
        %v1060 = vunpack.c.0.s8 %v1059
        %v1061 = vlaneseq
        %v1062 = vshrl.u32 %v1061, 7
        %v1063 = vsub.s32 %v1060, %v1062
        %v1064 = vrot.slane %v1050, %v1063
        %v1065 = vcombine.high %v1057, %v1057
        %v1066 = vcombine.high %v1064, %v1064
        %1067 = vst.msk [vmem:[%s217 + $0xa] sm:$0x1] %vm354, %v1057
        %1068 = vst.msk [vmem:[%s217 + $0x2a] sm:$0x1] %vm354, %v1064
        %1069 = vst.msk [vmem:[%s217 + $0x4a] sm:$0x1] %vm354, %v1065
        %1070 = vst.msk [vmem:[%s217 + $0x6a] sm:$0x1] %vm354, %v1066
        %v1071 = vshll.u32 %v1039, 16
        %v1072 = vrot.slane %v1071, 4
        %v1073 = vor.u32 %v1039, %v1072
        %v1075 = vunpack.c.l.s4 1966171168
        %v1076 = vunpack.c.0.s8 %v1075
        %v1077 = vlaneseq
        %v1078 = vshrl.u32 %v1077, 7
        %v1079 = vsub.s32 %v1076, %v1078
        %v1080 = vrot.slane %v1073, %v1079
        %v1081 = vcombine.high %v1080, %v1080
        %v1083 = vunpack.c.l.s4 1966171168
        %v1084 = vunpack.c.0.s8 %v1083
        %v1085 = vlaneseq
        %v1086 = vshrl.u32 %v1085, 7
        %v1087 = vsub.s32 %v1084, %v1086
        %v1088 = vrot.slane %v1080, %v1087
        %v1090 = vunpack.c.l.s4 1966171168
        %v1091 = vunpack.c.0.s8 %v1090
        %v1092 = vlaneseq
        %v1093 = vshrl.u32 %v1092, 7
        %v1094 = vsub.s32 %v1091, %v1093
        %v1095 = vrot.slane %v1081, %v1094
        %v1096 = vcombine.high %v1088, %v1088
        %v1097 = vcombine.high %v1095, %v1095
        %1098 = vst.msk [vmem:[%s217 + $0xb] sm:$0x1] %vm354, %v1088
        %1099 = vst.msk [vmem:[%s217 + $0x2b] sm:$0x1] %vm354, %v1095
        %1100 = vst.msk [vmem:[%s217 + $0x4b] sm:$0x1] %vm354, %v1096
        %1101 = vst.msk [vmem:[%s217 + $0x6b] sm:$0x1] %vm354, %v1097
        %v1102 = vld [vmem:[%s181] sm:$0x8]
        %v1103 = vld [vmem:[%s181 + $0x8] sm:$0x8]
        %v1104 = vld [vmem:[%s181 + $0x10] sm:$0x8]
        %v1105 = vld [vmem:[%s181 + $0x18] sm:$0x8]
        %v1110 = vunpack.c.l.b16 %v1102
        %v1111 = vunpack.c.l.b16 %v1103
        %v1112 = vunpack.c.l.b16 %v1104
        %v1113 = vunpack.c.l.b16 %v1105
        %v1114 = vpack.c.b16 %v1110, %v1110
        %v1115 = vpack.c.b16 %v1111, %v1111
        %v1116 = vpack.c.b16 %v1112, %v1112
        %v1117 = vpack.c.b16 %v1113, %v1113
        %v1118 = vunpack.c.l.b16 %v1114
        %v1119 = vunpack.c.l.b16 %v1115
        %v1120 = vunpack.c.l.b16 %v1116
        %v1121 = vunpack.c.l.b16 %v1117
        %v1122 = vrot.slane %v1118, 6
        %v1123 = vrot.slane %v1119, 5
        %v1124 = vsel %vm260, %v1123, %v1122
        %v1125 = vrot.slane %v1120, 4
        %v1126 = vsel %vm263, %v1125, %v1124
        %v1127 = vrot.slane %v1121, 3
        %v1128 = vsel %vm266, %v1127, %v1126
        %v1129 = vpack.c.b16 %v1128, %v1128
        %v1131 = vsel %vm273, %v1129, 0
        %1133 = vmatprep.subr.bf16.mxu0 0
        %1134 = vmatpush1.bf16.msra.mxu0 %v1131
        %1135 = vmatprep.subr.bf16.mxu0 0
        %1136 = vmatpush1.bf16.msra.mxu0 0
        %1137 = vmatprep.subr.bf16.mxu0 0
        %1138 = vmatpush1.bf16.msra.mxu0 0
        %1139 = vmatprep.subr.bf16.mxu0 0
        %1140 = vmatpush1.bf16.msra.mxu0 0
        %1141 = vmatprep.subr.bf16.mxu0 0
        %1142 = vmatpush1.bf16.msra.mxu0 0
        %1143 = vmatprep.subr.bf16.mxu0 0
        %1144 = vmatpush1.bf16.msra.mxu0 0
        %1145 = vmatprep.subr.bf16.mxu0 0
        %1146 = vmatpush1.bf16.msra.mxu0 0
        %1147 = vmatprep.subr.bf16.mxu0 0
        %1148 = vmatpush1.bf16.msra.mxu0 0
        %1149 = vmatprep.subr.bf16.mxu0 0
        %1150 = vmatpush1.bf16.msra.mxu0 0
        %1151 = vmatprep.subr.bf16.mxu0 0
        %1152 = vmatpush1.bf16.msra.mxu0 0
        %1153 = vmatprep.subr.bf16.mxu0 0
        %1154 = vmatpush1.bf16.msra.mxu0 0
        %1155 = vmatprep.subr.bf16.mxu0 0
        %1156 = vmatpush1.bf16.msra.mxu0 0
        %1157 = vmatprep.subr.bf16.mxu0 0
        %1158 = vmatpush1.bf16.msra.mxu0 0
        %1159 = vmatprep.subr.bf16.mxu0 0
        %1160 = vmatpush1.bf16.msra.mxu0 0
        %1161 = vmatprep.subr.bf16.mxu0 0
        %1162 = vmatpush1.bf16.msra.mxu0 0
        %1163 = vmatprep.subr.bf16.mxu0 0
        %1164 = vmatpush1.bf16.msra.mxu0 0
        %1165 = vmatprep.mubr.bf16.mxu0 0
        %1166 = vmatmul.mubr.bf16.gmra.mrb[0].mxu0 %v271
        %v1167 = vpop.f32.mrb[0].mxu0
        %v1168 = vadd.f32 %v231, %v1167
        %v1169 = vpop.f32.mrb[0].mxu0
        %v1170 = vpop.f32.mrb[0].mxu0
        %v1171 = vadd.f32 %v236, %v1170
        %v1172 = vpop.f32.mrb[0].mxu0
        %1173 = vdwg.mxu0
        %v1174 = vmax.f32 %v1168, 0.0
        %v1175 = vmax.f32 %v1171, 0.0
        %v1176 = vpack.c.bf16 %v1175, %v1174
        %v1177 = vunpack.c.l.bf16 %v1176
        %v1178 = vunpack.c.h.bf16 %v1176
        %v1181 = vshrl.u32 %v1177, 16
        %v1182 = vshrl.u32 %v1178, 16
        %v1183 = vshll.u32 %v1181, 16
        %v1184 = vrot.slane %v1183, 4
        %v1185 = vor.u32 %v1181, %v1184
        %v1187 = vunpack.c.l.s4 1966171168
        %v1188 = vunpack.c.0.s8 %v1187
        %v1189 = vlaneseq
        %v1190 = vshrl.u32 %v1189, 7
        %v1191 = vsub.s32 %v1188, %v1190
        %v1192 = vrot.slane %v1185, %v1191
        %v1193 = vcombine.high %v1192, %v1192
        %v1195 = vunpack.c.l.s4 1966171168
        %v1196 = vunpack.c.0.s8 %v1195
        %v1197 = vlaneseq
        %v1198 = vshrl.u32 %v1197, 7
        %v1199 = vsub.s32 %v1196, %v1198
        %v1200 = vrot.slane %v1192, %v1199
        %v1202 = vunpack.c.l.s4 1966171168
        %v1203 = vunpack.c.0.s8 %v1202
        %v1204 = vlaneseq
        %v1205 = vshrl.u32 %v1204, 7
        %v1206 = vsub.s32 %v1203, %v1205
        %v1207 = vrot.slane %v1193, %v1206
        %v1208 = vcombine.high %v1200, %v1200
        %v1209 = vcombine.high %v1207, %v1207
        %1210 = vst.msk [vmem:[%s217 + $0xc] sm:$0x1] %vm354, %v1200
        %1211 = vst.msk [vmem:[%s217 + $0x2c] sm:$0x1] %vm354, %v1207
        %1212 = vst.msk [vmem:[%s217 + $0x4c] sm:$0x1] %vm354, %v1208
        %1213 = vst.msk [vmem:[%s217 + $0x6c] sm:$0x1] %vm354, %v1209
        %v1214 = vshll.u32 %v1182, 16
        %v1215 = vrot.slane %v1214, 4
        %v1216 = vor.u32 %v1182, %v1215
        %v1218 = vunpack.c.l.s4 1966171168
        %v1219 = vunpack.c.0.s8 %v1218
        %v1220 = vlaneseq
        %v1221 = vshrl.u32 %v1220, 7
        %v1222 = vsub.s32 %v1219, %v1221
        %v1223 = vrot.slane %v1216, %v1222
        %v1224 = vcombine.high %v1223, %v1223
        %v1226 = vunpack.c.l.s4 1966171168
        %v1227 = vunpack.c.0.s8 %v1226
        %v1228 = vlaneseq
        %v1229 = vshrl.u32 %v1228, 7
        %v1230 = vsub.s32 %v1227, %v1229
        %v1231 = vrot.slane %v1223, %v1230
        %v1233 = vunpack.c.l.s4 1966171168
        %v1234 = vunpack.c.0.s8 %v1233
        %v1235 = vlaneseq
        %v1236 = vshrl.u32 %v1235, 7
        %v1237 = vsub.s32 %v1234, %v1236
        %v1238 = vrot.slane %v1224, %v1237
        %v1239 = vcombine.high %v1231, %v1231
        %v1240 = vcombine.high %v1238, %v1238
        %1241 = vst.msk [vmem:[%s217 + $0xd] sm:$0x1] %vm354, %v1231
        %1242 = vst.msk [vmem:[%s217 + $0x2d] sm:$0x1] %vm354, %v1238
        %1243 = vst.msk [vmem:[%s217 + $0x4d] sm:$0x1] %vm354, %v1239
        %1244 = vst.msk [vmem:[%s217 + $0x6d] sm:$0x1] %vm354, %v1240
        %v1245 = vld [vmem:[%s181] sm:$0x8]
        %v1246 = vld [vmem:[%s181 + $0x8] sm:$0x8]
        %v1247 = vld [vmem:[%s181 + $0x10] sm:$0x8]
        %v1248 = vld [vmem:[%s181 + $0x18] sm:$0x8]
        %v1253 = vunpack.c.l.b16 %v1245
        %v1254 = vunpack.c.l.b16 %v1246
        %v1255 = vunpack.c.l.b16 %v1247
        %v1256 = vunpack.c.l.b16 %v1248
        %v1257 = vpack.c.b16 %v1253, %v1253
        %v1258 = vpack.c.b16 %v1254, %v1254
        %v1259 = vpack.c.b16 %v1255, %v1255
        %v1260 = vpack.c.b16 %v1256, %v1256
        %v1261 = vunpack.c.l.b16 %v1257
        %v1262 = vunpack.c.l.b16 %v1258
        %v1263 = vunpack.c.l.b16 %v1259
        %v1264 = vunpack.c.l.b16 %v1260
        %v1265 = vrot.slane %v1261, 7
        %v1266 = vrot.slane %v1262, 6
        %v1267 = vsel %vm260, %v1266, %v1265
        %v1268 = vrot.slane %v1263, 5
        %v1269 = vsel %vm263, %v1268, %v1267
        %v1270 = vrot.slane %v1264, 4
        %v1271 = vsel %vm266, %v1270, %v1269
        %v1272 = vpack.c.b16 %v1271, %v1271
        %v1274 = vsel %vm273, %v1272, 0
        %1276 = vmatprep.subr.bf16.mxu0 0
        %1277 = vmatpush1.bf16.msra.mxu0 %v1274
        %1278 = vmatprep.subr.bf16.mxu0 0
        %1279 = vmatpush1.bf16.msra.mxu0 0
        %1280 = vmatprep.subr.bf16.mxu0 0
        %1281 = vmatpush1.bf16.msra.mxu0 0
        %1282 = vmatprep.subr.bf16.mxu0 0
        %1283 = vmatpush1.bf16.msra.mxu0 0
        %1284 = vmatprep.subr.bf16.mxu0 0
        %1285 = vmatpush1.bf16.msra.mxu0 0
        %1286 = vmatprep.subr.bf16.mxu0 0
        %1287 = vmatpush1.bf16.msra.mxu0 0
        %1288 = vmatprep.subr.bf16.mxu0 0
        %1289 = vmatpush1.bf16.msra.mxu0 0
        %1290 = vmatprep.subr.bf16.mxu0 0
        %1291 = vmatpush1.bf16.msra.mxu0 0
        %1292 = vmatprep.subr.bf16.mxu0 0
        %1293 = vmatpush1.bf16.msra.mxu0 0
        %1294 = vmatprep.subr.bf16.mxu0 0
        %1295 = vmatpush1.bf16.msra.mxu0 0
        %1296 = vmatprep.subr.bf16.mxu0 0
        %1297 = vmatpush1.bf16.msra.mxu0 0
        %1298 = vmatprep.subr.bf16.mxu0 0
        %1299 = vmatpush1.bf16.msra.mxu0 0
        %1300 = vmatprep.subr.bf16.mxu0 0
        %1301 = vmatpush1.bf16.msra.mxu0 0
        %1302 = vmatprep.subr.bf16.mxu0 0
        %1303 = vmatpush1.bf16.msra.mxu0 0
        %1304 = vmatprep.subr.bf16.mxu0 0
        %1305 = vmatpush1.bf16.msra.mxu0 0
        %1306 = vmatprep.subr.bf16.mxu0 0
        %1307 = vmatpush1.bf16.msra.mxu0 0
        %1308 = vmatprep.mubr.bf16.mxu0 0
        %1309 = vmatmul.mubr.bf16.gmra.mrb[0].mxu0 %v271
        %v1310 = vpop.f32.mrb[0].mxu0
        %v1311 = vadd.f32 %v231, %v1310
        %v1312 = vpop.f32.mrb[0].mxu0
        %v1313 = vpop.f32.mrb[0].mxu0
        %v1314 = vadd.f32 %v236, %v1313
        %v1315 = vpop.f32.mrb[0].mxu0
        %1316 = vdwg.mxu0
        %v1317 = vmax.f32 %v1311, 0.0
        %v1318 = vmax.f32 %v1314, 0.0
        %v1319 = vpack.c.bf16 %v1318, %v1317
        %v1320 = vunpack.c.l.bf16 %v1319
        %v1321 = vunpack.c.h.bf16 %v1319
        %v1324 = vshrl.u32 %v1320, 16
        %v1325 = vshrl.u32 %v1321, 16
        %v1326 = vshll.u32 %v1324, 16
        %v1327 = vrot.slane %v1326, 4
        %v1328 = vor.u32 %v1324, %v1327
        %v1330 = vunpack.c.l.s4 1966171168
        %v1331 = vunpack.c.0.s8 %v1330
        %v1332 = vlaneseq
        %v1333 = vshrl.u32 %v1332, 7
        %v1334 = vsub.s32 %v1331, %v1333
        %v1335 = vrot.slane %v1328, %v1334
        %v1336 = vcombine.high %v1335, %v1335
        %v1338 = vunpack.c.l.s4 1966171168
        %v1339 = vunpack.c.0.s8 %v1338
        %v1340 = vlaneseq
        %v1341 = vshrl.u32 %v1340, 7
        %v1342 = vsub.s32 %v1339, %v1341
        %v1343 = vrot.slane %v1335, %v1342
        %v1345 = vunpack.c.l.s4 1966171168
        %v1346 = vunpack.c.0.s8 %v1345
        %v1347 = vlaneseq
        %v1348 = vshrl.u32 %v1347, 7
        %v1349 = vsub.s32 %v1346, %v1348
        %v1350 = vrot.slane %v1336, %v1349
        %v1351 = vcombine.high %v1343, %v1343
        %v1352 = vcombine.high %v1350, %v1350
        %1353 = vst.msk [vmem:[%s217 + $0xe] sm:$0x1] %vm354, %v1343
        %1354 = vst.msk [vmem:[%s217 + $0x2e] sm:$0x1] %vm354, %v1350
        %1355 = vst.msk [vmem:[%s217 + $0x4e] sm:$0x1] %vm354, %v1351
        %1356 = vst.msk [vmem:[%s217 + $0x6e] sm:$0x1] %vm354, %v1352
        %v1357 = vshll.u32 %v1325, 16
        %v1358 = vrot.slane %v1357, 4
        %v1359 = vor.u32 %v1325, %v1358
        %v1361 = vunpack.c.l.s4 1966171168
        %v1362 = vunpack.c.0.s8 %v1361
        %v1363 = vlaneseq
        %v1364 = vshrl.u32 %v1363, 7
        %v1365 = vsub.s32 %v1362, %v1364
        %v1366 = vrot.slane %v1359, %v1365
        %v1367 = vcombine.high %v1366, %v1366
        %v1369 = vunpack.c.l.s4 1966171168
        %v1370 = vunpack.c.0.s8 %v1369
        %v1371 = vlaneseq
        %v1372 = vshrl.u32 %v1371, 7
        %v1373 = vsub.s32 %v1370, %v1372
        %v1374 = vrot.slane %v1366, %v1373
        %v1376 = vunpack.c.l.s4 1966171168
        %v1377 = vunpack.c.0.s8 %v1376
        %v1378 = vlaneseq
        %v1379 = vshrl.u32 %v1378, 7
        %v1380 = vsub.s32 %v1377, %v1379
        %v1381 = vrot.slane %v1367, %v1380
        %v1382 = vcombine.high %v1374, %v1374
        %v1383 = vcombine.high %v1381, %v1381
        %1384 = vst.msk [vmem:[%s217 + $0xf] sm:$0x1] %vm354, %v1374
        %1385 = vst.msk [vmem:[%s217 + $0x2f] sm:$0x1] %vm354, %v1381
        %1386 = vst.msk [vmem:[%s217 + $0x4f] sm:$0x1] %vm354, %v1382
        %1387 = vst.msk [vmem:[%s217 + $0x6f] sm:$0x1] %vm354, %v1383
        %v1388 = vld [vmem:[%s181 + $0x4] sm:$0x1]
        %v1389 = vld [vmem:[%s181 + $0xc] sm:$0x1]
        %v1390 = vld [vmem:[%s181 + $0x14] sm:$0x1]
        %v1391 = vld [vmem:[%s181 + $0x1c] sm:$0x1]
        %v1396 = vunpack.c.l.b16 %v1388
        %v1397 = vunpack.c.l.b16 %v1389
        %v1398 = vunpack.c.l.b16 %v1390
        %v1399 = vunpack.c.l.b16 %v1391
        %v1400 = vpack.c.b16 %v1396, %v1396
        %v1401 = vpack.c.b16 %v1397, %v1397
        %v1402 = vpack.c.b16 %v1398, %v1398
        %v1403 = vpack.c.b16 %v1399, %v1399
        %v1404 = vunpack.c.l.b16 %v1400
        %v1405 = vunpack.c.l.b16 %v1401
        %v1406 = vunpack.c.l.b16 %v1402
        %v1407 = vunpack.c.l.b16 %v1403
        %v1408 = vrot.slane %v1405, 7
        %v1409 = vsel %vm260, %v1408, %v1404
        %v1410 = vrot.slane %v1406, 6
        %v1411 = vsel %vm263, %v1410, %v1409
        %v1412 = vrot.slane %v1407, 5
        %v1413 = vsel %vm266, %v1412, %v1411
        %v1414 = vpack.c.b16 %v1413, %v1413
        %v1416 = vsel %vm273, %v1414, 0
        %1418 = vmatprep.subr.bf16.mxu0 0
        %1419 = vmatpush1.bf16.msra.mxu0 %v1416
        %1420 = vmatprep.subr.bf16.mxu0 0
        %1421 = vmatpush1.bf16.msra.mxu0 0
        %1422 = vmatprep.subr.bf16.mxu0 0
        %1423 = vmatpush1.bf16.msra.mxu0 0
        %1424 = vmatprep.subr.bf16.mxu0 0
        %1425 = vmatpush1.bf16.msra.mxu0 0
        %1426 = vmatprep.subr.bf16.mxu0 0
        %1427 = vmatpush1.bf16.msra.mxu0 0
        %1428 = vmatprep.subr.bf16.mxu0 0
        %1429 = vmatpush1.bf16.msra.mxu0 0
        %1430 = vmatprep.subr.bf16.mxu0 0
        %1431 = vmatpush1.bf16.msra.mxu0 0
        %1432 = vmatprep.subr.bf16.mxu0 0
        %1433 = vmatpush1.bf16.msra.mxu0 0
        %1434 = vmatprep.subr.bf16.mxu0 0
        %1435 = vmatpush1.bf16.msra.mxu0 0
        %1436 = vmatprep.subr.bf16.mxu0 0
        %1437 = vmatpush1.bf16.msra.mxu0 0
        %1438 = vmatprep.subr.bf16.mxu0 0
        %1439 = vmatpush1.bf16.msra.mxu0 0
        %1440 = vmatprep.subr.bf16.mxu0 0
        %1441 = vmatpush1.bf16.msra.mxu0 0
        %1442 = vmatprep.subr.bf16.mxu0 0
        %1443 = vmatpush1.bf16.msra.mxu0 0
        %1444 = vmatprep.subr.bf16.mxu0 0
        %1445 = vmatpush1.bf16.msra.mxu0 0
        %1446 = vmatprep.subr.bf16.mxu0 0
        %1447 = vmatpush1.bf16.msra.mxu0 0
        %1448 = vmatprep.subr.bf16.mxu0 0
        %1449 = vmatpush1.bf16.msra.mxu0 0
        %1450 = vmatprep.mubr.bf16.mxu0 0
        %1451 = vmatmul.mubr.bf16.gmra.mrb[0].mxu0 %v271
        %v1452 = vpop.f32.mrb[0].mxu0
        %v1453 = vadd.f32 %v231, %v1452
        %v1454 = vpop.f32.mrb[0].mxu0
        %v1455 = vpop.f32.mrb[0].mxu0
        %v1456 = vadd.f32 %v236, %v1455
        %v1457 = vpop.f32.mrb[0].mxu0
        %1458 = vdwg.mxu0
        %v1459 = vmax.f32 %v1453, 0.0
        %v1460 = vmax.f32 %v1456, 0.0
        %v1461 = vpack.c.bf16 %v1460, %v1459
        %v1462 = vunpack.c.l.bf16 %v1461
        %v1463 = vunpack.c.h.bf16 %v1461
        %v1466 = vshrl.u32 %v1462, 16
        %v1467 = vshrl.u32 %v1463, 16
        %v1468 = vshll.u32 %v1466, 16
        %v1469 = vrot.slane %v1468, 4
        %v1470 = vor.u32 %v1466, %v1469
        %v1472 = vunpack.c.l.s4 1966171168
        %v1473 = vunpack.c.0.s8 %v1472
        %v1474 = vlaneseq
        %v1475 = vshrl.u32 %v1474, 7
        %v1476 = vsub.s32 %v1473, %v1475
        %v1477 = vrot.slane %v1470, %v1476
        %v1478 = vcombine.high %v1477, %v1477
        %v1480 = vunpack.c.l.s4 1966171168
        %v1481 = vunpack.c.0.s8 %v1480
        %v1482 = vlaneseq
        %v1483 = vshrl.u32 %v1482, 7
        %v1484 = vsub.s32 %v1481, %v1483
        %v1485 = vrot.slane %v1477, %v1484
        %v1487 = vunpack.c.l.s4 1966171168
        %v1488 = vunpack.c.0.s8 %v1487
        %v1489 = vlaneseq
        %v1490 = vshrl.u32 %v1489, 7
        %v1491 = vsub.s32 %v1488, %v1490
        %v1492 = vrot.slane %v1478, %v1491
        %v1493 = vcombine.high %v1485, %v1485
        %v1494 = vcombine.high %v1492, %v1492
        %1495 = vst.msk [vmem:[%s217 + $0x10] sm:$0x1] %vm354, %v1485
        %1496 = vst.msk [vmem:[%s217 + $0x30] sm:$0x1] %vm354, %v1492
        %1497 = vst.msk [vmem:[%s217 + $0x50] sm:$0x1] %vm354, %v1493
        %1498 = vst.msk [vmem:[%s217 + $0x70] sm:$0x1] %vm354, %v1494
        %v1499 = vshll.u32 %v1467, 16
        %v1500 = vrot.slane %v1499, 4
        %v1501 = vor.u32 %v1467, %v1500
        %v1503 = vunpack.c.l.s4 1966171168
        %v1504 = vunpack.c.0.s8 %v1503
        %v1505 = vlaneseq
        %v1506 = vshrl.u32 %v1505, 7
        %v1507 = vsub.s32 %v1504, %v1506
        %v1508 = vrot.slane %v1501, %v1507
        %v1509 = vcombine.high %v1508, %v1508
        %v1511 = vunpack.c.l.s4 1966171168
        %v1512 = vunpack.c.0.s8 %v1511
        %v1513 = vlaneseq
        %v1514 = vshrl.u32 %v1513, 7
        %v1515 = vsub.s32 %v1512, %v1514
        %v1516 = vrot.slane %v1508, %v1515
        %v1518 = vunpack.c.l.s4 1966171168
        %v1519 = vunpack.c.0.s8 %v1518
        %v1520 = vlaneseq
        %v1521 = vshrl.u32 %v1520, 7
        %v1522 = vsub.s32 %v1519, %v1521
        %v1523 = vrot.slane %v1509, %v1522
        %v1524 = vcombine.high %v1516, %v1516
        %v1525 = vcombine.high %v1523, %v1523
        %1526 = vst.msk [vmem:[%s217 + $0x11] sm:$0x1] %vm354, %v1516
        %1527 = vst.msk [vmem:[%s217 + $0x31] sm:$0x1] %vm354, %v1523
        %1528 = vst.msk [vmem:[%s217 + $0x51] sm:$0x1] %vm354, %v1524
        %1529 = vst.msk [vmem:[%s217 + $0x71] sm:$0x1] %vm354, %v1525
        %v1530 = vld [vmem:[%s181 + $0x4] sm:$0x1]
        %v1531 = vld [vmem:[%s181 + $0xc] sm:$0x1]
        %v1532 = vld [vmem:[%s181 + $0x14] sm:$0x1]
        %v1533 = vld [vmem:[%s181 + $0x1c] sm:$0x1]
        %v1538 = vunpack.c.l.b16 %v1530
        %v1539 = vunpack.c.l.b16 %v1531
        %v1540 = vunpack.c.l.b16 %v1532
        %v1541 = vunpack.c.l.b16 %v1533
        %v1542 = vpack.c.b16 %v1538, %v1538
        %v1543 = vpack.c.b16 %v1539, %v1539
        %v1544 = vpack.c.b16 %v1540, %v1540
        %v1545 = vpack.c.b16 %v1541, %v1541
        %v1546 = vunpack.c.l.b16 %v1542
        %v1547 = vunpack.c.l.b16 %v1543
        %v1548 = vunpack.c.l.b16 %v1544
        %v1549 = vunpack.c.l.b16 %v1545
        %v1550 = vrot.slane %v1546, 1
        %v1551 = vsel %vm260, %v1547, %v1550
        %v1552 = vrot.slane %v1548, 7
        %v1553 = vsel %vm263, %v1552, %v1551
        %v1554 = vrot.slane %v1549, 6
        %v1555 = vsel %vm266, %v1554, %v1553
        %v1556 = vpack.c.b16 %v1555, %v1555
        %v1558 = vsel %vm273, %v1556, 0
        %1560 = vmatprep.subr.bf16.mxu0 0
        %1561 = vmatpush1.bf16.msra.mxu0 %v1558
        %1562 = vmatprep.subr.bf16.mxu0 0
        %1563 = vmatpush1.bf16.msra.mxu0 0
        %1564 = vmatprep.subr.bf16.mxu0 0
        %1565 = vmatpush1.bf16.msra.mxu0 0
        %1566 = vmatprep.subr.bf16.mxu0 0
        %1567 = vmatpush1.bf16.msra.mxu0 0
        %1568 = vmatprep.subr.bf16.mxu0 0
        %1569 = vmatpush1.bf16.msra.mxu0 0
        %1570 = vmatprep.subr.bf16.mxu0 0
        %1571 = vmatpush1.bf16.msra.mxu0 0
        %1572 = vmatprep.subr.bf16.mxu0 0
        %1573 = vmatpush1.bf16.msra.mxu0 0
        %1574 = vmatprep.subr.bf16.mxu0 0
        %1575 = vmatpush1.bf16.msra.mxu0 0
        %1576 = vmatprep.subr.bf16.mxu0 0
        %1577 = vmatpush1.bf16.msra.mxu0 0
        %1578 = vmatprep.subr.bf16.mxu0 0
        %1579 = vmatpush1.bf16.msra.mxu0 0
        %1580 = vmatprep.subr.bf16.mxu0 0
        %1581 = vmatpush1.bf16.msra.mxu0 0
        %1582 = vmatprep.subr.bf16.mxu0 0
        %1583 = vmatpush1.bf16.msra.mxu0 0
        %1584 = vmatprep.subr.bf16.mxu0 0
        %1585 = vmatpush1.bf16.msra.mxu0 0
        %1586 = vmatprep.subr.bf16.mxu0 0
        %1587 = vmatpush1.bf16.msra.mxu0 0
        %1588 = vmatprep.subr.bf16.mxu0 0
        %1589 = vmatpush1.bf16.msra.mxu0 0
        %1590 = vmatprep.subr.bf16.mxu0 0
        %1591 = vmatpush1.bf16.msra.mxu0 0
        %1592 = vmatprep.mubr.bf16.mxu0 0
        %1593 = vmatmul.mubr.bf16.gmra.mrb[0].mxu0 %v271
        %v1594 = vpop.f32.mrb[0].mxu0
        %v1595 = vadd.f32 %v231, %v1594
        %v1596 = vpop.f32.mrb[0].mxu0
        %v1597 = vpop.f32.mrb[0].mxu0
        %v1598 = vadd.f32 %v236, %v1597
        %v1599 = vpop.f32.mrb[0].mxu0
        %1600 = vdwg.mxu0
        %v1601 = vmax.f32 %v1595, 0.0
        %v1602 = vmax.f32 %v1598, 0.0
        %v1603 = vpack.c.bf16 %v1602, %v1601
        %v1604 = vunpack.c.l.bf16 %v1603
        %v1605 = vunpack.c.h.bf16 %v1603
        %v1608 = vshrl.u32 %v1604, 16
        %v1609 = vshrl.u32 %v1605, 16
        %v1610 = vshll.u32 %v1608, 16
        %v1611 = vrot.slane %v1610, 4
        %v1612 = vor.u32 %v1608, %v1611
        %v1614 = vunpack.c.l.s4 1966171168
        %v1615 = vunpack.c.0.s8 %v1614
        %v1616 = vlaneseq
        %v1617 = vshrl.u32 %v1616, 7
        %v1618 = vsub.s32 %v1615, %v1617
        %v1619 = vrot.slane %v1612, %v1618
        %v1620 = vcombine.high %v1619, %v1619
        %v1622 = vunpack.c.l.s4 1966171168
        %v1623 = vunpack.c.0.s8 %v1622
        %v1624 = vlaneseq
        %v1625 = vshrl.u32 %v1624, 7
        %v1626 = vsub.s32 %v1623, %v1625
        %v1627 = vrot.slane %v1619, %v1626
        %v1629 = vunpack.c.l.s4 1966171168
        %v1630 = vunpack.c.0.s8 %v1629
        %v1631 = vlaneseq
        %v1632 = vshrl.u32 %v1631, 7
        %v1633 = vsub.s32 %v1630, %v1632
        %v1634 = vrot.slane %v1620, %v1633
        %v1635 = vcombine.high %v1627, %v1627
        %v1636 = vcombine.high %v1634, %v1634
        %1637 = vst.msk [vmem:[%s217 + $0x12] sm:$0x1] %vm354, %v1627
        %1638 = vst.msk [vmem:[%s217 + $0x32] sm:$0x1] %vm354, %v1634
        %1639 = vst.msk [vmem:[%s217 + $0x52] sm:$0x1] %vm354, %v1635
        %1640 = vst.msk [vmem:[%s217 + $0x72] sm:$0x1] %vm354, %v1636
        %v1641 = vshll.u32 %v1609, 16
        %v1642 = vrot.slane %v1641, 4
        %v1643 = vor.u32 %v1609, %v1642
        %v1645 = vunpack.c.l.s4 1966171168
        %v1646 = vunpack.c.0.s8 %v1645
        %v1647 = vlaneseq
        %v1648 = vshrl.u32 %v1647, 7
        %v1649 = vsub.s32 %v1646, %v1648
        %v1650 = vrot.slane %v1643, %v1649
        %v1651 = vcombine.high %v1650, %v1650
        %v1653 = vunpack.c.l.s4 1966171168
        %v1654 = vunpack.c.0.s8 %v1653
        %v1655 = vlaneseq
        %v1656 = vshrl.u32 %v1655, 7
        %v1657 = vsub.s32 %v1654, %v1656
        %v1658 = vrot.slane %v1650, %v1657
        %v1660 = vunpack.c.l.s4 1966171168
        %v1661 = vunpack.c.0.s8 %v1660
        %v1662 = vlaneseq
        %v1663 = vshrl.u32 %v1662, 7
        %v1664 = vsub.s32 %v1661, %v1663
        %v1665 = vrot.slane %v1651, %v1664
        %v1666 = vcombine.high %v1658, %v1658
        %v1667 = vcombine.high %v1665, %v1665
        %1668 = vst.msk [vmem:[%s217 + $0x13] sm:$0x1] %vm354, %v1658
        %1669 = vst.msk [vmem:[%s217 + $0x33] sm:$0x1] %vm354, %v1665
        %1670 = vst.msk [vmem:[%s217 + $0x53] sm:$0x1] %vm354, %v1666
        %1671 = vst.msk [vmem:[%s217 + $0x73] sm:$0x1] %vm354, %v1667
        %v1672 = vld [vmem:[%s181 + $0x4] sm:$0x2]
        %v1673 = vld [vmem:[%s181 + $0xc] sm:$0x2]
        %v1674 = vld [vmem:[%s181 + $0x14] sm:$0x2]
        %v1675 = vld [vmem:[%s181 + $0x1c] sm:$0x2]
        %v1680 = vunpack.c.l.b16 %v1672
        %v1681 = vunpack.c.l.b16 %v1673
        %v1682 = vunpack.c.l.b16 %v1674
        %v1683 = vunpack.c.l.b16 %v1675
        %v1684 = vpack.c.b16 %v1680, %v1680
        %v1685 = vpack.c.b16 %v1681, %v1681
        %v1686 = vpack.c.b16 %v1682, %v1682
        %v1687 = vpack.c.b16 %v1683, %v1683
        %v1688 = vunpack.c.l.b16 %v1684
        %v1689 = vunpack.c.l.b16 %v1685
        %v1690 = vunpack.c.l.b16 %v1686
        %v1691 = vunpack.c.l.b16 %v1687
        %v1692 = vrot.slane %v1688, 2
        %v1693 = vrot.slane %v1689, 1
        %v1694 = vsel %vm260, %v1693, %v1692
        %v1695 = vsel %vm263, %v1690, %v1694
        %v1696 = vrot.slane %v1691, 7
        %v1697 = vsel %vm266, %v1696, %v1695
        %v1698 = vpack.c.b16 %v1697, %v1697
        %v1700 = vsel %vm273, %v1698, 0
        %1702 = vmatprep.subr.bf16.mxu0 0
        %1703 = vmatpush1.bf16.msra.mxu0 %v1700
        %1704 = vmatprep.subr.bf16.mxu0 0
        %1705 = vmatpush1.bf16.msra.mxu0 0
        %1706 = vmatprep.subr.bf16.mxu0 0
        %1707 = vmatpush1.bf16.msra.mxu0 0
        %1708 = vmatprep.subr.bf16.mxu0 0
        %1709 = vmatpush1.bf16.msra.mxu0 0
        %1710 = vmatprep.subr.bf16.mxu0 0
        %1711 = vmatpush1.bf16.msra.mxu0 0
        %1712 = vmatprep.subr.bf16.mxu0 0
        %1713 = vmatpush1.bf16.msra.mxu0 0
        %1714 = vmatprep.subr.bf16.mxu0 0
        %1715 = vmatpush1.bf16.msra.mxu0 0
        %1716 = vmatprep.subr.bf16.mxu0 0
        %1717 = vmatpush1.bf16.msra.mxu0 0
        %1718 = vmatprep.subr.bf16.mxu0 0
        %1719 = vmatpush1.bf16.msra.mxu0 0
        %1720 = vmatprep.subr.bf16.mxu0 0
        %1721 = vmatpush1.bf16.msra.mxu0 0
        %1722 = vmatprep.subr.bf16.mxu0 0
        %1723 = vmatpush1.bf16.msra.mxu0 0
        %1724 = vmatprep.subr.bf16.mxu0 0
        %1725 = vmatpush1.bf16.msra.mxu0 0
        %1726 = vmatprep.subr.bf16.mxu0 0
        %1727 = vmatpush1.bf16.msra.mxu0 0
        %1728 = vmatprep.subr.bf16.mxu0 0
        %1729 = vmatpush1.bf16.msra.mxu0 0
        %1730 = vmatprep.subr.bf16.mxu0 0
        %1731 = vmatpush1.bf16.msra.mxu0 0
        %1732 = vmatprep.subr.bf16.mxu0 0
        %1733 = vmatpush1.bf16.msra.mxu0 0
        %1734 = vmatprep.mubr.bf16.mxu0 0
        %1735 = vmatmul.mubr.bf16.gmra.mrb[0].mxu0 %v271
        %v1736 = vpop.f32.mrb[0].mxu0
        %v1737 = vadd.f32 %v231, %v1736
        %v1738 = vpop.f32.mrb[0].mxu0
        %v1739 = vpop.f32.mrb[0].mxu0
        %v1740 = vadd.f32 %v236, %v1739
        %v1741 = vpop.f32.mrb[0].mxu0
        %1742 = vdwg.mxu0
        %v1743 = vmax.f32 %v1737, 0.0
        %v1744 = vmax.f32 %v1740, 0.0
        %v1745 = vpack.c.bf16 %v1744, %v1743
        %v1746 = vunpack.c.l.bf16 %v1745
        %v1747 = vunpack.c.h.bf16 %v1745
        %v1750 = vshrl.u32 %v1746, 16
        %v1751 = vshrl.u32 %v1747, 16
        %v1752 = vshll.u32 %v1750, 16
        %v1753 = vrot.slane %v1752, 4
        %v1754 = vor.u32 %v1750, %v1753
        %v1756 = vunpack.c.l.s4 1966171168
        %v1757 = vunpack.c.0.s8 %v1756
        %v1758 = vlaneseq
        %v1759 = vshrl.u32 %v1758, 7
        %v1760 = vsub.s32 %v1757, %v1759
        %v1761 = vrot.slane %v1754, %v1760
        %v1762 = vcombine.high %v1761, %v1761
        %v1764 = vunpack.c.l.s4 1966171168
        %v1765 = vunpack.c.0.s8 %v1764
        %v1766 = vlaneseq
        %v1767 = vshrl.u32 %v1766, 7
        %v1768 = vsub.s32 %v1765, %v1767
        %v1769 = vrot.slane %v1761, %v1768
        %v1771 = vunpack.c.l.s4 1966171168
        %v1772 = vunpack.c.0.s8 %v1771
        %v1773 = vlaneseq
        %v1774 = vshrl.u32 %v1773, 7
        %v1775 = vsub.s32 %v1772, %v1774
        %v1776 = vrot.slane %v1762, %v1775
        %v1777 = vcombine.high %v1769, %v1769
        %v1778 = vcombine.high %v1776, %v1776
        %1779 = vst.msk [vmem:[%s217 + $0x14] sm:$0x1] %vm354, %v1769
        %1780 = vst.msk [vmem:[%s217 + $0x34] sm:$0x1] %vm354, %v1776
        %1781 = vst.msk [vmem:[%s217 + $0x54] sm:$0x1] %vm354, %v1777
        %1782 = vst.msk [vmem:[%s217 + $0x74] sm:$0x1] %vm354, %v1778
        %v1783 = vshll.u32 %v1751, 16
        %v1784 = vrot.slane %v1783, 4
        %v1785 = vor.u32 %v1751, %v1784
        %v1787 = vunpack.c.l.s4 1966171168
        %v1788 = vunpack.c.0.s8 %v1787
        %v1789 = vlaneseq
        %v1790 = vshrl.u32 %v1789, 7
        %v1791 = vsub.s32 %v1788, %v1790
        %v1792 = vrot.slane %v1785, %v1791
        %v1793 = vcombine.high %v1792, %v1792
        %v1795 = vunpack.c.l.s4 1966171168
        %v1796 = vunpack.c.0.s8 %v1795
        %v1797 = vlaneseq
        %v1798 = vshrl.u32 %v1797, 7
        %v1799 = vsub.s32 %v1796, %v1798
        %v1800 = vrot.slane %v1792, %v1799
        %v1802 = vunpack.c.l.s4 1966171168
        %v1803 = vunpack.c.0.s8 %v1802
        %v1804 = vlaneseq
        %v1805 = vshrl.u32 %v1804, 7
        %v1806 = vsub.s32 %v1803, %v1805
        %v1807 = vrot.slane %v1793, %v1806
        %v1808 = vcombine.high %v1800, %v1800
        %v1809 = vcombine.high %v1807, %v1807
        %1810 = vst.msk [vmem:[%s217 + $0x15] sm:$0x1] %vm354, %v1800
        %1811 = vst.msk [vmem:[%s217 + $0x35] sm:$0x1] %vm354, %v1807
        %1812 = vst.msk [vmem:[%s217 + $0x55] sm:$0x1] %vm354, %v1808
        %1813 = vst.msk [vmem:[%s217 + $0x75] sm:$0x1] %vm354, %v1809
        %v1814 = vld [vmem:[%s181 + $0x4] sm:$0x2]
        %v1815 = vld [vmem:[%s181 + $0xc] sm:$0x2]
        %v1816 = vld [vmem:[%s181 + $0x14] sm:$0x2]
        %v1817 = vld [vmem:[%s181 + $0x1c] sm:$0x2]
        %v1822 = vunpack.c.l.b16 %v1814
        %v1823 = vunpack.c.l.b16 %v1815
        %v1824 = vunpack.c.l.b16 %v1816
        %v1825 = vunpack.c.l.b16 %v1817
        %v1826 = vpack.c.b16 %v1822, %v1822
        %v1827 = vpack.c.b16 %v1823, %v1823
        %v1828 = vpack.c.b16 %v1824, %v1824
        %v1829 = vpack.c.b16 %v1825, %v1825
        %v1830 = vunpack.c.l.b16 %v1826
        %v1831 = vunpack.c.l.b16 %v1827
        %v1832 = vunpack.c.l.b16 %v1828
        %v1833 = vunpack.c.l.b16 %v1829
        %v1834 = vrot.slane %v1830, 3
        %v1835 = vrot.slane %v1831, 2
        %v1836 = vsel %vm260, %v1835, %v1834
        %v1837 = vrot.slane %v1832, 1
        %v1838 = vsel %vm263, %v1837, %v1836
        %v1839 = vsel %vm266, %v1833, %v1838
        %v1840 = vpack.c.b16 %v1839, %v1839
        %v1842 = vsel %vm273, %v1840, 0
        %1844 = vmatprep.subr.bf16.mxu0 0
        %1845 = vmatpush1.bf16.msra.mxu0 %v1842
        %1846 = vmatprep.subr.bf16.mxu0 0
        %1847 = vmatpush1.bf16.msra.mxu0 0
        %1848 = vmatprep.subr.bf16.mxu0 0
        %1849 = vmatpush1.bf16.msra.mxu0 0
        %1850 = vmatprep.subr.bf16.mxu0 0
        %1851 = vmatpush1.bf16.msra.mxu0 0
        %1852 = vmatprep.subr.bf16.mxu0 0
        %1853 = vmatpush1.bf16.msra.mxu0 0
        %1854 = vmatprep.subr.bf16.mxu0 0
        %1855 = vmatpush1.bf16.msra.mxu0 0
        %1856 = vmatprep.subr.bf16.mxu0 0
        %1857 = vmatpush1.bf16.msra.mxu0 0
        %1858 = vmatprep.subr.bf16.mxu0 0
        %1859 = vmatpush1.bf16.msra.mxu0 0
        %1860 = vmatprep.subr.bf16.mxu0 0
        %1861 = vmatpush1.bf16.msra.mxu0 0
        %1862 = vmatprep.subr.bf16.mxu0 0
        %1863 = vmatpush1.bf16.msra.mxu0 0
        %1864 = vmatprep.subr.bf16.mxu0 0
        %1865 = vmatpush1.bf16.msra.mxu0 0
        %1866 = vmatprep.subr.bf16.mxu0 0
        %1867 = vmatpush1.bf16.msra.mxu0 0
        %1868 = vmatprep.subr.bf16.mxu0 0
        %1869 = vmatpush1.bf16.msra.mxu0 0
        %1870 = vmatprep.subr.bf16.mxu0 0
        %1871 = vmatpush1.bf16.msra.mxu0 0
        %1872 = vmatprep.subr.bf16.mxu0 0
        %1873 = vmatpush1.bf16.msra.mxu0 0
        %1874 = vmatprep.subr.bf16.mxu0 0
        %1875 = vmatpush1.bf16.msra.mxu0 0
        %1876 = vmatprep.mubr.bf16.mxu0 0
        %1877 = vmatmul.mubr.bf16.gmra.mrb[0].mxu0 %v271
        %v1878 = vpop.f32.mrb[0].mxu0
        %v1879 = vadd.f32 %v231, %v1878
        %v1880 = vpop.f32.mrb[0].mxu0
        %v1881 = vpop.f32.mrb[0].mxu0
        %v1882 = vadd.f32 %v236, %v1881
        %v1883 = vpop.f32.mrb[0].mxu0
        %1884 = vdwg.mxu0
        %v1885 = vmax.f32 %v1879, 0.0
        %v1886 = vmax.f32 %v1882, 0.0
        %v1887 = vpack.c.bf16 %v1886, %v1885
        %v1888 = vunpack.c.l.bf16 %v1887
        %v1889 = vunpack.c.h.bf16 %v1887
        %v1892 = vshrl.u32 %v1888, 16
        %v1893 = vshrl.u32 %v1889, 16
        %v1894 = vshll.u32 %v1892, 16
        %v1895 = vrot.slane %v1894, 4
        %v1896 = vor.u32 %v1892, %v1895
        %v1898 = vunpack.c.l.s4 1966171168
        %v1899 = vunpack.c.0.s8 %v1898
        %v1900 = vlaneseq
        %v1901 = vshrl.u32 %v1900, 7
        %v1902 = vsub.s32 %v1899, %v1901
        %v1903 = vrot.slane %v1896, %v1902
        %v1904 = vcombine.high %v1903, %v1903
        %v1906 = vunpack.c.l.s4 1966171168
        %v1907 = vunpack.c.0.s8 %v1906
        %v1908 = vlaneseq
        %v1909 = vshrl.u32 %v1908, 7
        %v1910 = vsub.s32 %v1907, %v1909
        %v1911 = vrot.slane %v1903, %v1910
        %v1913 = vunpack.c.l.s4 1966171168
        %v1914 = vunpack.c.0.s8 %v1913
        %v1915 = vlaneseq
        %v1916 = vshrl.u32 %v1915, 7
        %v1917 = vsub.s32 %v1914, %v1916
        %v1918 = vrot.slane %v1904, %v1917
        %v1919 = vcombine.high %v1911, %v1911
        %v1920 = vcombine.high %v1918, %v1918
        %1921 = vst.msk [vmem:[%s217 + $0x16] sm:$0x1] %vm354, %v1911
        %1922 = vst.msk [vmem:[%s217 + $0x36] sm:$0x1] %vm354, %v1918
        %1923 = vst.msk [vmem:[%s217 + $0x56] sm:$0x1] %vm354, %v1919
        %1924 = vst.msk [vmem:[%s217 + $0x76] sm:$0x1] %vm354, %v1920
        %v1925 = vshll.u32 %v1893, 16
        %v1926 = vrot.slane %v1925, 4
        %v1927 = vor.u32 %v1893, %v1926
        %v1929 = vunpack.c.l.s4 1966171168
        %v1930 = vunpack.c.0.s8 %v1929
        %v1931 = vlaneseq
        %v1932 = vshrl.u32 %v1931, 7
        %v1933 = vsub.s32 %v1930, %v1932
        %v1934 = vrot.slane %v1927, %v1933
        %v1935 = vcombine.high %v1934, %v1934
        %v1937 = vunpack.c.l.s4 1966171168
        %v1938 = vunpack.c.0.s8 %v1937
        %v1939 = vlaneseq
        %v1940 = vshrl.u32 %v1939, 7
        %v1941 = vsub.s32 %v1938, %v1940
        %v1942 = vrot.slane %v1934, %v1941
        %v1944 = vunpack.c.l.s4 1966171168
        %v1945 = vunpack.c.0.s8 %v1944
        %v1946 = vlaneseq
        %v1947 = vshrl.u32 %v1946, 7
        %v1948 = vsub.s32 %v1945, %v1947
        %v1949 = vrot.slane %v1935, %v1948
        %v1950 = vcombine.high %v1942, %v1942
        %v1951 = vcombine.high %v1949, %v1949
        %1952 = vst.msk [vmem:[%s217 + $0x17] sm:$0x1] %vm354, %v1942
        %1953 = vst.msk [vmem:[%s217 + $0x37] sm:$0x1] %vm354, %v1949
        %1954 = vst.msk [vmem:[%s217 + $0x57] sm:$0x1] %vm354, %v1950
        %1955 = vst.msk [vmem:[%s217 + $0x77] sm:$0x1] %vm354, %v1951
        %v1956 = vld [vmem:[%s181 + $0x4] sm:$0x4]
        %v1957 = vld [vmem:[%s181 + $0xc] sm:$0x4]
        %v1958 = vld [vmem:[%s181 + $0x14] sm:$0x4]
        %v1959 = vld [vmem:[%s181 + $0x1c] sm:$0x4]
        %v1964 = vunpack.c.l.b16 %v1956
        %v1965 = vunpack.c.l.b16 %v1957
        %v1966 = vunpack.c.l.b16 %v1958
        %v1967 = vunpack.c.l.b16 %v1959
        %v1968 = vpack.c.b16 %v1964, %v1964
        %v1969 = vpack.c.b16 %v1965, %v1965
        %v1970 = vpack.c.b16 %v1966, %v1966
        %v1971 = vpack.c.b16 %v1967, %v1967
        %v1972 = vunpack.c.l.b16 %v1968
        %v1973 = vunpack.c.l.b16 %v1969
        %v1974 = vunpack.c.l.b16 %v1970
        %v1975 = vunpack.c.l.b16 %v1971
        %v1976 = vrot.slane %v1972, 4
        %v1977 = vrot.slane %v1973, 3
        %v1978 = vsel %vm260, %v1977, %v1976
        %v1979 = vrot.slane %v1974, 2
        %v1980 = vsel %vm263, %v1979, %v1978
        %v1981 = vrot.slane %v1975, 1
        %v1982 = vsel %vm266, %v1981, %v1980
        %v1983 = vpack.c.b16 %v1982, %v1982
        %v1985 = vsel %vm273, %v1983, 0
        %1987 = vmatprep.subr.bf16.mxu0 0
        %1988 = vmatpush1.bf16.msra.mxu0 %v1985
        %1989 = vmatprep.subr.bf16.mxu0 0
        %1990 = vmatpush1.bf16.msra.mxu0 0
        %1991 = vmatprep.subr.bf16.mxu0 0
        %1992 = vmatpush1.bf16.msra.mxu0 0
        %1993 = vmatprep.subr.bf16.mxu0 0
        %1994 = vmatpush1.bf16.msra.mxu0 0
        %1995 = vmatprep.subr.bf16.mxu0 0
        %1996 = vmatpush1.bf16.msra.mxu0 0
        %1997 = vmatprep.subr.bf16.mxu0 0
        %1998 = vmatpush1.bf16.msra.mxu0 0
        %1999 = vmatprep.subr.bf16.mxu0 0
        %2000 = vmatpush1.bf16.msra.mxu0 0
        %2001 = vmatprep.subr.bf16.mxu0 0
        %2002 = vmatpush1.bf16.msra.mxu0 0
        %2003 = vmatprep.subr.bf16.mxu0 0
        %2004 = vmatpush1.bf16.msra.mxu0 0
        %2005 = vmatprep.subr.bf16.mxu0 0
        %2006 = vmatpush1.bf16.msra.mxu0 0
        %2007 = vmatprep.subr.bf16.mxu0 0
        %2008 = vmatpush1.bf16.msra.mxu0 0
        %2009 = vmatprep.subr.bf16.mxu0 0
        %2010 = vmatpush1.bf16.msra.mxu0 0
        %2011 = vmatprep.subr.bf16.mxu0 0
        %2012 = vmatpush1.bf16.msra.mxu0 0
        %2013 = vmatprep.subr.bf16.mxu0 0
        %2014 = vmatpush1.bf16.msra.mxu0 0
        %2015 = vmatprep.subr.bf16.mxu0 0
        %2016 = vmatpush1.bf16.msra.mxu0 0
        %2017 = vmatprep.subr.bf16.mxu0 0
        %2018 = vmatpush1.bf16.msra.mxu0 0
        %2019 = vmatprep.mubr.bf16.mxu0 0
        %2020 = vmatmul.mubr.bf16.gmra.mrb[0].mxu0 %v271
        %v2021 = vpop.f32.mrb[0].mxu0
        %v2022 = vadd.f32 %v231, %v2021
        %v2023 = vpop.f32.mrb[0].mxu0
        %v2024 = vpop.f32.mrb[0].mxu0
        %v2025 = vadd.f32 %v236, %v2024
        %v2026 = vpop.f32.mrb[0].mxu0
        %2027 = vdwg.mxu0
        %v2028 = vmax.f32 %v2022, 0.0
        %v2029 = vmax.f32 %v2025, 0.0
        %v2030 = vpack.c.bf16 %v2029, %v2028
        %v2031 = vunpack.c.l.bf16 %v2030
        %v2032 = vunpack.c.h.bf16 %v2030
        %v2035 = vshrl.u32 %v2031, 16
        %v2036 = vshrl.u32 %v2032, 16
        %v2037 = vshll.u32 %v2035, 16
        %v2038 = vrot.slane %v2037, 4
        %v2039 = vor.u32 %v2035, %v2038
        %v2041 = vunpack.c.l.s4 1966171168
        %v2042 = vunpack.c.0.s8 %v2041
        %v2043 = vlaneseq
        %v2044 = vshrl.u32 %v2043, 7
        %v2045 = vsub.s32 %v2042, %v2044
        %v2046 = vrot.slane %v2039, %v2045
        %v2047 = vcombine.high %v2046, %v2046
        %v2049 = vunpack.c.l.s4 1966171168
        %v2050 = vunpack.c.0.s8 %v2049
        %v2051 = vlaneseq
        %v2052 = vshrl.u32 %v2051, 7
        %v2053 = vsub.s32 %v2050, %v2052
        %v2054 = vrot.slane %v2046, %v2053
        %v2056 = vunpack.c.l.s4 1966171168
        %v2057 = vunpack.c.0.s8 %v2056
        %v2058 = vlaneseq
        %v2059 = vshrl.u32 %v2058, 7
        %v2060 = vsub.s32 %v2057, %v2059
        %v2061 = vrot.slane %v2047, %v2060
        %v2062 = vcombine.high %v2054, %v2054
        %v2063 = vcombine.high %v2061, %v2061
        %2064 = vst.msk [vmem:[%s217 + $0x18] sm:$0x1] %vm354, %v2054
        %2065 = vst.msk [vmem:[%s217 + $0x38] sm:$0x1] %vm354, %v2061
        %2066 = vst.msk [vmem:[%s217 + $0x58] sm:$0x1] %vm354, %v2062
        %2067 = vst.msk [vmem:[%s217 + $0x78] sm:$0x1] %vm354, %v2063
        %v2068 = vshll.u32 %v2036, 16
        %v2069 = vrot.slane %v2068, 4
        %v2070 = vor.u32 %v2036, %v2069
        %v2072 = vunpack.c.l.s4 1966171168
        %v2073 = vunpack.c.0.s8 %v2072
        %v2074 = vlaneseq
        %v2075 = vshrl.u32 %v2074, 7
        %v2076 = vsub.s32 %v2073, %v2075
        %v2077 = vrot.slane %v2070, %v2076
        %v2078 = vcombine.high %v2077, %v2077
        %v2080 = vunpack.c.l.s4 1966171168
        %v2081 = vunpack.c.0.s8 %v2080
        %v2082 = vlaneseq
        %v2083 = vshrl.u32 %v2082, 7
        %v2084 = vsub.s32 %v2081, %v2083
        %v2085 = vrot.slane %v2077, %v2084
        %v2087 = vunpack.c.l.s4 1966171168
        %v2088 = vunpack.c.0.s8 %v2087
        %v2089 = vlaneseq
        %v2090 = vshrl.u32 %v2089, 7
        %v2091 = vsub.s32 %v2088, %v2090
        %v2092 = vrot.slane %v2078, %v2091
        %v2093 = vcombine.high %v2085, %v2085
        %v2094 = vcombine.high %v2092, %v2092
        %2095 = vst.msk [vmem:[%s217 + $0x19] sm:$0x1] %vm354, %v2085
        %2096 = vst.msk [vmem:[%s217 + $0x39] sm:$0x1] %vm354, %v2092
        %2097 = vst.msk [vmem:[%s217 + $0x59] sm:$0x1] %vm354, %v2093
        %2098 = vst.msk [vmem:[%s217 + $0x79] sm:$0x1] %vm354, %v2094
        %v2099 = vld [vmem:[%s181 + $0x4] sm:$0x4]
        %v2100 = vld [vmem:[%s181 + $0xc] sm:$0x4]
        %v2101 = vld [vmem:[%s181 + $0x14] sm:$0x4]
        %v2102 = vld [vmem:[%s181 + $0x1c] sm:$0x4]
        %v2107 = vunpack.c.l.b16 %v2099
        %v2108 = vunpack.c.l.b16 %v2100
        %v2109 = vunpack.c.l.b16 %v2101
        %v2110 = vunpack.c.l.b16 %v2102
        %v2111 = vpack.c.b16 %v2107, %v2107
        %v2112 = vpack.c.b16 %v2108, %v2108
        %v2113 = vpack.c.b16 %v2109, %v2109
        %v2114 = vpack.c.b16 %v2110, %v2110
        %v2115 = vunpack.c.l.b16 %v2111
        %v2116 = vunpack.c.l.b16 %v2112
        %v2117 = vunpack.c.l.b16 %v2113
        %v2118 = vunpack.c.l.b16 %v2114
        %v2119 = vrot.slane %v2115, 5
        %v2120 = vrot.slane %v2116, 4
        %v2121 = vsel %vm260, %v2120, %v2119
        %v2122 = vrot.slane %v2117, 3
        %v2123 = vsel %vm263, %v2122, %v2121
        %v2124 = vrot.slane %v2118, 2
        %v2125 = vsel %vm266, %v2124, %v2123
        %v2126 = vpack.c.b16 %v2125, %v2125
        %v2128 = vsel %vm273, %v2126, 0
        %2130 = vmatprep.subr.bf16.mxu0 0
        %2131 = vmatpush1.bf16.msra.mxu0 %v2128
        %2132 = vmatprep.subr.bf16.mxu0 0
        %2133 = vmatpush1.bf16.msra.mxu0 0
        %2134 = vmatprep.subr.bf16.mxu0 0
        %2135 = vmatpush1.bf16.msra.mxu0 0
        %2136 = vmatprep.subr.bf16.mxu0 0
        %2137 = vmatpush1.bf16.msra.mxu0 0
        %2138 = vmatprep.subr.bf16.mxu0 0
        %2139 = vmatpush1.bf16.msra.mxu0 0
        %2140 = vmatprep.subr.bf16.mxu0 0
        %2141 = vmatpush1.bf16.msra.mxu0 0
        %2142 = vmatprep.subr.bf16.mxu0 0
        %2143 = vmatpush1.bf16.msra.mxu0 0
        %2144 = vmatprep.subr.bf16.mxu0 0
        %2145 = vmatpush1.bf16.msra.mxu0 0
        %2146 = vmatprep.subr.bf16.mxu0 0
        %2147 = vmatpush1.bf16.msra.mxu0 0
        %2148 = vmatprep.subr.bf16.mxu0 0
        %2149 = vmatpush1.bf16.msra.mxu0 0
        %2150 = vmatprep.subr.bf16.mxu0 0
        %2151 = vmatpush1.bf16.msra.mxu0 0
        %2152 = vmatprep.subr.bf16.mxu0 0
        %2153 = vmatpush1.bf16.msra.mxu0 0
        %2154 = vmatprep.subr.bf16.mxu0 0
        %2155 = vmatpush1.bf16.msra.mxu0 0
        %2156 = vmatprep.subr.bf16.mxu0 0
        %2157 = vmatpush1.bf16.msra.mxu0 0
        %2158 = vmatprep.subr.bf16.mxu0 0
        %2159 = vmatpush1.bf16.msra.mxu0 0
        %2160 = vmatprep.subr.bf16.mxu0 0
        %2161 = vmatpush1.bf16.msra.mxu0 0
        %2162 = vmatprep.mubr.bf16.mxu0 0
        %2163 = vmatmul.mubr.bf16.gmra.mrb[0].mxu0 %v271
        %v2164 = vpop.f32.mrb[0].mxu0
        %v2165 = vadd.f32 %v231, %v2164
        %v2166 = vpop.f32.mrb[0].mxu0
        %v2167 = vpop.f32.mrb[0].mxu0
        %v2168 = vadd.f32 %v236, %v2167
        %v2169 = vpop.f32.mrb[0].mxu0
        %2170 = vdwg.mxu0
        %v2171 = vmax.f32 %v2165, 0.0
        %v2172 = vmax.f32 %v2168, 0.0
        %v2173 = vpack.c.bf16 %v2172, %v2171
        %v2174 = vunpack.c.l.bf16 %v2173
        %v2175 = vunpack.c.h.bf16 %v2173
        %v2178 = vshrl.u32 %v2174, 16
        %v2179 = vshrl.u32 %v2175, 16
        %v2180 = vshll.u32 %v2178, 16
        %v2181 = vrot.slane %v2180, 4
        %v2182 = vor.u32 %v2178, %v2181
        %v2184 = vunpack.c.l.s4 1966171168
        %v2185 = vunpack.c.0.s8 %v2184
        %v2186 = vlaneseq
        %v2187 = vshrl.u32 %v2186, 7
        %v2188 = vsub.s32 %v2185, %v2187
        %v2189 = vrot.slane %v2182, %v2188
        %v2190 = vcombine.high %v2189, %v2189
        %v2192 = vunpack.c.l.s4 1966171168
        %v2193 = vunpack.c.0.s8 %v2192
        %v2194 = vlaneseq
        %v2195 = vshrl.u32 %v2194, 7
        %v2196 = vsub.s32 %v2193, %v2195
        %v2197 = vrot.slane %v2189, %v2196
        %v2199 = vunpack.c.l.s4 1966171168
        %v2200 = vunpack.c.0.s8 %v2199
        %v2201 = vlaneseq
        %v2202 = vshrl.u32 %v2201, 7
        %v2203 = vsub.s32 %v2200, %v2202
        %v2204 = vrot.slane %v2190, %v2203
        %v2205 = vcombine.high %v2197, %v2197
        %v2206 = vcombine.high %v2204, %v2204
        %2207 = vst.msk [vmem:[%s217 + $0x1a] sm:$0x1] %vm354, %v2197
        %2208 = vst.msk [vmem:[%s217 + $0x3a] sm:$0x1] %vm354, %v2204
        %2209 = vst.msk [vmem:[%s217 + $0x5a] sm:$0x1] %vm354, %v2205
        %2210 = vst.msk [vmem:[%s217 + $0x7a] sm:$0x1] %vm354, %v2206
        %v2211 = vshll.u32 %v2179, 16
        %v2212 = vrot.slane %v2211, 4
        %v2213 = vor.u32 %v2179, %v2212
        %v2215 = vunpack.c.l.s4 1966171168
        %v2216 = vunpack.c.0.s8 %v2215
        %v2217 = vlaneseq
        %v2218 = vshrl.u32 %v2217, 7
        %v2219 = vsub.s32 %v2216, %v2218
        %v2220 = vrot.slane %v2213, %v2219
        %v2221 = vcombine.high %v2220, %v2220
        %v2223 = vunpack.c.l.s4 1966171168
        %v2224 = vunpack.c.0.s8 %v2223
        %v2225 = vlaneseq
        %v2226 = vshrl.u32 %v2225, 7
        %v2227 = vsub.s32 %v2224, %v2226
        %v2228 = vrot.slane %v2220, %v2227
        %v2230 = vunpack.c.l.s4 1966171168
        %v2231 = vunpack.c.0.s8 %v2230
        %v2232 = vlaneseq
        %v2233 = vshrl.u32 %v2232, 7
        %v2234 = vsub.s32 %v2231, %v2233
        %v2235 = vrot.slane %v2221, %v2234
        %v2236 = vcombine.high %v2228, %v2228
        %v2237 = vcombine.high %v2235, %v2235
        %2238 = vst.msk [vmem:[%s217 + $0x1b] sm:$0x1] %vm354, %v2228
        %2239 = vst.msk [vmem:[%s217 + $0x3b] sm:$0x1] %vm354, %v2235
        %2240 = vst.msk [vmem:[%s217 + $0x5b] sm:$0x1] %vm354, %v2236
        %2241 = vst.msk [vmem:[%s217 + $0x7b] sm:$0x1] %vm354, %v2237
        %v2242 = vld [vmem:[%s181 + $0x4] sm:$0x8]
        %v2243 = vld [vmem:[%s181 + $0xc] sm:$0x8]
        %v2244 = vld [vmem:[%s181 + $0x14] sm:$0x8]
        %v2245 = vld [vmem:[%s181 + $0x1c] sm:$0x8]
        %v2250 = vunpack.c.l.b16 %v2242
        %v2251 = vunpack.c.l.b16 %v2243
        %v2252 = vunpack.c.l.b16 %v2244
        %v2253 = vunpack.c.l.b16 %v2245
        %v2254 = vpack.c.b16 %v2250, %v2250
        %v2255 = vpack.c.b16 %v2251, %v2251
        %v2256 = vpack.c.b16 %v2252, %v2252
        %v2257 = vpack.c.b16 %v2253, %v2253
        %v2258 = vunpack.c.l.b16 %v2254
        %v2259 = vunpack.c.l.b16 %v2255
        %v2260 = vunpack.c.l.b16 %v2256
        %v2261 = vunpack.c.l.b16 %v2257
        %v2262 = vrot.slane %v2258, 6
        %v2263 = vrot.slane %v2259, 5
        %v2264 = vsel %vm260, %v2263, %v2262
        %v2265 = vrot.slane %v2260, 4
        %v2266 = vsel %vm263, %v2265, %v2264
        %v2267 = vrot.slane %v2261, 3
        %v2268 = vsel %vm266, %v2267, %v2266
        %v2269 = vpack.c.b16 %v2268, %v2268
        %v2271 = vsel %vm273, %v2269, 0
        %2273 = vmatprep.subr.bf16.mxu0 0
        %2274 = vmatpush1.bf16.msra.mxu0 %v2271
        %2275 = vmatprep.subr.bf16.mxu0 0
        %2276 = vmatpush1.bf16.msra.mxu0 0
        %2277 = vmatprep.subr.bf16.mxu0 0
        %2278 = vmatpush1.bf16.msra.mxu0 0
        %2279 = vmatprep.subr.bf16.mxu0 0
        %2280 = vmatpush1.bf16.msra.mxu0 0
        %2281 = vmatprep.subr.bf16.mxu0 0
        %2282 = vmatpush1.bf16.msra.mxu0 0
        %2283 = vmatprep.subr.bf16.mxu0 0
        %2284 = vmatpush1.bf16.msra.mxu0 0
        %2285 = vmatprep.subr.bf16.mxu0 0
        %2286 = vmatpush1.bf16.msra.mxu0 0
        %2287 = vmatprep.subr.bf16.mxu0 0
        %2288 = vmatpush1.bf16.msra.mxu0 0
        %2289 = vmatprep.subr.bf16.mxu0 0
        %2290 = vmatpush1.bf16.msra.mxu0 0
        %2291 = vmatprep.subr.bf16.mxu0 0
        %2292 = vmatpush1.bf16.msra.mxu0 0
        %2293 = vmatprep.subr.bf16.mxu0 0
        %2294 = vmatpush1.bf16.msra.mxu0 0
        %2295 = vmatprep.subr.bf16.mxu0 0
        %2296 = vmatpush1.bf16.msra.mxu0 0
        %2297 = vmatprep.subr.bf16.mxu0 0
        %2298 = vmatpush1.bf16.msra.mxu0 0
        %2299 = vmatprep.subr.bf16.mxu0 0
        %2300 = vmatpush1.bf16.msra.mxu0 0
        %2301 = vmatprep.subr.bf16.mxu0 0
        %2302 = vmatpush1.bf16.msra.mxu0 0
        %2303 = vmatprep.subr.bf16.mxu0 0
        %2304 = vmatpush1.bf16.msra.mxu0 0
        %2305 = vmatprep.mubr.bf16.mxu0 0
        %2306 = vmatmul.mubr.bf16.gmra.mrb[0].mxu0 %v271
        %v2307 = vpop.f32.mrb[0].mxu0
        %v2308 = vadd.f32 %v231, %v2307
        %v2309 = vpop.f32.mrb[0].mxu0
        %v2310 = vpop.f32.mrb[0].mxu0
        %v2311 = vadd.f32 %v236, %v2310
        %v2312 = vpop.f32.mrb[0].mxu0
        %2313 = vdwg.mxu0
        %v2314 = vmax.f32 %v2308, 0.0
        %v2315 = vmax.f32 %v2311, 0.0
        %v2316 = vpack.c.bf16 %v2315, %v2314
        %v2317 = vunpack.c.l.bf16 %v2316
        %v2318 = vunpack.c.h.bf16 %v2316
        %v2321 = vshrl.u32 %v2317, 16
        %v2322 = vshrl.u32 %v2318, 16
        %v2323 = vshll.u32 %v2321, 16
        %v2324 = vrot.slane %v2323, 4
        %v2325 = vor.u32 %v2321, %v2324
        %v2327 = vunpack.c.l.s4 1966171168
        %v2328 = vunpack.c.0.s8 %v2327
        %v2329 = vlaneseq
        %v2330 = vshrl.u32 %v2329, 7
        %v2331 = vsub.s32 %v2328, %v2330
        %v2332 = vrot.slane %v2325, %v2331
        %v2333 = vcombine.high %v2332, %v2332
        %v2335 = vunpack.c.l.s4 1966171168
        %v2336 = vunpack.c.0.s8 %v2335
        %v2337 = vlaneseq
        %v2338 = vshrl.u32 %v2337, 7
        %v2339 = vsub.s32 %v2336, %v2338
        %v2340 = vrot.slane %v2332, %v2339
        %v2342 = vunpack.c.l.s4 1966171168
        %v2343 = vunpack.c.0.s8 %v2342
        %v2344 = vlaneseq
        %v2345 = vshrl.u32 %v2344, 7
        %v2346 = vsub.s32 %v2343, %v2345
        %v2347 = vrot.slane %v2333, %v2346
        %v2348 = vcombine.high %v2340, %v2340
        %v2349 = vcombine.high %v2347, %v2347
        %2350 = vst.msk [vmem:[%s217 + $0x1c] sm:$0x1] %vm354, %v2340
        %2351 = vst.msk [vmem:[%s217 + $0x3c] sm:$0x1] %vm354, %v2347
        %2352 = vst.msk [vmem:[%s217 + $0x5c] sm:$0x1] %vm354, %v2348
        %2353 = vst.msk [vmem:[%s217 + $0x7c] sm:$0x1] %vm354, %v2349
        %v2354 = vshll.u32 %v2322, 16
        %v2355 = vrot.slane %v2354, 4
        %v2356 = vor.u32 %v2322, %v2355
        %v2358 = vunpack.c.l.s4 1966171168
        %v2359 = vunpack.c.0.s8 %v2358
        %v2360 = vlaneseq
        %v2361 = vshrl.u32 %v2360, 7
        %v2362 = vsub.s32 %v2359, %v2361
        %v2363 = vrot.slane %v2356, %v2362
        %v2364 = vcombine.high %v2363, %v2363
        %v2366 = vunpack.c.l.s4 1966171168
        %v2367 = vunpack.c.0.s8 %v2366
        %v2368 = vlaneseq
        %v2369 = vshrl.u32 %v2368, 7
        %v2370 = vsub.s32 %v2367, %v2369
        %v2371 = vrot.slane %v2363, %v2370
        %v2373 = vunpack.c.l.s4 1966171168
        %v2374 = vunpack.c.0.s8 %v2373
        %v2375 = vlaneseq
        %v2376 = vshrl.u32 %v2375, 7
        %v2377 = vsub.s32 %v2374, %v2376
        %v2378 = vrot.slane %v2364, %v2377
        %v2379 = vcombine.high %v2371, %v2371
        %v2380 = vcombine.high %v2378, %v2378
        %2381 = vst.msk [vmem:[%s217 + $0x1d] sm:$0x1] %vm354, %v2371
        %2382 = vst.msk [vmem:[%s217 + $0x3d] sm:$0x1] %vm354, %v2378
        %2383 = vst.msk [vmem:[%s217 + $0x5d] sm:$0x1] %vm354, %v2379
        %2384 = vst.msk [vmem:[%s217 + $0x7d] sm:$0x1] %vm354, %v2380
        %v2385 = vld [vmem:[%s181 + $0x4] sm:$0x8]
        %v2386 = vld [vmem:[%s181 + $0xc] sm:$0x8]
        %v2387 = vld [vmem:[%s181 + $0x14] sm:$0x8]
        %v2388 = vld [vmem:[%s181 + $0x1c] sm:$0x8]
        %v2393 = vunpack.c.l.b16 %v2385
        %v2394 = vunpack.c.l.b16 %v2386
        %v2395 = vunpack.c.l.b16 %v2387
        %v2396 = vunpack.c.l.b16 %v2388
        %v2397 = vpack.c.b16 %v2393, %v2393
        %v2398 = vpack.c.b16 %v2394, %v2394
        %v2399 = vpack.c.b16 %v2395, %v2395
        %v2400 = vpack.c.b16 %v2396, %v2396
        %v2401 = vunpack.c.l.b16 %v2397
        %v2402 = vunpack.c.l.b16 %v2398
        %v2403 = vunpack.c.l.b16 %v2399
        %v2404 = vunpack.c.l.b16 %v2400
        %v2405 = vrot.slane %v2401, 7
        %v2406 = vrot.slane %v2402, 6
        %v2407 = vsel %vm260, %v2406, %v2405
        %v2408 = vrot.slane %v2403, 5
        %v2409 = vsel %vm263, %v2408, %v2407
        %v2410 = vrot.slane %v2404, 4
        %v2411 = vsel %vm266, %v2410, %v2409
        %v2412 = vpack.c.b16 %v2411, %v2411
        %v2414 = vsel %vm273, %v2412, 0
        %2416 = vmatprep.subr.bf16.mxu0 0
        %2417 = vmatpush1.bf16.msra.mxu0 %v2414
        %2418 = vmatprep.subr.bf16.mxu0 0
        %2419 = vmatpush1.bf16.msra.mxu0 0
        %2420 = vmatprep.subr.bf16.mxu0 0
        %2421 = vmatpush1.bf16.msra.mxu0 0
        %2422 = vmatprep.subr.bf16.mxu0 0
        %2423 = vmatpush1.bf16.msra.mxu0 0
        %2424 = vmatprep.subr.bf16.mxu0 0
        %2425 = vmatpush1.bf16.msra.mxu0 0
        %2426 = vmatprep.subr.bf16.mxu0 0
        %2427 = vmatpush1.bf16.msra.mxu0 0
        %2428 = vmatprep.subr.bf16.mxu0 0
        %2429 = vmatpush1.bf16.msra.mxu0 0
        %2430 = vmatprep.subr.bf16.mxu0 0
        %2431 = vmatpush1.bf16.msra.mxu0 0
        %2432 = vmatprep.subr.bf16.mxu0 0
        %2433 = vmatpush1.bf16.msra.mxu0 0
        %2434 = vmatprep.subr.bf16.mxu0 0
        %2435 = vmatpush1.bf16.msra.mxu0 0
        %2436 = vmatprep.subr.bf16.mxu0 0
        %2437 = vmatpush1.bf16.msra.mxu0 0
        %2438 = vmatprep.subr.bf16.mxu0 0
        %2439 = vmatpush1.bf16.msra.mxu0 0
        %2440 = vmatprep.subr.bf16.mxu0 0
        %2441 = vmatpush1.bf16.msra.mxu0 0
        %2442 = vmatprep.subr.bf16.mxu0 0
        %2443 = vmatpush1.bf16.msra.mxu0 0
        %2444 = vmatprep.subr.bf16.mxu0 0
        %2445 = vmatpush1.bf16.msra.mxu0 0
        %2446 = vmatprep.subr.bf16.mxu0 0
        %2447 = vmatpush1.bf16.msra.mxu0 0
        %2448 = vmatprep.mubr.bf16.mxu0 0
        %2449 = vmatmul.mubr.bf16.gmra.mrb[0].mxu0 %v271
        %v2450 = vpop.f32.mrb[0].mxu0
        %v2451 = vadd.f32 %v231, %v2450
        %v2452 = vpop.f32.mrb[0].mxu0
        %v2453 = vpop.f32.mrb[0].mxu0
        %v2454 = vadd.f32 %v236, %v2453
        %v2455 = vpop.f32.mrb[0].mxu0
        %2456 = vdwg.mxu0
        %v2457 = vmax.f32 %v2451, 0.0
        %v2458 = vmax.f32 %v2454, 0.0
        %v2459 = vpack.c.bf16 %v2458, %v2457
        %v2460 = vunpack.c.l.bf16 %v2459
        %v2461 = vunpack.c.h.bf16 %v2459
        %v2464 = vshrl.u32 %v2460, 16
        %v2465 = vshrl.u32 %v2461, 16
        %v2466 = vshll.u32 %v2464, 16
        %v2467 = vrot.slane %v2466, 4
        %v2468 = vor.u32 %v2464, %v2467
        %v2470 = vunpack.c.l.s4 1966171168
        %v2471 = vunpack.c.0.s8 %v2470
        %v2472 = vlaneseq
        %v2473 = vshrl.u32 %v2472, 7
        %v2474 = vsub.s32 %v2471, %v2473
        %v2475 = vrot.slane %v2468, %v2474
        %v2476 = vcombine.high %v2475, %v2475
        %v2478 = vunpack.c.l.s4 1966171168
        %v2479 = vunpack.c.0.s8 %v2478
        %v2480 = vlaneseq
        %v2481 = vshrl.u32 %v2480, 7
        %v2482 = vsub.s32 %v2479, %v2481
        %v2483 = vrot.slane %v2475, %v2482
        %v2485 = vunpack.c.l.s4 1966171168
        %v2486 = vunpack.c.0.s8 %v2485
        %v2487 = vlaneseq
        %v2488 = vshrl.u32 %v2487, 7
        %v2489 = vsub.s32 %v2486, %v2488
        %v2490 = vrot.slane %v2476, %v2489
        %v2491 = vcombine.high %v2483, %v2483
        %v2492 = vcombine.high %v2490, %v2490
        %2493 = vst.msk [vmem:[%s217 + $0x1e] sm:$0x1] %vm354, %v2483
        %2494 = vst.msk [vmem:[%s217 + $0x3e] sm:$0x1] %vm354, %v2490
        %2495 = vst.msk [vmem:[%s217 + $0x5e] sm:$0x1] %vm354, %v2491
        %2496 = vst.msk [vmem:[%s217 + $0x7e] sm:$0x1] %vm354, %v2492
        %v2497 = vshll.u32 %v2465, 16
        %v2498 = vrot.slane %v2497, 4
        %v2499 = vor.u32 %v2465, %v2498
        %v2501 = vunpack.c.l.s4 1966171168
        %v2502 = vunpack.c.0.s8 %v2501
        %v2503 = vlaneseq
        %v2504 = vshrl.u32 %v2503, 7
        %v2505 = vsub.s32 %v2502, %v2504
        %v2506 = vrot.slane %v2499, %v2505
        %v2507 = vcombine.high %v2506, %v2506
        %v2509 = vunpack.c.l.s4 1966171168
        %v2510 = vunpack.c.0.s8 %v2509
        %v2511 = vlaneseq
        %v2512 = vshrl.u32 %v2511, 7
        %v2513 = vsub.s32 %v2510, %v2512
        %v2514 = vrot.slane %v2506, %v2513
        %v2516 = vunpack.c.l.s4 1966171168
        %v2517 = vunpack.c.0.s8 %v2516
        %v2518 = vlaneseq
        %v2519 = vshrl.u32 %v2518, 7
        %v2520 = vsub.s32 %v2517, %v2519
        %v2521 = vrot.slane %v2507, %v2520
        %v2522 = vcombine.high %v2514, %v2514
        %v2523 = vcombine.high %v2521, %v2521
        %2524 = vst.msk [vmem:[%s217 + $0x1f] sm:$0x1] %vm354, %v2514
        %2525 = vst.msk [vmem:[%s217 + $0x3f] sm:$0x1] %vm354, %v2521
        %2526 = vst.msk [vmem:[%s217 + $0x5f] sm:$0x1] %vm354, %v2522
        %2527 = vst.msk [vmem:[%s217 + $0x7f] sm:$0x1] %vm354, %v2523
        %s2528 = smul.u32 4, %s21
        %p2529 = scmp.lt.s32.totalorder %s22, 1
        %s2530 = scalar_select %p2529, %s22, 1
        %p2531 = scmp.lt.s32.totalorder %s2528, 3
        %s2532 = scalar_select %p2531, %s2528, 3
        %s2533 = smul.addr %s2530, 16
        %s2534 = sadd.s32 %s2532, %s2533
        %s2535 = smul.addr %s2534, 8
        %s2536 = scalar_lea.vmem %s3, %s2535
        // Predicated region
        $region37: #{tpu_custom_call.1} parent=31 // pred_check
          %p2537 = pneg %p119
        $region38: #{tpu_custom_call.1} parent=31 // pred_check_branch
          %2539 = sbr.rel (%p2537) target = $region40
        $region39: #{tpu_custom_call.1} parent=31 // pred_region
          %s2540 = smul.u32 4, %s21
        $region40: #{tpu_custom_call.1} parent=31 // pred_fallthru
          _
      $region32: #{tpu_custom_call.1} parent=5 // pred_fallthru
        _
      %p2541 = scmp.le.s32.totalorder 2, %s12
      // Predicated region
      $region41: #{tpu_custom_call.1} parent=5 // pred_check
        %p2542 = pneg %p2541
      $region42: #{tpu_custom_call.1} parent=5 // pred_check_branch
        %2544 = sbr.rel (%p2542) target = $region44
      $region43: #{tpu_custom_call.1} parent=5 // pred_region
        %s2545 = ssub.s32 %s12, 2
        // Predicated region
        $region45: #{tpu_custom_call.1} parent=43 // pred_check
          %p2546 = pneg %p125
        $region46: #{tpu_custom_call.1} parent=43 // pred_check_branch
          %2548 = sbr.rel (%p2546) target = $region48
        $region47: #{tpu_custom_call.1} parent=43 // pred_region
          %s2549 = smul.u32 4, %s23
          %p2550 = scmp.lt.s32.totalorder %s24, 1
          %s2551 = scalar_select %p2550, %s24, 1
          %p2552 = scmp.lt.s32.totalorder %s2549, 3
          %s2553 = scalar_select %p2552, %s2549, 3
          %s2554 = smul.addr %s2551, 16
          %s2555 = sadd.s32 %s2553, %s2554
          %s2556 = smul.addr %s2555, 8
          %s2557 = scalar_lea.vmem %s3, %s2556
        $region48: #{tpu_custom_call.1} parent=43 // pred_fallthru
          _
      $region44: #{tpu_custom_call.1} parent=5 // pred_fallthru
        _
    $region6: #{tpu_custom_call.1} parent=1 // loop_footer
      %s16 = sadd.s32 1, %s12
    $region7: #{tpu_custom_call.1} parent=1 // loop_footer_branch
      %11 = sbr.rel target = $region3
    $region8: #{tpu_custom_call.1} parent=1 // loop_exit
      _
    %2558 = vsyncpa [#allocation3], 1
    %s2559 = scalar_lea.sflag [#allocation3], 1
    %2560 = vsyncpa %s2559, 1

</llo_original>
